<compile_context>
chip_gen: v7x
topology: tpu7x:2x2x1
jax: 0.10.0
libtpu: 0.0.40
codegen_flags: <defaults>
</compile_context>

<pallas_src>
import jax
import jax.numpy as jnp
from jax.experimental import pallas as pl
from jax.experimental.pallas import tpu as pltpu

EPS = 1e-8
VMEM_LIMIT = 64 * 1024 * 1024  # fits v7x (64 MiB physical); tiles are budgeted below it


# ----------------------------------------------------------------------------
# small helpers
# ----------------------------------------------------------------------------
def _rownorm(x):
    """Row-wise L2 normalization along the last dim (assumed RowNormActivation).

    Same formula as the original (x / (sqrt(ss) + eps)), written as a multiply
    by an EUP reciprocal so it is free filler under MXU work.
    """
    ss = jnp.sum(x * x, axis=-1, keepdims=True)
    return x * pl.reciprocal(jnp.sqrt(ss) + EPS, approx=True)


def _divisor_tile(n, target, mult):
    """Largest divisor of n that is a multiple of `mult` and <= target; else n."""
    if n <= target:
        return n
    t = (target // mult) * mult
    while t >= mult:
        if n % t == 0:
            return t
        t -= mult
    return n  # no nice divisor: fall back to a single (full) block


def _sub_tile(n, target=512):   # second-to-last (sublane) dims: multiples of 8
    return _divisor_tile(n, target, 8)


def _lane_tile(n, target=512):  # last (lane) dims: multiples of 128
    return _divisor_tile(n, target, 128)


# ----------------------------------------------------------------------------
# Kernel 1: fused QKV projection, head-split outputs (B, H, S, dk)
# ----------------------------------------------------------------------------
def _qkv_kernel(x_ref, wq_ref, wk_ref, wv_ref, bq_ref, bk_ref, bv_ref,
                q_ref, k_ref, v_ref):
    x = x_ref[0].astype(jnp.float32)                       # (tS, D)

    def proj(w_ref, b_ref):
        return (jnp.dot(x, w_ref[0].astype(jnp.float32),
                        preferred_element_type=jnp.float32)
                + b_ref[0].astype(jnp.float32))            # (tS, dk)

    q_ref[0, 0] = proj(wq_ref, bq_ref).astype(q_ref.dtype)
    k_ref[0, 0] = proj(wk_ref, bk_ref).astype(k_ref.dtype)
    v_ref[0, 0] = proj(wv_ref, bv_ref).astype(v_ref.dtype)


def qkv_proj(x, wq, wk, wv, bq, bk, bv):
    """x: (B,S,D); wq/wk/wv: (H,D,dk); bq/bk/bv: (H,1,dk) -> q,k,v: (B,H,S,dk)."""
    B, S, D = x.shape
    H, _, dk = wq.shape
    tS = _sub_tile(S, 512)
    grid = (B, S // tS, H)   # h innermost: the x block is revisited -> DMA elided

    x_spec = pl.BlockSpec((1, tS, D), lambda b, s, h: (b, s, 0))
    w_spec = pl.BlockSpec((1, D, dk), lambda b, s, h: (h, 0, 0))
    b_spec = pl.BlockSpec((1, 1, dk), lambda b, s, h: (h, 0, 0))
    o_spec = pl.BlockSpec((1, 1, tS, dk), lambda b, s, h: (b, h, s, 0))
    o_shape = jax.ShapeDtypeStruct((B, H, S, dk), x.dtype)

    return pl.pallas_call(
        _qkv_kernel,
        grid=grid,
        in_specs=[x_spec, w_spec, w_spec, w_spec, b_spec, b_spec, b_spec],
        out_specs=(o_spec, o_spec, o_spec),
        out_shape=(o_shape, o_shape, o_shape),
        compiler_params=pltpu.CompilerParams(
            dimension_semantics=("parallel", "parallel", "parallel"),
            vmem_limit_bytes=VMEM_LIMIT),
    )(x, wq, wk, wv, bq, bk, bv)


# ----------------------------------------------------------------------------
# Kernel 2: flash-style attention with RowNorm(q), RowNorm(k) (cosine attention)
# ----------------------------------------------------------------------------
def _attn_kernel(q_ref, k_ref, v_ref, o_ref, m_sc, l_sc, acc_sc):
    ki = pl.program_id(3)

    @pl.when(ki == 0)
    def _():
        m_sc[...] = jnp.full(m_sc.shape, -jnp.inf, m_sc.dtype)
        l_sc[...] = jnp.zeros(l_sc.shape, l_sc.dtype)
        acc_sc[...] = jnp.zeros(acc_sc.shape, acc_sc.dtype)

    q = q_ref[0, 0].astype(jnp.float32)          # (tq, dk)
    k = k_ref[0, 0].astype(jnp.float32)          # (tkv, dk)
    v = v_ref[0, 0].astype(jnp.float32)          # (tkv, dk)

    qn = _rownorm(q)
    kn = _rownorm(k)

    # Contract dk of both operands directly on the MXU -- no kn.T transpose.
    s = jax.lax.dot_general(qn, kn, (((1,), (1,)), ((), ())),
                            preferred_element_type=jnp.float32)   # (tq, tkv)

    m_prev = m_sc[...]
    m_new = jnp.maximum(m_prev, jnp.max(s, axis=-1, keepdims=True))
    alpha = jnp.exp(m_prev - m_new)
    p = jnp.exp(s - m_new)
    l_sc[...] = alpha * l_sc[...] + jnp.sum(p, axis=-1, keepdims=True)
    acc_sc[...] = alpha * acc_sc[...] + jnp.dot(p, v, preferred_element_type=jnp.float32)
    m_sc[...] = m_new
    # TODO(synk): attention-weight dropout skipped (eval mode / identity).

    @pl.when(ki == pl.num_programs(3) - 1)
    def _():
        inv_l = pl.reciprocal(l_sc[...], approx=True)
        o_ref[0, 0] = (acc_sc[...] * inv_l).astype(o_ref.dtype)


def flash_attention(q, k, v):
    """q, k, v: (B, H, S, dk) -> (B, H, S, dk)."""
    B, H, S, dk = q.shape
    tq = _sub_tile(S, 256)
    tkv = _sub_tile(S, 512)
    grid = (B, H, S // tq, S // tkv)

    q_spec = pl.BlockSpec((1, 1, tq, dk), lambda b, h, qi, ki: (b, h, qi, 0))
    kv_spec = pl.BlockSpec((1, 1, tkv, dk), lambda b, h, qi, ki: (b, h, ki, 0))

    return pl.pallas_call(
        _attn_kernel,
        grid=grid,
        in_specs=[q_spec, kv_spec, kv_spec],
        out_specs=q_spec,
        out_shape=jax.ShapeDtypeStruct((B, H, S, dk), q.dtype),
        scratch_shapes=[pltpu.VMEM((tq, 1), jnp.float32),
                        pltpu.VMEM((tq, 1), jnp.float32),
                        pltpu.VMEM((tq, dk), jnp.float32)],
        compiler_params=pltpu.CompilerParams(
            dimension_semantics=("parallel", "parallel", "parallel", "arbitrary"),
            vmem_limit_bytes=VMEM_LIMIT),
    )(q, k, v)


# ----------------------------------------------------------------------------
# Kernel 3: output projection (sum over heads) + residual + rownorm epilogue
# ----------------------------------------------------------------------------
def _out_proj_kernel(ctx_ref, wo_ref, bo_ref, res_ref, o_ref, acc_ref):
    h = pl.program_id(2)

    @pl.when(h == 0)
    def _():
        acc_ref[...] = jnp.zeros(acc_ref.shape, acc_ref.dtype)

    acc_ref[...] += jnp.dot(ctx_ref[0, 0].astype(jnp.float32),
                            wo_ref[0].astype(jnp.float32),
                            preferred_element_type=jnp.float32)

    @pl.when(h == pl.num_programs(2) - 1)
    def _():
        y = (acc_ref[...] + bo_ref[...].astype(jnp.float32)
             + res_ref[0].astype(jnp.float32))
        # residual add + RowNormActivation fused here (dropout = identity).
        o_ref[0] = _rownorm(y).astype(o_ref.dtype)


def out_proj_residual_norm(ctx, wo, bo, x_res):
    """ctx: (B,H,S,dk); wo: (H,dk,D); bo: (1,D); x_res: (B,S,D) -> (B,S,D)."""
    B, H, S, dk = ctx.shape
    D = wo.shape[-1]
    tS = _sub_tile(S, 256)
    grid = (B, S // tS, H)   # H is the reduction axis (innermost, "arbitrary")

    ctx_spec = pl.BlockSpec((1, 1, tS, dk), lambda b, s, h: (b, h, s, 0))
    wo_spec = pl.BlockSpec((1, dk, D), lambda b, s, h: (h, 0, 0))
    bo_spec = pl.BlockSpec((1, D), lambda b, s, h: (0, 0))
    res_spec = pl.BlockSpec((1, tS, D), lambda b, s, h: (b, s, 0))
    o_spec = pl.BlockSpec((1, tS, D), lambda b, s, h: (b, s, 0))

    return pl.pallas_call(
        _out_proj_kernel,
        grid=grid,
        in_specs=[ctx_spec, wo_spec, bo_spec, res_spec],
        out_specs=o_spec,
        out_shape=jax.ShapeDtypeStruct((B, S, D), x_res.dtype),
        scratch_shapes=[pltpu.VMEM((tS, D), jnp.float32)],
        compiler_params=pltpu.CompilerParams(
            dimension_semantics=("parallel", "parallel", "arbitrary"),
            vmem_limit_bytes=VMEM_LIMIT),
    )(ctx, wo, bo, x_res)


# ----------------------------------------------------------------------------
# Kernel 4: general row/K-tiled linear with fused (residual +) rownorm epilogue
# ----------------------------------------------------------------------------
def _make_linear_kernel(has_residual, do_norm):
    def tail(acc, b_ref, r):
        y = acc + b_ref[...].astype(jnp.float32)
        if r is not None:
            y = y + r
        if do_norm:
            y = _rownorm(y)
        return y

    if has_residual:
        def kernel(x_ref, w_ref, b_ref, r_ref, o_ref, acc_ref):
            k = pl.program_id(1)

            @pl.when(k == 0)
            def _():
                acc_ref[...] = jnp.zeros(acc_ref.shape, acc_ref.dtype)

            acc_ref[...] += jnp.dot(x_ref[...].astype(jnp.float32),
                                    w_ref[...].astype(jnp.float32),
                                    preferred_element_type=jnp.float32)

            @pl.when(k == pl.num_programs(1) - 1)
            def _():
                r = r_ref[...].astype(jnp.float32)
                o_ref[...] = tail(acc_ref[...], b_ref, r).astype(o_ref.dtype)
    else:
        def kernel(x_ref, w_ref, b_ref, o_ref, acc_ref):
            k = pl.program_id(1)

            @pl.when(k == 0)
            def _():
                acc_ref[...] = jnp.zeros(acc_ref.shape, acc_ref.dtype)

            acc_ref[...] += jnp.dot(x_ref[...].astype(jnp.float32),
                                    w_ref[...].astype(jnp.float32),
                                    preferred_element_type=jnp.float32)

            @pl.when(k == pl.num_programs(1) - 1)
            def _():
                o_ref[...] = tail(acc_ref[...], b_ref, None).astype(o_ref.dtype)

    return kernel


def fused_linear(x2d, w, b, residual=None, norm=False):
    """y = maybe_rownorm(x2d @ w + b [+ residual]); row-tiled M, K-reduction grid."""
    M, K = x2d.shape
    N = w.shape[1]
    tm = _sub_tile(M, 512)
    tk = _lane_tile(K, 512)
    grid = (M // tm, K // tk)

    x_spec = pl.BlockSpec((tm, tk), lambda i, k: (i, k))
    w_spec = pl.BlockSpec((tk, N), lambda i, k: (k, 0))
    b_spec = pl.BlockSpec((1, N), lambda i, k: (0, 0))
    o_spec = pl.BlockSpec((tm, N), lambda i, k: (i, 0))

    in_specs = [x_spec, w_spec, b_spec]
    args = [x2d, w, b.reshape(1, N)]
    if residual is not None:
        in_specs.append(pl.BlockSpec((tm, N), lambda i, k: (i, 0)))
        args.append(residual)

    return pl.pallas_call(
        _make_linear_kernel(residual is not None, norm),
        grid=grid,
        in_specs=in_specs,
        out_specs=o_spec,
        out_shape=jax.ShapeDtypeStruct((M, N), x2d.dtype),
        scratch_shapes=[pltpu.VMEM((tm, N), jnp.float32)],
        compiler_params=pltpu.CompilerParams(
            dimension_semantics=("parallel", "arbitrary"),
            vmem_limit_bytes=VMEM_LIMIT),
    )(*args)


# ----------------------------------------------------------------------------
# EncoderLayer forward (all hot paths in Pallas; wrapper does only free reshapes)
# ----------------------------------------------------------------------------
def init_params(key, d_model, num_heads, d_ff):
    dk = d_model // num_heads
    ks = jax.random.split(key, 12)

    def lin(kw, kb, fan_in, fan_out):
        bound = 1.0 / jnp.sqrt(float(fan_in))
        w = jax.random.uniform(kw, (fan_in, fan_out), jnp.float32, -bound, bound)
        b = jax.random.uniform(kb, (fan_out,), jnp.float32, -bound, bound)
        return w, b

    Wq, bq = lin(ks[0], ks[1], d_model, d_model)
    Wk, bk = lin(ks[2], ks[3], d_model, d_model)
    Wv, bv = lin(ks[4], ks[5], d_model, d_model)
    Wo, bo = lin(ks[6], ks[7], d_model, d_model)
    W1, b1 = lin(ks[8], ks[9], d_model, d_ff)
    W2, b2 = lin(ks[10], ks[11], d_ff, d_model)

    p = {}
    # store attention params pre-head-split so kernels never need an XLA transpose
    p["Wq"] = Wq.reshape(d_model, num_heads, dk).transpose(1, 0, 2)   # (H, D, dk)
    p["Wk"] = Wk.reshape(d_model, num_heads, dk).transpose(1, 0, 2)
    p["Wv"] = Wv.reshape(d_model, num_heads, dk).transpose(1, 0, 2)
    p["bq"] = bq.reshape(num_heads, 1, dk)
    p["bk"] = bk.reshape(num_heads, 1, dk)
    p["bv"] = bv.reshape(num_heads, 1, dk)
    p["Wo"] = Wo.reshape(num_heads, dk, d_model)                      # (H, dk, D)
    p["bo"] = bo.reshape(1, d_model)
    p["W1"], p["b1"] = W1, b1
    p["W2"], p["b2"] = W2, b2
    return p


def encoder_layer_forward(params, x, num_heads):
    B, S, D = x.shape

    # 1) fused QKV projection -> head-split (B, H, S, dk), x read from HBM once
    q, k, v = qkv_proj(x, params["Wq"], params["Wk"], params["Wv"],
                       params["bq"], params["bk"], params["bv"])

    # 2) flash attention (rownorm on q/k, online softmax over kv tiles)
    ctx = flash_attention(q, k, v)                                   # (B, H, S, dk)

    # 3) Wo projection (reduce over heads) + residual x + rownorm, fused
    h = out_proj_residual_norm(ctx, params["Wo"], params["bo"], x)   # (B, S, D)

    # 4) FeedForward: linear1 -> rownorm (fused) -> linear2 + residual + rownorm (fused)
    h2d = h.reshape(B * S, D)                                        # free reshape
    hn = fused_linear(h2d, params["W1"], params["b1"], norm=True)    # (M, F)
    out = fused_linear(hn, params["W2"], params["b2"], residual=h2d, norm=True)
    return out.reshape(B, S, D)


# ----------------------------------------------------------------------------
# pure-JAX reference (same math, same param layout) for a correctness check
# ----------------------------------------------------------------------------
def reference_forward(params, x, num_heads):
    B, S, D = x.shape

    def rn(t):
        return t / (jnp.sqrt(jnp.sum(t * t, axis=-1, keepdims=True)) + EPS)

    q = jnp.einsum("bsd,hdk->bhsk", x, params["Wq"]) + params["bq"][None]
    k = jnp.einsum("bsd,hdk->bhsk", x, params["Wk"]) + params["bk"][None]
    v = jnp.einsum("bsd,hdk->bhsk", x, params["Wv"]) + params["bv"][None]
    s = jnp.einsum("bhqk,bhtk->bhqt", rn(q), rn(k))
    p = jax.nn.softmax(s, axis=-1)
    ctx = jnp.einsum("bhqt,bhtk->bhqk", p, v)
    attn = jnp.einsum("bhqk,hkd->bqd", ctx, params["Wo"]) + params["bo"]
    h = rn(x + attn)
    h2 = h.reshape(B * S, D)
    hn = rn(h2 @ params["W1"] + params["b1"])
    out = rn(h2 + hn @ params["W2"] + params["b2"])
    return out.reshape(B, S, D)


if __name__ == "__main__":
    B, S, D, H, F = 2, 8, 32, 4, 64
    key = jax.random.PRNGKey(0)
    k_x, k_p = jax.random.split(key)
    x = jax.random.normal(k_x, (B, S, D), jnp.float32)
    params = init_params(k_p, D, H, F)

    fwd = jax.jit(encoder_layer_forward, static_argnums=2)
    y = jax.block_until_ready(fwd(params, x, H))

    assert y.shape == (B, S, D)
    assert bool(jnp.all(jnp.isfinite(y)))

    y_ref = jax.block_until_ready(reference_forward(params, x, H))
    assert bool(jnp.allclose(y, y_ref, atol=2e-2, rtol=2e-2)), \
        float(jnp.max(jnp.abs(y - y_ref)))

    print("KERNEL_OK")
</pallas_src>

<mosaic_0001>
module attributes {stable_mosaic.version = 11 : i64} {
  func.func @_out_proj_kernel(%arg0: i32, %arg1: i32, %arg2: i32, %arg3: memref<1x1x8x8xf32, #tpu.memory_space<vmem>>, %arg4: memref<1x8x32xf32, #tpu.memory_space<vmem>>, %arg5: memref<1x32xf32, #tpu.memory_space<vmem>>, %arg6: memref<1x8x32xf32, #tpu.memory_space<vmem>>, %arg7: memref<1x8x32xf32, #tpu.memory_space<vmem>>, %arg8: memref<8x32xf32, #tpu.memory_space<vmem>>) attributes {dimension_semantics = [#tpu.dimension_semantics<parallel>, #tpu.dimension_semantics<parallel>, #tpu.dimension_semantics<arbitrary>], iteration_bounds = array<i64: 2, 1, 4>, scalar_prefetch = 0 : i64, scratch_operands = 1 : i64, tpu.core_type = #tpu.core_type<tc>, window_params = [{transform_indices = @transform_0, window_bounds = array<i64: 1, 1, 8, 8>}, {transform_indices = @transform_1, window_bounds = array<i64: 1, 8, 32>}, {pipeline_mode = #tpu.pipeline_mode<synchronous>, transform_indices = @transform_2, window_bounds = array<i64: 1, 32>}, {transform_indices = @transform_3, window_bounds = array<i64: 1, 8, 32>}, {transform_indices = @transform_4, window_bounds = array<i64: 1, 8, 32>}]} {
    %c0_i32 = arith.constant 0 : i32
    %0 = arith.cmpi eq, %arg2, %c0_i32 : i32
    %1 = arith.extui %0 : i1 to i32
    %c0_i32_0 = arith.constant 0 : i32
    %2 = arith.cmpi ne, %1, %c0_i32_0 : i32
    scf.if %2 {
      %cst_12 = arith.constant 0.000000e+00 : f32
      %14 = vector.broadcast %cst_12 : f32 to vector<8x32xf32>
      %c0_13 = arith.constant 0 : index
      %c0_14 = arith.constant 0 : index
      %15 = vector.load %arg8[%c0_13, %c0_14] : memref<8x32xf32, #tpu.memory_space<vmem>>, vector<8x32xf32>
      tpu.vector_store %arg8[%c0_13, %c0_14], %14 {strides = array<i32>} : memref<8x32xf32, #tpu.memory_space<vmem>>, vector<8x32xf32>,
    } else {
    }
    %c0 = arith.constant 0 : index
    %c0_1 = arith.constant 0 : index
    %3 = vector.load %arg8[%c0, %c0_1] : memref<8x32xf32, #tpu.memory_space<vmem>>, vector<8x32xf32>
    %c0_2 = arith.constant 0 : index
    %c0_3 = arith.constant 0 : index
    %c0_4 = arith.constant 0 : index
    %c0_5 = arith.constant 0 : index
    %4 = vector.load %arg3[%c0_2, %c0_3, %c0_4, %c0_5] : memref<1x1x8x8xf32, #tpu.memory_space<vmem>>, vector<1x1x8x8xf32>
    %5 = vector.shape_cast %4 : vector<1x1x8x8xf32> to vector<8x8xf32>
    %c0_6 = arith.constant 0 : index
    %c0_7 = arith.constant 0 : index
    %c0_8 = arith.constant 0 : index
    %6 = vector.load %arg4[%c0_6, %c0_7, %c0_8] : memref<1x8x32xf32, #tpu.memory_space<vmem>>, vector<1x8x32xf32>
    %7 = vector.shape_cast %6 : vector<1x8x32xf32> to vector<8x32xf32>
    %cst = arith.constant dense<0.000000e+00> : vector<8x32xf32>
    %8 = tpu.matmul %5, %7, %cst {dimension_numbers = #tpu.dot_dimension_numbers<[1], [0], [0], [1], [0, 0, 1, 1], [], []>} : vector<8x8xf32>, vector<8x32xf32>, vector<8x32xf32> -> vector<8x32xf32>
    %9 = arith.addf %3, %8 : vector<8x32xf32>
    %c0_9 = arith.constant 0 : index
    %c0_10 = arith.constant 0 : index
    %10 = vector.load %arg8[%c0_9, %c0_10] : memref<8x32xf32, #tpu.memory_space<vmem>>, vector<8x32xf32>
    tpu.vector_store %arg8[%c0_9, %c0_10], %9 {strides = array<i32>} : memref<8x32xf32, #tpu.memory_space<vmem>>, vector<8x32xf32>,
    %c3_i32 = arith.constant 3 : i32
    %11 = arith.cmpi eq, %arg2, %c3_i32 : i32
    %12 = arith.extui %11 : i1 to i32
    %c0_i32_11 = arith.constant 0 : i32
    %13 = arith.cmpi ne, %12, %c0_i32_11 : i32
    scf.if %13 {
      %c0_12 = arith.constant 0 : index
      %c0_13 = arith.constant 0 : index
      %14 = vector.load %arg8[%c0_12, %c0_13] : memref<8x32xf32, #tpu.memory_space<vmem>>, vector<8x32xf32>
      %c0_14 = arith.constant 0 : index
      %c0_15 = arith.constant 0 : index
      %15 = vector.load %arg5[%c0_14, %c0_15] : memref<1x32xf32, #tpu.memory_space<vmem>>, vector<1x32xf32>
      %16 = vector.broadcast %15 : vector<1x32xf32> to vector<8x32xf32>
      %17 = arith.addf %14, %16 : vector<8x32xf32>
      %c0_16 = arith.constant 0 : index
      %c0_17 = arith.constant 0 : index
      %c0_18 = arith.constant 0 : index
      %18 = vector.load %arg6[%c0_16, %c0_17, %c0_18] : memref<1x8x32xf32, #tpu.memory_space<vmem>>, vector<1x8x32xf32>
      %19 = vector.shape_cast %18 : vector<1x8x32xf32> to vector<8x32xf32>
      %20 = arith.addf %17, %19 : vector<8x32xf32>
      %21 = arith.mulf %20, %20 : vector<8x32xf32>
      %cst_19 = arith.constant dense<0.000000e+00> : vector<8xf32>
      %22 = vector.multi_reduction <add>, %21, %cst_19 [1] : vector<8x32xf32> to vector<8xf32>
      %23 = vector.shape_cast %22 : vector<8xf32> to vector<8x1xf32>
      %24 = math.sqrt %23 : vector<8x1xf32>
      %cst_20 = arith.constant 9.99999993E-9 : f32
      %25 = vector.broadcast %cst_20 : f32 to vector<8x1xf32>
      %26 = arith.addf %24, %25 : vector<8x1xf32>
      %27 = tpu.reciprocal %26 {approx = true} : vector<8x1xf32> -> vector<8x1xf32>
      %28 = vector.broadcast %27 : vector<8x1xf32> to vector<8x32xf32>
      %29 = arith.mulf %20, %28 : vector<8x32xf32>
      %c0_21 = arith.constant 0 : index
      %c0_22 = arith.constant 0 : index
      %c0_23 = arith.constant 0 : index
      %30 = vector.load %arg7[%c0_21, %c0_22, %c0_23] : memref<1x8x32xf32, #tpu.memory_space<vmem>>, vector<1x8x32xf32>
      %31 = vector.shape_cast %30 : vector<1x8x32xf32> to vector<8x32xf32>
      %32 = vector.shape_cast %29 : vector<8x32xf32> to vector<1x8x32xf32>
      tpu.vector_store %arg7[%c0_21, %c0_22, %c0_23], %32 {strides = array<i32>} : memref<1x8x32xf32, #tpu.memory_space<vmem>>, vector<1x8x32xf32>,
    } else {
    }
    return
  }
  func.func @transform_0(%arg0: i32, %arg1: i32, %arg2: i32) -> (i32, i32, i32, i32) {
    %c0_i32 = arith.constant 0 : i32
    %c0_i32_0 = arith.constant 0 : i32
    return %arg0, %arg2, %arg1, %c0_i32 : i32, i32, i32, i32
  }
  func.func @transform_1(%arg0: i32, %arg1: i32, %arg2: i32) -> (i32, i32, i32) {
    %c0_i32 = arith.constant 0 : i32
    %c0_i32_0 = arith.constant 0 : i32
    %c0_i32_1 = arith.constant 0 : i32
    return %arg2, %c0_i32, %c0_i32_0 : i32, i32, i32
  }
  func.func @transform_2(%arg0: i32, %arg1: i32, %arg2: i32) -> (i32, i32) {
    %c0_i32 = arith.constant 0 : i32
    %c0_i32_0 = arith.constant 0 : i32
    %c0_i32_1 = arith.constant 0 : i32
    return %c0_i32, %c0_i32_0 : i32, i32
  }
  func.func @transform_3(%arg0: i32, %arg1: i32, %arg2: i32) -> (i32, i32, i32) {
    %c0_i32 = arith.constant 0 : i32
    %c0_i32_0 = arith.constant 0 : i32
    return %arg0, %arg1, %c0_i32 : i32, i32, i32
  }
  func.func @transform_4(%arg0: i32, %arg1: i32, %arg2: i32) -> (i32, i32, i32) {
    %c0_i32 = arith.constant 0 : i32
    %c0_i32_0 = arith.constant 0 : i32
    return %arg0, %arg1, %c0_i32 : i32, i32, i32
  }
}

module attributes {stable_mosaic.version = 11 : i64} {
  func.func @_attn_kernel(%arg0: i32, %arg1: i32, %arg2: i32, %arg3: i32, %arg4: memref<1x1x8x8xf32, #tpu.memory_space<vmem>>, %arg5: memref<1x1x8x8xf32, #tpu.memory_space<vmem>>, %arg6: memref<1x1x8x8xf32, #tpu.memory_space<vmem>>, %arg7: memref<1x1x8x8xf32, #tpu.memory_space<vmem>>, %arg8: memref<8x1xf32, #tpu.memory_space<vmem>>, %arg9: memref<8x1xf32, #tpu.memory_space<vmem>>, %arg10: memref<8x8xf32, #tpu.memory_space<vmem>>) attributes {dimension_semantics = [#tpu.dimension_semantics<parallel>, #tpu.dimension_semantics<parallel>, #tpu.dimension_semantics<parallel>, #tpu.dimension_semantics<arbitrary>], iteration_bounds = array<i64: 2, 4, 1, 1>, scalar_prefetch = 0 : i64, scratch_operands = 3 : i64, tpu.core_type = #tpu.core_type<tc>, window_params = [{transform_indices = @transform_0, window_bounds = array<i64: 1, 1, 8, 8>}, {transform_indices = @transform_1, window_bounds = array<i64: 1, 1, 8, 8>}, {transform_indices = @transform_2, window_bounds = array<i64: 1, 1, 8, 8>}, {transform_indices = @transform_3, window_bounds = array<i64: 1, 1, 8, 8>}]} {
    %c0_i32 = arith.constant 0 : i32
    %0 = arith.cmpi eq, %arg3, %c0_i32 : i32
    %1 = arith.extui %0 : i1 to i32
    %c0_i32_0 = arith.constant 0 : i32
    %2 = arith.cmpi ne, %1, %c0_i32_0 : i32
    scf.if %2 {
      %cst_33 = arith.constant 0xFF800000 : f32
      %53 = vector.broadcast %cst_33 : f32 to vector<8x1xf32>
      %c0_34 = arith.constant 0 : index
      %c0_35 = arith.constant 0 : index
      %54 = vector.load %arg8[%c0_34, %c0_35] : memref<8x1xf32, #tpu.memory_space<vmem>>, vector<8x1xf32>
      tpu.vector_store %arg8[%c0_34, %c0_35], %53 {strides = array<i32>} : memref<8x1xf32, #tpu.memory_space<vmem>>, vector<8x1xf32>,
      %cst_36 = arith.constant 0.000000e+00 : f32
      %55 = vector.broadcast %cst_36 : f32 to vector<8x1xf32>
      %c0_37 = arith.constant 0 : index
      %c0_38 = arith.constant 0 : index
      %56 = vector.load %arg9[%c0_37, %c0_38] : memref<8x1xf32, #tpu.memory_space<vmem>>, vector<8x1xf32>
      tpu.vector_store %arg9[%c0_37, %c0_38], %55 {strides = array<i32>} : memref<8x1xf32, #tpu.memory_space<vmem>>, vector<8x1xf32>,
      %cst_39 = arith.constant 0.000000e+00 : f32
      %57 = vector.broadcast %cst_39 : f32 to vector<8x8xf32>
      %c0_40 = arith.constant 0 : index
      %c0_41 = arith.constant 0 : index
      %58 = vector.load %arg10[%c0_40, %c0_41] : memref<8x8xf32, #tpu.memory_space<vmem>>, vector<8x8xf32>
      tpu.vector_store %arg10[%c0_40, %c0_41], %57 {strides = array<i32>} : memref<8x8xf32, #tpu.memory_space<vmem>>, vector<8x8xf32>,
    } else {
    }
    %c0 = arith.constant 0 : index
    %c0_1 = arith.constant 0 : index
    %c0_2 = arith.constant 0 : index
    %c0_3 = arith.constant 0 : index
    %3 = vector.load %arg4[%c0, %c0_1, %c0_2, %c0_3] : memref<1x1x8x8xf32, #tpu.memory_space<vmem>>, vector<1x1x8x8xf32>
    %4 = vector.shape_cast %3 : vector<1x1x8x8xf32> to vector<8x8xf32>
    %c0_4 = arith.constant 0 : index
    %c0_5 = arith.constant 0 : index
    %c0_6 = arith.constant 0 : index
    %c0_7 = arith.constant 0 : index
    %5 = vector.load %arg5[%c0_4, %c0_5, %c0_6, %c0_7] : memref<1x1x8x8xf32, #tpu.memory_space<vmem>>, vector<1x1x8x8xf32>
    %6 = vector.shape_cast %5 : vector<1x1x8x8xf32> to vector<8x8xf32>
    %c0_8 = arith.constant 0 : index
    %c0_9 = arith.constant 0 : index
    %c0_10 = arith.constant 0 : index
    %c0_11 = arith.constant 0 : index
    %7 = vector.load %arg6[%c0_8, %c0_9, %c0_10, %c0_11] : memref<1x1x8x8xf32, #tpu.memory_space<vmem>>, vector<1x1x8x8xf32>
    %8 = vector.shape_cast %7 : vector<1x1x8x8xf32> to vector<8x8xf32>
    %9 = arith.mulf %4, %4 : vector<8x8xf32>
    %cst = arith.constant dense<0.000000e+00> : vector<8xf32>
    %10 = vector.multi_reduction <add>, %9, %cst [1] : vector<8x8xf32> to vector<8xf32>
    %11 = vector.shape_cast %10 : vector<8xf32> to vector<8x1xf32>
    %12 = math.sqrt %11 : vector<8x1xf32>
    %cst_12 = arith.constant 9.99999993E-9 : f32
    %13 = vector.broadcast %cst_12 : f32 to vector<8x1xf32>
    %14 = arith.addf %12, %13 : vector<8x1xf32>
    %15 = tpu.reciprocal %14 {approx = true} : vector<8x1xf32> -> vector<8x1xf32>
    %16 = vector.broadcast %15 : vector<8x1xf32> to vector<8x8xf32>
    %17 = arith.mulf %4, %16 : vector<8x8xf32>
    %18 = arith.mulf %6, %6 : vector<8x8xf32>
    %cst_13 = arith.constant dense<0.000000e+00> : vector<8xf32>
    %19 = vector.multi_reduction <add>, %18, %cst_13 [1] : vector<8x8xf32> to vector<8xf32>
    %20 = vector.shape_cast %19 : vector<8xf32> to vector<8x1xf32>
    %21 = math.sqrt %20 : vector<8x1xf32>
    %cst_14 = arith.constant 9.99999993E-9 : f32
    %22 = vector.broadcast %cst_14 : f32 to vector<8x1xf32>
    %23 = arith.addf %21, %22 : vector<8x1xf32>
    %24 = tpu.reciprocal %23 {approx = true} : vector<8x1xf32> -> vector<8x1xf32>
    %25 = vector.broadcast %24 : vector<8x1xf32> to vector<8x8xf32>
    %26 = arith.mulf %6, %25 : vector<8x8xf32>
    %cst_15 = arith.constant dense<0.000000e+00> : vector<8x8xf32>
    %27 = tpu.matmul %17, %26, %cst_15 {dimension_numbers = #tpu.dot_dimension_numbers<[1], [1], [0], [0], [0, 0, 1, 0], [], []>} : vector<8x8xf32>, vector<8x8xf32>, vector<8x8xf32> -> vector<8x8xf32>
    %c0_16 = arith.constant 0 : index
    %c0_17 = arith.constant 0 : index
    %28 = vector.load %arg8[%c0_16, %c0_17] : memref<8x1xf32, #tpu.memory_space<vmem>>, vector<8x1xf32>
    %cst_18 = arith.constant dense<0xFF800000> : vector<8xf32>
    %29 = vector.multi_reduction <maximumf>, %27, %cst_18 [1] : vector<8x8xf32> to vector<8xf32>
    %30 = vector.shape_cast %29 : vector<8xf32> to vector<8x1xf32>
    %31 = arith.maximumf %28, %30 : vector<8x1xf32>
    %32 = arith.subf %28, %31 : vector<8x1xf32>
    %33 = math.exp %32 : vector<8x1xf32>
    %34 = vector.broadcast %31 : vector<8x1xf32> to vector<8x8xf32>
    %35 = arith.subf %27, %34 : vector<8x8xf32>
    %36 = math.exp %35 : vector<8x8xf32>
    %c0_19 = arith.constant 0 : index
    %c0_20 = arith.constant 0 : index
    %37 = vector.load %arg9[%c0_19, %c0_20] : memref<8x1xf32, #tpu.memory_space<vmem>>, vector<8x1xf32>
    %38 = arith.mulf %33, %37 : vector<8x1xf32>
    %cst_21 = arith.constant dense<0.000000e+00> : vector<8xf32>
    %39 = vector.multi_reduction <add>, %36, %cst_21 [1] : vector<8x8xf32> to vector<8xf32>
    %40 = vector.shape_cast %39 : vector<8xf32> to vector<8x1xf32>
    %41 = arith.addf %38, %40 : vector<8x1xf32>
    %c0_22 = arith.constant 0 : index
    %c0_23 = arith.constant 0 : index
    %42 = vector.load %arg9[%c0_22, %c0_23] : memref<8x1xf32, #tpu.memory_space<vmem>>, vector<8x1xf32>
    tpu.vector_store %arg9[%c0_22, %c0_23], %41 {strides = array<i32>} : memref<8x1xf32, #tpu.memory_space<vmem>>, vector<8x1xf32>,
    %c0_24 = arith.constant 0 : index
    %c0_25 = arith.constant 0 : index
    %43 = vector.load %arg10[%c0_24, %c0_25] : memref<8x8xf32, #tpu.memory_space<vmem>>, vector<8x8xf32>
    %44 = vector.broadcast %33 : vector<8x1xf32> to vector<8x8xf32>
    %45 = arith.mulf %44, %43 : vector<8x8xf32>
    %cst_26 = arith.constant dense<0.000000e+00> : vector<8x8xf32>
    %46 = tpu.matmul %36, %8, %cst_26 {dimension_numbers = #tpu.dot_dimension_numbers<[1], [0], [0], [1], [0, 0, 1, 1], [], []>} : vector<8x8xf32>, vector<8x8xf32>, vector<8x8xf32> -> vector<8x8xf32>
    %47 = arith.addf %45, %46 : vector<8x8xf32>
    %c0_27 = arith.constant 0 : index
    %c0_28 = arith.constant 0 : index
    %48 = vector.load %arg10[%c0_27, %c0_28] : memref<8x8xf32, #tpu.memory_space<vmem>>, vector<8x8xf32>
    tpu.vector_store %arg10[%c0_27, %c0_28], %47 {strides = array<i32>} : memref<8x8xf32, #tpu.memory_space<vmem>>, vector<8x8xf32>,
    %c0_29 = arith.constant 0 : index
    %c0_30 = arith.constant 0 : index
    %49 = vector.load %arg8[%c0_29, %c0_30] : memref<8x1xf32, #tpu.memory_space<vmem>>, vector<8x1xf32>
    tpu.vector_store %arg8[%c0_29, %c0_30], %31 {strides = array<i32>} : memref<8x1xf32, #tpu.memory_space<vmem>>, vector<8x1xf32>,
    %c0_i32_31 = arith.constant 0 : i32
    %50 = arith.cmpi eq, %arg3, %c0_i32_31 : i32
    %51 = arith.extui %50 : i1 to i32
    %c0_i32_32 = arith.constant 0 : i32
    %52 = arith.cmpi ne, %51, %c0_i32_32 : i32
    scf.if %52 {
      %c0_33 = arith.constant 0 : index
      %c0_34 = arith.constant 0 : index
      %53 = vector.load %arg9[%c0_33, %c0_34] : memref<8x1xf32, #tpu.memory_space<vmem>>, vector<8x1xf32>
      %54 = tpu.reciprocal %53 {approx = true} : vector<8x1xf32> -> vector<8x1xf32>
      %c0_35 = arith.constant 0 : index
      %c0_36 = arith.constant 0 : index
      %55 = vector.load %arg10[%c0_35, %c0_36] : memref<8x8xf32, #tpu.memory_space<vmem>>, vector<8x8xf32>
      %56 = vector.broadcast %54 : vector<8x1xf32> to vector<8x8xf32>
      %57 = arith.mulf %55, %56 : vector<8x8xf32>
      %c0_37 = arith.constant 0 : index
      %c0_38 = arith.constant 0 : index
      %c0_39 = arith.constant 0 : index
      %c0_40 = arith.constant 0 : index
      %58 = vector.load %arg7[%c0_37, %c0_38, %c0_39, %c0_40] : memref<1x1x8x8xf32, #tpu.memory_space<vmem>>, vector<1x1x8x8xf32>
      %59 = vector.shape_cast %58 : vector<1x1x8x8xf32> to vector<8x8xf32>
      %60 = vector.shape_cast %57 : vector<8x8xf32> to vector<1x1x8x8xf32>
      tpu.vector_store %arg7[%c0_37, %c0_38, %c0_39, %c0_40], %60 {strides = array<i32>} : memref<1x1x8x8xf32, #tpu.memory_space<vmem>>, vector<1x1x8x8xf32>,
    } else {
    }
    return
  }
  func.func @transform_0(%arg0: i32, %arg1: i32, %arg2: i32, %arg3: i32) -> (i32, i32, i32, i32) {
    %c0_i32 = arith.constant 0 : i32
    %c0_i32_0 = arith.constant 0 : i32
    return %arg0, %arg1, %arg2, %c0_i32 : i32, i32, i32, i32
  }
  func.func @transform_1(%arg0: i32, %arg1: i32, %arg2: i32, %arg3: i32) -> (i32, i32, i32, i32) {
    %c0_i32 = arith.constant 0 : i32
    %c0_i32_0 = arith.constant 0 : i32
    return %arg0, %arg1, %arg3, %c0_i32 : i32, i32, i32, i32
  }
  func.func @transform_2(%arg0: i32, %arg1: i32, %arg2: i32, %arg3: i32) -> (i32, i32, i32, i32) {
    %c0_i32 = arith.constant 0 : i32
    %c0_i32_0 = arith.constant 0 : i32
    return %arg0, %arg1, %arg3, %c0_i32 : i32, i32, i32, i32
  }
  func.func @transform_3(%arg0: i32, %arg1: i32, %arg2: i32, %arg3: i32) -> (i32, i32, i32, i32) {
    %c0_i32 = arith.constant 0 : i32
    %c0_i32_0 = arith.constant 0 : i32
    return %arg0, %arg1, %arg2, %c0_i32 : i32, i32, i32, i32
  }
}

module attributes {stable_mosaic.version = 11 : i64} {
  func.func @_qkv_kernel(%arg0: i32, %arg1: i32, %arg2: i32, %arg3: memref<1x8x32xf32, #tpu.memory_space<vmem>>, %arg4: memref<1x32x8xf32, #tpu.memory_space<vmem>>, %arg5: memref<1x32x8xf32, #tpu.memory_space<vmem>>, %arg6: memref<1x32x8xf32, #tpu.memory_space<vmem>>, %arg7: memref<1x1x8xf32, #tpu.memory_space<vmem>>, %arg8: memref<1x1x8xf32, #tpu.memory_space<vmem>>, %arg9: memref<1x1x8xf32, #tpu.memory_space<vmem>>, %arg10: memref<1x1x8x8xf32, #tpu.memory_space<vmem>>, %arg11: memref<1x1x8x8xf32, #tpu.memory_space<vmem>>, %arg12: memref<1x1x8x8xf32, #tpu.memory_space<vmem>>) attributes {dimension_semantics = [#tpu.dimension_semantics<parallel>, #tpu.dimension_semantics<parallel>, #tpu.dimension_semantics<parallel>], iteration_bounds = array<i64: 2, 1, 4>, scalar_prefetch = 0 : i64, scratch_operands = 0 : i64, tpu.core_type = #tpu.core_type<tc>, window_params = [{transform_indices = @transform_0, window_bounds = array<i64: 1, 8, 32>}, {transform_indices = @transform_1, window_bounds = array<i64: 1, 32, 8>}, {transform_indices = @transform_2, window_bounds = array<i64: 1, 32, 8>}, {transform_indices = @transform_3, window_bounds = array<i64: 1, 32, 8>}, {transform_indices = @transform_4, window_bounds = array<i64: 1, 1, 8>}, {transform_indices = @transform_5, window_bounds = array<i64: 1, 1, 8>}, {transform_indices = @transform_6, window_bounds = array<i64: 1, 1, 8>}, {transform_indices = @transform_7, window_bounds = array<i64: 1, 1, 8, 8>}, {transform_indices = @transform_8, window_bounds = array<i64: 1, 1, 8, 8>}, {transform_indices = @transform_9, window_bounds = array<i64: 1, 1, 8, 8>}]} {
    %c0 = arith.constant 0 : index
    %c0_0 = arith.constant 0 : index
    %c0_1 = arith.constant 0 : index
    %0 = vector.load %arg3[%c0, %c0_0, %c0_1] : memref<1x8x32xf32, #tpu.memory_space<vmem>>, vector<1x8x32xf32>
    %1 = vector.shape_cast %0 : vector<1x8x32xf32> to vector<8x32xf32>
    %c0_2 = arith.constant 0 : index
    %c0_3 = arith.constant 0 : index
    %c0_4 = arith.constant 0 : index
    %2 = vector.load %arg4[%c0_2, %c0_3, %c0_4] : memref<1x32x8xf32, #tpu.memory_space<vmem>>, vector<1x32x8xf32>
    %3 = vector.shape_cast %2 : vector<1x32x8xf32> to vector<32x8xf32>
    %cst = arith.constant dense<0.000000e+00> : vector<8x8xf32>
    %4 = tpu.matmul %1, %3, %cst {dimension_numbers = #tpu.dot_dimension_numbers<[1], [0], [0], [1], [0, 0, 1, 1], [], []>} : vector<8x32xf32>, vector<32x8xf32>, vector<8x8xf32> -> vector<8x8xf32>
    %c0_5 = arith.constant 0 : index
    %c0_6 = arith.constant 0 : index
    %c0_7 = arith.constant 0 : index
    %5 = vector.load %arg7[%c0_5, %c0_6, %c0_7] : memref<1x1x8xf32, #tpu.memory_space<vmem>>, vector<1x1x8xf32>
    %6 = vector.shape_cast %5 : vector<1x1x8xf32> to vector<1x8xf32>
    %7 = vector.broadcast %6 : vector<1x8xf32> to vector<8x8xf32>
    %8 = arith.addf %4, %7 : vector<8x8xf32>
    %c0_8 = arith.constant 0 : index
    %c0_9 = arith.constant 0 : index
    %c0_10 = arith.constant 0 : index
    %c0_11 = arith.constant 0 : index
    %9 = vector.load %arg10[%c0_8, %c0_9, %c0_10, %c0_11] : memref<1x1x8x8xf32, #tpu.memory_space<vmem>>, vector<1x1x8x8xf32>
    %10 = vector.shape_cast %9 : vector<1x1x8x8xf32> to vector<8x8xf32>
    %11 = vector.shape_cast %8 : vector<8x8xf32> to vector<1x1x8x8xf32>
    tpu.vector_store %arg10[%c0_8, %c0_9, %c0_10, %c0_11], %11 {strides = array<i32>} : memref<1x1x8x8xf32, #tpu.memory_space<vmem>>, vector<1x1x8x8xf32>,
    %c0_12 = arith.constant 0 : index
    %c0_13 = arith.constant 0 : index
    %c0_14 = arith.constant 0 : index
    %12 = vector.load %arg5[%c0_12, %c0_13, %c0_14] : memref<1x32x8xf32, #tpu.memory_space<vmem>>, vector<1x32x8xf32>
    %13 = vector.shape_cast %12 : vector<1x32x8xf32> to vector<32x8xf32>
    %cst_15 = arith.constant dense<0.000000e+00> : vector<8x8xf32>
    %14 = tpu.matmul %1, %13, %cst_15 {dimension_numbers = #tpu.dot_dimension_numbers<[1], [0], [0], [1], [0, 0, 1, 1], [], []>} : vector<8x32xf32>, vector<32x8xf32>, vector<8x8xf32> -> vector<8x8xf32>
    %c0_16 = arith.constant 0 : index
    %c0_17 = arith.constant 0 : index
    %c0_18 = arith.constant 0 : index
    %15 = vector.load %arg8[%c0_16, %c0_17, %c0_18] : memref<1x1x8xf32, #tpu.memory_space<vmem>>, vector<1x1x8xf32>
    %16 = vector.shape_cast %15 : vector<1x1x8xf32> to vector<1x8xf32>
    %17 = vector.broadcast %16 : vector<1x8xf32> to vector<8x8xf32>
    %18 = arith.addf %14, %17 : vector<8x8xf32>
    %c0_19 = arith.constant 0 : index
    %c0_20 = arith.constant 0 : index
    %c0_21 = arith.constant 0 : index
    %c0_22 = arith.constant 0 : index
    %19 = vector.load %arg11[%c0_19, %c0_20, %c0_21, %c0_22] : memref<1x1x8x8xf32, #tpu.memory_space<vmem>>, vector<1x1x8x8xf32>
    %20 = vector.shape_cast %19 : vector<1x1x8x8xf32> to vector<8x8xf32>
    %21 = vector.shape_cast %18 : vector<8x8xf32> to vector<1x1x8x8xf32>
    tpu.vector_store %arg11[%c0_19, %c0_20, %c0_21, %c0_22], %21 {strides = array<i32>} : memref<1x1x8x8xf32, #tpu.memory_space<vmem>>, vector<1x1x8x8xf32>,
    %c0_23 = arith.constant 0 : index
    %c0_24 = arith.constant 0 : index
    %c0_25 = arith.constant 0 : index
    %22 = vector.load %arg6[%c0_23, %c0_24, %c0_25] : memref<1x32x8xf32, #tpu.memory_space<vmem>>, vector<1x32x8xf32>
    %23 = vector.shape_cast %22 : vector<1x32x8xf32> to vector<32x8xf32>
    %cst_26 = arith.constant dense<0.000000e+00> : vector<8x8xf32>
    %24 = tpu.matmul %1, %23, %cst_26 {dimension_numbers = #tpu.dot_dimension_numbers<[1], [0], [0], [1], [0, 0, 1, 1], [], []>} : vector<8x32xf32>, vector<32x8xf32>, vector<8x8xf32> -> vector<8x8xf32>
    %c0_27 = arith.constant 0 : index
    %c0_28 = arith.constant 0 : index
    %c0_29 = arith.constant 0 : index
    %25 = vector.load %arg9[%c0_27, %c0_28, %c0_29] : memref<1x1x8xf32, #tpu.memory_space<vmem>>, vector<1x1x8xf32>
    %26 = vector.shape_cast %25 : vector<1x1x8xf32> to vector<1x8xf32>
    %27 = vector.broadcast %26 : vector<1x8xf32> to vector<8x8xf32>
    %28 = arith.addf %24, %27 : vector<8x8xf32>
    %c0_30 = arith.constant 0 : index
    %c0_31 = arith.constant 0 : index
    %c0_32 = arith.constant 0 : index
    %c0_33 = arith.constant 0 : index
    %29 = vector.load %arg12[%c0_30, %c0_31, %c0_32, %c0_33] : memref<1x1x8x8xf32, #tpu.memory_space<vmem>>, vector<1x1x8x8xf32>
    %30 = vector.shape_cast %29 : vector<1x1x8x8xf32> to vector<8x8xf32>
    %31 = vector.shape_cast %28 : vector<8x8xf32> to vector<1x1x8x8xf32>
    tpu.vector_store %arg12[%c0_30, %c0_31, %c0_32, %c0_33], %31 {strides = array<i32>} : memref<1x1x8x8xf32, #tpu.memory_space<vmem>>, vector<1x1x8x8xf32>,
    return
  }
  func.func @transform_0(%arg0: i32, %arg1: i32, %arg2: i32) -> (i32, i32, i32) {
    %c0_i32 = arith.constant 0 : i32
    %c0_i32_0 = arith.constant 0 : i32
    return %arg0, %arg1, %c0_i32 : i32, i32, i32
  }
  func.func @transform_1(%arg0: i32, %arg1: i32, %arg2: i32) -> (i32, i32, i32) {
    %c0_i32 = arith.constant 0 : i32
    %c0_i32_0 = arith.constant 0 : i32
    %c0_i32_1 = arith.constant 0 : i32
    return %arg2, %c0_i32, %c0_i32_0 : i32, i32, i32
  }
  func.func @transform_2(%arg0: i32, %arg1: i32, %arg2: i32) -> (i32, i32, i32) {
    %c0_i32 = arith.constant 0 : i32
    %c0_i32_0 = arith.constant 0 : i32
    %c0_i32_1 = arith.constant 0 : i32
    return %arg2, %c0_i32, %c0_i32_0 : i32, i32, i32
  }
  func.func @transform_3(%arg0: i32, %arg1: i32, %arg2: i32) -> (i32, i32, i32) {
    %c0_i32 = arith.constant 0 : i32
    %c0_i32_0 = arith.constant 0 : i32
    %c0_i32_1 = arith.constant 0 : i32
    return %arg2, %c0_i32, %c0_i32_0 : i32, i32, i32
  }
  func.func @transform_4(%arg0: i32, %arg1: i32, %arg2: i32) -> (i32, i32, i32) {
    %c0_i32 = arith.constant 0 : i32
    %c0_i32_0 = arith.constant 0 : i32
    %c0_i32_1 = arith.constant 0 : i32
    return %arg2, %c0_i32, %c0_i32_0 : i32, i32, i32
  }
  func.func @transform_5(%arg0: i32, %arg1: i32, %arg2: i32) -> (i32, i32, i32) {
    %c0_i32 = arith.constant 0 : i32
    %c0_i32_0 = arith.constant 0 : i32
    %c0_i32_1 = arith.constant 0 : i32
    return %arg2, %c0_i32, %c0_i32_0 : i32, i32, i32
  }
  func.func @transform_6(%arg0: i32, %arg1: i32, %arg2: i32) -> (i32, i32, i32) {
    %c0_i32 = arith.constant 0 : i32
    %c0_i32_0 = arith.constant 0 : i32
    %c0_i32_1 = arith.constant 0 : i32
    return %arg2, %c0_i32, %c0_i32_0 : i32, i32, i32
  }
  func.func @transform_7(%arg0: i32, %arg1: i32, %arg2: i32) -> (i32, i32, i32, i32) {
    %c0_i32 = arith.constant 0 : i32
    %c0_i32_0 = arith.constant 0 : i32
    return %arg0, %arg2, %arg1, %c0_i32 : i32, i32, i32, i32
  }
  func.func @transform_8(%arg0: i32, %arg1: i32, %arg2: i32) -> (i32, i32, i32, i32) {
    %c0_i32 = arith.constant 0 : i32
    %c0_i32_0 = arith.constant 0 : i32
    return %arg0, %arg2, %arg1, %c0_i32 : i32, i32, i32, i32
  }
  func.func @transform_9(%arg0: i32, %arg1: i32, %arg2: i32) -> (i32, i32, i32, i32) {
    %c0_i32 = arith.constant 0 : i32
    %c0_i32_0 = arith.constant 0 : i32
    return %arg0, %arg2, %arg1, %c0_i32 : i32, i32, i32, i32
  }
}

module attributes {stable_mosaic.version = 11 : i64} {
  func.func @kernel(%arg0: i32, %arg1: i32, %arg2: memref<16x32xf32, #tpu.memory_space<vmem>>, %arg3: memref<32x64xf32, #tpu.memory_space<vmem>>, %arg4: memref<1x64xf32, #tpu.memory_space<vmem>>, %arg5: memref<16x64xf32, #tpu.memory_space<vmem>>, %arg6: memref<16x64xf32, #tpu.memory_space<vmem>>) attributes {dimension_semantics = [#tpu.dimension_semantics<parallel>, #tpu.dimension_semantics<arbitrary>], iteration_bounds = array<i64: 1, 1>, scalar_prefetch = 0 : i64, scratch_operands = 1 : i64, tpu.core_type = #tpu.core_type<tc>, window_params = [{transform_indices = @transform_0, window_bounds = array<i64: 16, 32>}, {transform_indices = @transform_1, window_bounds = array<i64: 32, 64>}, {pipeline_mode = #tpu.pipeline_mode<synchronous>, transform_indices = @transform_2, window_bounds = array<i64: 1, 64>}, {transform_indices = @transform_3, window_bounds = array<i64: 16, 64>}]} {
    %c0_i32 = arith.constant 0 : i32
    %0 = arith.cmpi eq, %arg1, %c0_i32 : i32
    %1 = arith.extui %0 : i1 to i32
    %c0_i32_0 = arith.constant 0 : i32
    %2 = arith.cmpi ne, %1, %c0_i32_0 : i32
    scf.if %2 {
      %cst_10 = arith.constant 0.000000e+00 : f32
      %12 = vector.broadcast %cst_10 : f32 to vector<16x64xf32>
      %c0_11 = arith.constant 0 : index
      %c0_12 = arith.constant 0 : index
      %13 = vector.load %arg6[%c0_11, %c0_12] : memref<16x64xf32, #tpu.memory_space<vmem>>, vector<16x64xf32>
      tpu.vector_store %arg6[%c0_11, %c0_12], %12 {strides = array<i32>} : memref<16x64xf32, #tpu.memory_space<vmem>>, vector<16x64xf32>,
    } else {
    }
    %c0 = arith.constant 0 : index
    %c0_1 = arith.constant 0 : index
    %3 = vector.load %arg6[%c0, %c0_1] : memref<16x64xf32, #tpu.memory_space<vmem>>, vector<16x64xf32>
    %c0_2 = arith.constant 0 : index
    %c0_3 = arith.constant 0 : index
    %4 = vector.load %arg2[%c0_2, %c0_3] : memref<16x32xf32, #tpu.memory_space<vmem>>, vector<16x32xf32>
    %c0_4 = arith.constant 0 : index
    %c0_5 = arith.constant 0 : index
    %5 = vector.load %arg3[%c0_4, %c0_5] : memref<32x64xf32, #tpu.memory_space<vmem>>, vector<32x64xf32>
    %cst = arith.constant dense<0.000000e+00> : vector<16x64xf32>
    %6 = tpu.matmul %4, %5, %cst {dimension_numbers = #tpu.dot_dimension_numbers<[1], [0], [0], [1], [0, 0, 1, 1], [], []>} : vector<16x32xf32>, vector<32x64xf32>, vector<16x64xf32> -> vector<16x64xf32>
    %7 = arith.addf %3, %6 : vector<16x64xf32>
    %c0_6 = arith.constant 0 : index
    %c0_7 = arith.constant 0 : index
    %8 = vector.load %arg6[%c0_6, %c0_7] : memref<16x64xf32, #tpu.memory_space<vmem>>, vector<16x64xf32>
    tpu.vector_store %arg6[%c0_6, %c0_7], %7 {strides = array<i32>} : memref<16x64xf32, #tpu.memory_space<vmem>>, vector<16x64xf32>,
    %c0_i32_8 = arith.constant 0 : i32
    %9 = arith.cmpi eq, %arg1, %c0_i32_8 : i32
    %10 = arith.extui %9 : i1 to i32
    %c0_i32_9 = arith.constant 0 : i32
    %11 = arith.cmpi ne, %10, %c0_i32_9 : i32
    scf.if %11 {
      %c0_10 = arith.constant 0 : index
      %c0_11 = arith.constant 0 : index
      %12 = vector.load %arg6[%c0_10, %c0_11] : memref<16x64xf32, #tpu.memory_space<vmem>>, vector<16x64xf32>
      %c0_12 = arith.constant 0 : index
      %c0_13 = arith.constant 0 : index
      %13 = vector.load %arg4[%c0_12, %c0_13] : memref<1x64xf32, #tpu.memory_space<vmem>>, vector<1x64xf32>
      %14 = vector.broadcast %13 : vector<1x64xf32> to vector<16x64xf32>
      %15 = arith.addf %12, %14 : vector<16x64xf32>
      %16 = arith.mulf %15, %15 : vector<16x64xf32>
      %cst_14 = arith.constant dense<0.000000e+00> : vector<16xf32>
      %17 = vector.multi_reduction <add>, %16, %cst_14 [1] : vector<16x64xf32> to vector<16xf32>
      %18 = vector.shape_cast %17 : vector<16xf32> to vector<16x1xf32>
      %19 = math.sqrt %18 : vector<16x1xf32>
      %cst_15 = arith.constant 9.99999993E-9 : f32
      %20 = vector.broadcast %cst_15 : f32 to vector<16x1xf32>
      %21 = arith.addf %19, %20 : vector<16x1xf32>
      %22 = tpu.reciprocal %21 {approx = true} : vector<16x1xf32> -> vector<16x1xf32>
      %23 = vector.broadcast %22 : vector<16x1xf32> to vector<16x64xf32>
      %24 = arith.mulf %15, %23 : vector<16x64xf32>
      %c0_16 = arith.constant 0 : index
      %c0_17 = arith.constant 0 : index
      %25 = vector.load %arg5[%c0_16, %c0_17] : memref<16x64xf32, #tpu.memory_space<vmem>>, vector<16x64xf32>
      tpu.vector_store %arg5[%c0_16, %c0_17], %24 {strides = array<i32>} : memref<16x64xf32, #tpu.memory_space<vmem>>, vector<16x64xf32>,
    } else {
    }
    return
  }
  func.func @transform_0(%arg0: i32, %arg1: i32) -> (i32, i32) {
    %c0_i32 = arith.constant 0 : i32
    return %arg0, %arg1 : i32, i32
  }
  func.func @transform_1(%arg0: i32, %arg1: i32) -> (i32, i32) {
    %c0_i32 = arith.constant 0 : i32
    %c0_i32_0 = arith.constant 0 : i32
    return %arg1, %c0_i32 : i32, i32
  }
  func.func @transform_2(%arg0: i32, %arg1: i32) -> (i32, i32) {
    %c0_i32 = arith.constant 0 : i32
    %c0_i32_0 = arith.constant 0 : i32
    %c0_i32_1 = arith.constant 0 : i32
    return %c0_i32, %c0_i32_0 : i32, i32
  }
  func.func @transform_3(%arg0: i32, %arg1: i32) -> (i32, i32) {
    %c0_i32 = arith.constant 0 : i32
    %c0_i32_0 = arith.constant 0 : i32
    return %arg0, %c0_i32 : i32, i32
  }
}

module attributes {stable_mosaic.version = 11 : i64} {
  func.func @kernel(%arg0: i32, %arg1: i32, %arg2: memref<16x64xf32, #tpu.memory_space<vmem>>, %arg3: memref<64x32xf32, #tpu.memory_space<vmem>>, %arg4: memref<1x32xf32, #tpu.memory_space<vmem>>, %arg5: memref<16x32xf32, #tpu.memory_space<vmem>>, %arg6: memref<16x32xf32, #tpu.memory_space<vmem>>, %arg7: memref<16x32xf32, #tpu.memory_space<vmem>>) attributes {dimension_semantics = [#tpu.dimension_semantics<parallel>, #tpu.dimension_semantics<arbitrary>], iteration_bounds = array<i64: 1, 1>, scalar_prefetch = 0 : i64, scratch_operands = 1 : i64, tpu.core_type = #tpu.core_type<tc>, window_params = [{transform_indices = @transform_0, window_bounds = array<i64: 16, 64>}, {transform_indices = @transform_1, window_bounds = array<i64: 64, 32>}, {pipeline_mode = #tpu.pipeline_mode<synchronous>, transform_indices = @transform_2, window_bounds = array<i64: 1, 32>}, {transform_indices = @transform_3, window_bounds = array<i64: 16, 32>}, {transform_indices = @transform_4, window_bounds = array<i64: 16, 32>}]} {
    %c0_i32 = arith.constant 0 : i32
    %0 = arith.cmpi eq, %arg1, %c0_i32 : i32
    %1 = arith.extui %0 : i1 to i32
    %c0_i32_0 = arith.constant 0 : i32
    %2 = arith.cmpi ne, %1, %c0_i32_0 : i32
    scf.if %2 {
      %cst_10 = arith.constant 0.000000e+00 : f32
      %12 = vector.broadcast %cst_10 : f32 to vector<16x32xf32>
      %c0_11 = arith.constant 0 : index
      %c0_12 = arith.constant 0 : index
      %13 = vector.load %arg7[%c0_11, %c0_12] : memref<16x32xf32, #tpu.memory_space<vmem>>, vector<16x32xf32>
      tpu.vector_store %arg7[%c0_11, %c0_12], %12 {strides = array<i32>} : memref<16x32xf32, #tpu.memory_space<vmem>>, vector<16x32xf32>,
    } else {
    }
    %c0 = arith.constant 0 : index
    %c0_1 = arith.constant 0 : index
    %3 = vector.load %arg7[%c0, %c0_1] : memref<16x32xf32, #tpu.memory_space<vmem>>, vector<16x32xf32>
    %c0_2 = arith.constant 0 : index
    %c0_3 = arith.constant 0 : index
    %4 = vector.load %arg2[%c0_2, %c0_3] : memref<16x64xf32, #tpu.memory_space<vmem>>, vector<16x64xf32>
    %c0_4 = arith.constant 0 : index
    %c0_5 = arith.constant 0 : index
    %5 = vector.load %arg3[%c0_4, %c0_5] : memref<64x32xf32, #tpu.memory_space<vmem>>, vector<64x32xf32>
    %cst = arith.constant dense<0.000000e+00> : vector<16x32xf32>
    %6 = tpu.matmul %4, %5, %cst {dimension_numbers = #tpu.dot_dimension_numbers<[1], [0], [0], [1], [0, 0, 1, 1], [], []>} : vector<16x64xf32>, vector<64x32xf32>, vector<16x32xf32> -> vector<16x32xf32>
    %7 = arith.addf %3, %6 : vector<16x32xf32>
    %c0_6 = arith.constant 0 : index
    %c0_7 = arith.constant 0 : index
    %8 = vector.load %arg7[%c0_6, %c0_7] : memref<16x32xf32, #tpu.memory_space<vmem>>, vector<16x32xf32>
    tpu.vector_store %arg7[%c0_6, %c0_7], %7 {strides = array<i32>} : memref<16x32xf32, #tpu.memory_space<vmem>>, vector<16x32xf32>,
    %c0_i32_8 = arith.constant 0 : i32
    %9 = arith.cmpi eq, %arg1, %c0_i32_8 : i32
    %10 = arith.extui %9 : i1 to i32
    %c0_i32_9 = arith.constant 0 : i32
    %11 = arith.cmpi ne, %10, %c0_i32_9 : i32
    scf.if %11 {
      %c0_10 = arith.constant 0 : index
      %c0_11 = arith.constant 0 : index
      %12 = vector.load %arg5[%c0_10, %c0_11] : memref<16x32xf32, #tpu.memory_space<vmem>>, vector<16x32xf32>
      %c0_12 = arith.constant 0 : index
      %c0_13 = arith.constant 0 : index
      %13 = vector.load %arg7[%c0_12, %c0_13] : memref<16x32xf32, #tpu.memory_space<vmem>>, vector<16x32xf32>
      %c0_14 = arith.constant 0 : index
      %c0_15 = arith.constant 0 : index
      %14 = vector.load %arg4[%c0_14, %c0_15] : memref<1x32xf32, #tpu.memory_space<vmem>>, vector<1x32xf32>
      %15 = vector.broadcast %14 : vector<1x32xf32> to vector<16x32xf32>
      %16 = arith.addf %13, %15 : vector<16x32xf32>
      %17 = arith.addf %16, %12 : vector<16x32xf32>
      %18 = arith.mulf %17, %17 : vector<16x32xf32>
      %cst_16 = arith.constant dense<0.000000e+00> : vector<16xf32>
      %19 = vector.multi_reduction <add>, %18, %cst_16 [1] : vector<16x32xf32> to vector<16xf32>
      %20 = vector.shape_cast %19 : vector<16xf32> to vector<16x1xf32>
      %21 = math.sqrt %20 : vector<16x1xf32>
      %cst_17 = arith.constant 9.99999993E-9 : f32
      %22 = vector.broadcast %cst_17 : f32 to vector<16x1xf32>
      %23 = arith.addf %21, %22 : vector<16x1xf32>
      %24 = tpu.reciprocal %23 {approx = true} : vector<16x1xf32> -> vector<16x1xf32>
      %25 = vector.broadcast %24 : vector<16x1xf32> to vector<16x32xf32>
      %26 = arith.mulf %17, %25 : vector<16x32xf32>
      %c0_18 = arith.constant 0 : index
      %c0_19 = arith.constant 0 : index
      %27 = vector.load %arg6[%c0_18, %c0_19] : memref<16x32xf32, #tpu.memory_space<vmem>>, vector<16x32xf32>
      tpu.vector_store %arg6[%c0_18, %c0_19], %26 {strides = array<i32>} : memref<16x32xf32, #tpu.memory_space<vmem>>, vector<16x32xf32>,
    } else {
    }
    return
  }
  func.func @transform_0(%arg0: i32, %arg1: i32) -> (i32, i32) {
    %c0_i32 = arith.constant 0 : i32
    return %arg0, %arg1 : i32, i32
  }
  func.func @transform_1(%arg0: i32, %arg1: i32) -> (i32, i32) {
    %c0_i32 = arith.constant 0 : i32
    %c0_i32_0 = arith.constant 0 : i32
    return %arg1, %c0_i32 : i32, i32
  }
  func.func @transform_2(%arg0: i32, %arg1: i32) -> (i32, i32) {
    %c0_i32 = arith.constant 0 : i32
    %c0_i32_0 = arith.constant 0 : i32
    %c0_i32_1 = arith.constant 0 : i32
    return %c0_i32, %c0_i32_0 : i32, i32
  }
  func.func @transform_3(%arg0: i32, %arg1: i32) -> (i32, i32) {
    %c0_i32 = arith.constant 0 : i32
    %c0_i32_0 = arith.constant 0 : i32
    return %arg0, %c0_i32 : i32, i32
  }
  func.func @transform_4(%arg0: i32, %arg1: i32) -> (i32, i32) {
    %c0_i32 = arith.constant 0 : i32
    %c0_i32_0 = arith.constant 0 : i32
    return %arg0, %c0_i32 : i32, i32
  }
}

</mosaic_0001>

<llo_original>
// kernel: encoder_layer_forward.7
$region0: #{encoder_layer_forward.7}
  #allocation0 [shape = 'u32[]', space=smem, size = 0x4, offset = 0x4, fixed_abs, tag = 'smem constant byte address 0x4 - core index']
  #allocation1 [shape = 'u32[144,128]{1,0:T(1,128)}', space=vmem, size = 0x12000, scoped, tag = 'internal scratch']
  #allocation2 [shape = 'f32[8,32]{1,0:T(8,128)}', space=vmem, size = 0x1000, scoped, tag = 'scratch operand']
  %s0 = inlined_call_operand.hbm [shape: f32[2,4,8,8], index: 0, kind: input, shape index: {}]
  %s1 = inlined_call_operand.hbm [shape: f32[4,8,32], index: 1, kind: input, shape index: {}]
  %s2 = inlined_call_operand.hbm [shape: f32[1,32], index: 2, kind: input, shape index: {}]
  %s3 = inlined_call_operand.hbm [shape: f32[2,8,32], index: 3, kind: input, shape index: {}]
  %s4 = inlined_call_operand.hbm [shape: f32[2,8,32], index: 4, kind: output, shape index: {}]
  %s5 = sld [smem:[#allocation0]]
  $region73: #{encoder_layer_forward.7} parent=0
    _
  %s7 = ssub.s32 1, %s5
  %s8 = scalar_select 0, %s7, %s5
  $region1: #{encoder_layer_forward.7} parent=0
    #allocation3 [shape = 'u8[8192]{0}', space=vmem, size = 0x2000, scoped, tag = 'input window, operand 0']
    #allocation4 [shape = 's32[2]{0}', space=sflag, size = 0x8, scoped, tag = 'scoped memory for encoder_layer_forward.7']
    #allocation5 [shape = 's32[2]{0}', space=sflag, size = 0x8, scoped, tag = 'scoped memory for encoder_layer_forward.7']
    #allocation6 [shape = 'u8[8192]{0}', space=vmem, size = 0x2000, scoped, tag = 'input window, operand 1']
    #allocation7 [shape = 's32[2]{0}', space=sflag, size = 0x8, scoped, tag = 'scoped memory for encoder_layer_forward.7']
    #allocation8 [shape = 'u8[512]{0}', space=vmem, size = 0x400, scoped, tag = 'input window, operand 2, single buffered']
    #allocation9 [shape = 'u8[8192]{0}', space=vmem, size = 0x2000, scoped, tag = 'input window, operand 3']
    #allocation10 [shape = 's32[2]{0}', space=sflag, size = 0x8, scoped, tag = 'scoped memory for encoder_layer_forward.7']
    #allocation11 [shape = 'u8[8192]{0}', space=vmem, size = 0x2000, scoped, tag = 'output window, operand 0']
    %9 = vsyncpa [#allocation4], 0
    %s10 = scalar_lea.sflag [#allocation4], 1
    %11 = vsyncpa %s10, 0
    %12 = vsyncpa [#allocation7], 0
    %s13 = scalar_lea.sflag [#allocation7], 1
    %14 = vsyncpa %s13, 0
    %15 = vsyncpa [#allocation10], 0
    %s16 = scalar_lea.sflag [#allocation10], 1
    %17 = vsyncpa %s16, 0
    %18 = vsyncpa [#allocation5], 0
    %s19 = scalar_lea.sflag [#allocation5], 1
    %20 = vsyncpa %s19, 0
    loop: start=0, step=1, limit=10
    $region2: #{encoder_layer_forward.7} parent=1 // loop_pre_header
      _
    $region3: #{encoder_layer_forward.7} parent=1 // loop_header
      %s22 = sphi 0, %s26
      %p23 = scmp.ge.s32.totalorder %s22, 10
      %s29 = sphi 0, %s48
      %s30 = sphi 0, %s44
      %s31 = sphi 0, %s40
      %s32 = sphi 0, %s29
      %s33 = sphi 0, %s30
      %s34 = sphi 0, %s31
      %s35 = sphi 0, %s32
      %s36 = sphi 0, %s33
      %s37 = sphi 0, %s34
      %s55 = sphi 0, %s57
      %s58 = sphi 0, %s55
      %s59 = sphi 0, %s58
      %s75 = sphi 0, %s59
      %s81 = sphi 0, %s83
      %s84 = sphi 0, %s81
      %s85 = sphi 0, %s84
      %s101 = sphi 0, %s85
      %s105 = sphi 0, %s105
      %s107 = sphi 0, %s105
      %s108 = sphi 0, %s107
      %s122 = sphi 0, %s108
      %s130 = sphi 0, %s132
      %s133 = sphi 0, %s130
      %s134 = sphi 0, %s133
      %s150 = sphi 0, %s134
      %s158 = sphi 0, %s160
      %s161 = sphi 0, %s158
      %s162 = sphi 0, %s161
      %s178 = sphi 0, %s162
    $region4: #{encoder_layer_forward.7} parent=1 // loop_header_branch
      %25 = sbr.rel (%p23) target = $region8
    $region5: #{encoder_layer_forward.7} parent=1 // loop_body
      %s27 = ssub.s32 %s22, 1
      %s28 = ssub.s32 %s22, 2
      %s38 = sadd.s32 1, %s31
      %p39 = scmp.ge.s32.totalorder %s38, 4
      %s40 = scalar_select %p39, 0, %s38
      %s41 = sadd.s32 1, %s30
      %s42 = scalar_select %p39, %s41, %s30
      %p43 = scmp.ge.s32.totalorder %s42, 1
      %s44 = scalar_select %p43, 0, %s42
      %s45 = sadd.s32 1, %s29
      %s46 = scalar_select %p43, %s45, %s29
      %p47 = scmp.ge.s32.totalorder %s46, 2
      %s48 = scalar_select %p47, 0, %s46
      %s49 = ssub.s32 %s29, %s48
      %s50 = ssub.s32 %s31, %s40
      %s51 = sor.u32 %s49, %s50
      %s52 = ssub.s32 %s30, %s44
      %s53 = sor.u32 %s51, %s52
      %p54 = scmp.eq.s32.totalorder %s53, 0
      %s56 = sadd.s32 %s55, 1
      %s57 = scalar_select %p54, %s55, %s56
      %p60 = pneg %p54
      %p61 = scmp.eq.s32.totalorder %s22, 7
      %p62 = por %p60, %p61
      %p63 = scmp.ne.s32.totalorder %s55, %s58
      %p64 = scmp.eq.s32.totalorder %s22, 0
      %p65 = por %p63, %p64
      %p66 = scmp.ne.s32.totalorder %s55, %s58
      %p67 = scmp.eq.s32.totalorder %s27, 7
      %p68 = por %p66, %p67
      %p69 = scmp.ne.s32.totalorder %s58, %s59
      %p70 = scmp.eq.s32.totalorder %s27, 0
      %p71 = por %p69, %p70
      %p72 = scmp.ne.s32.totalorder %s58, %s59
      %p73 = scmp.eq.s32.totalorder %s28, 7
      %p74 = por %p72, %p73
      %p76 = scmp.ne.s32.totalorder %s59, %s75
      %p77 = scmp.eq.s32.totalorder %s28, 0
      %p78 = por %p76, %p77
      %s79 = ssub.s32 %s31, %s40
      %p80 = scmp.eq.s32.totalorder %s79, 0
      %s82 = sadd.s32 %s81, 1
      %s83 = scalar_select %p80, %s81, %s82
      %p86 = pneg %p80
      %p87 = scmp.eq.s32.totalorder %s22, 7
      %p88 = por %p86, %p87
      %p89 = scmp.ne.s32.totalorder %s81, %s84
      %p90 = scmp.eq.s32.totalorder %s22, 0
      %p91 = por %p89, %p90
      %p92 = scmp.ne.s32.totalorder %s81, %s84
      %p93 = scmp.eq.s32.totalorder %s27, 7
      %p94 = por %p92, %p93
      %p95 = scmp.ne.s32.totalorder %s84, %s85
      %p96 = scmp.eq.s32.totalorder %s27, 0
      %p97 = por %p95, %p96
      %p98 = scmp.ne.s32.totalorder %s84, %s85
      %p99 = scmp.eq.s32.totalorder %s28, 7
      %p100 = por %p98, %p99
      %p102 = scmp.ne.s32.totalorder %s85, %s101
      %p103 = scmp.eq.s32.totalorder %s28, 0
      %p104 = por %p102, %p103
      %s106 = sadd.s32 %s105, 1
      %p109 = scmp.eq.s32.totalorder %s22, 7
      %p110 = scmp.ne.s32.totalorder %s105, %s107
      %p111 = scmp.eq.s32.totalorder %s22, 0
      %p112 = por %p110, %p111
      %p113 = scmp.ne.s32.totalorder %s105, %s107
      %p114 = scmp.eq.s32.totalorder %s27, 7
      %p115 = por %p113, %p114
      %p116 = scmp.ne.s32.totalorder %s107, %s108
      %p117 = scmp.eq.s32.totalorder %s27, 0
      %p118 = por %p116, %p117
      %p119 = scmp.ne.s32.totalorder %s107, %s108
      %p120 = scmp.eq.s32.totalorder %s28, 7
      %p121 = por %p119, %p120
      %p123 = scmp.ne.s32.totalorder %s108, %s122
      %p124 = scmp.eq.s32.totalorder %s28, 0
      %p125 = por %p123, %p124
      %s126 = ssub.s32 %s29, %s48
      %s127 = ssub.s32 %s30, %s44
      %s128 = sor.u32 %s126, %s127
      %p129 = scmp.eq.s32.totalorder %s128, 0
      %s131 = sadd.s32 %s130, 1
      %s132 = scalar_select %p129, %s130, %s131
      %p135 = pneg %p129
      %p136 = scmp.eq.s32.totalorder %s22, 7
      %p137 = por %p135, %p136
      %p138 = scmp.ne.s32.totalorder %s130, %s133
      %p139 = scmp.eq.s32.totalorder %s22, 0
      %p140 = por %p138, %p139
      %p141 = scmp.ne.s32.totalorder %s130, %s133
      %p142 = scmp.eq.s32.totalorder %s27, 7
      %p143 = por %p141, %p142
      %p144 = scmp.ne.s32.totalorder %s133, %s134
      %p145 = scmp.eq.s32.totalorder %s27, 0
      %p146 = por %p144, %p145
      %p147 = scmp.ne.s32.totalorder %s133, %s134
      %p148 = scmp.eq.s32.totalorder %s28, 7
      %p149 = por %p147, %p148
      %p151 = scmp.ne.s32.totalorder %s134, %s150
      %p152 = scmp.eq.s32.totalorder %s28, 0
      %p153 = por %p151, %p152
      %s154 = ssub.s32 %s29, %s48
      %s155 = ssub.s32 %s30, %s44
      %s156 = sor.u32 %s154, %s155
      %p157 = scmp.eq.s32.totalorder %s156, 0
      %s159 = sadd.s32 %s158, 1
      %s160 = scalar_select %p157, %s158, %s159
      %p163 = pneg %p157
      %p164 = scmp.eq.s32.totalorder %s22, 7
      %p165 = por %p163, %p164
      %p166 = scmp.ne.s32.totalorder %s158, %s161
      %p167 = scmp.eq.s32.totalorder %s22, 0
      %p168 = por %p166, %p167
      %p169 = scmp.ne.s32.totalorder %s158, %s161
      %p170 = scmp.eq.s32.totalorder %s27, 7
      %p171 = por %p169, %p170
      %p172 = scmp.ne.s32.totalorder %s161, %s162
      %p173 = scmp.eq.s32.totalorder %s27, 0
      %p174 = por %p172, %p173
      %p175 = scmp.ne.s32.totalorder %s161, %s162
      %p176 = scmp.eq.s32.totalorder %s28, 7
      %p177 = por %p175, %p176
      %p179 = scmp.ne.s32.totalorder %s162, %s178
      %p180 = scmp.eq.s32.totalorder %s28, 0
      %p181 = por %p179, %p180
      %p182 = scmp.le.s32.totalorder 1, %s22
      %p183 = scmp.lt.s32.totalorder %s22, 9
      %p184 = pnand %p182, %p183
      %p185 = pneg %p184
      // Predicated region
      $region9: #{encoder_layer_forward.7} parent=5 // pred_check
        _
      $region10: #{encoder_layer_forward.7} parent=5 // pred_check_branch
        %187 = sbr.rel (%p184) target = $region12
      $region11: #{encoder_layer_forward.7} parent=5 // pred_region
        %s188 = ssub.s32 %s22, 1
        // Predicated region
        $region13: #{encoder_layer_forward.7} parent=11 // pred_check
          %p189 = pneg %p118
        $region14: #{encoder_layer_forward.7} parent=11 // pred_check_branch
          %191 = sbr.rel (%p189) target = $region16
        $region15: #{encoder_layer_forward.7} parent=11 // pred_region
          %s193 = ssub.s32 16, 16
          %194 = vsyncadd [#allocation7], %s193
          %s196 = sshll.u32 [#allocation8], 4
          %s197 = int_to_ptr.vmem [resolvable:$true] %s196
          %199 = dma.hbm_to_vmem [thread:$0]  %s2, 16, %s197, [#allocation7]
        $region16: #{encoder_layer_forward.7} parent=11 // pred_fallthru
          _
      $region12: #{encoder_layer_forward.7} parent=5 // pred_fallthru
        _
      %p200 = scmp.lt.s32.totalorder %s22, 8
      // Predicated region
      $region17: #{encoder_layer_forward.7} parent=5 // pred_check
        %p201 = pneg %p200
      $region18: #{encoder_layer_forward.7} parent=5 // pred_check_branch
        %203 = sbr.rel (%p201) target = $region20
      $region19: #{encoder_layer_forward.7} parent=5 // pred_region
        // Predicated region
        $region21: #{encoder_layer_forward.7} parent=19 // pred_check
          %p204 = pneg %p65
        $region22: #{encoder_layer_forward.7} parent=19 // pred_check_branch
          %206 = sbr.rel (%p204) target = $region24
        $region23: #{encoder_layer_forward.7} parent=19 // pred_region
          %s207 = sand.u32 %s55, 1
          %s208 = scalar_lea.sflag [#allocation4], %s207
          %s209 = sand.u32 %s55, 1
          %s210 = smul.addr %s209, 8
          %s211 = scalar_lea.vmem [#allocation3], %s210
          %s213 = ssub.s32 128, 128
          %214 = vsyncadd %s208, %s213
          %s215 = sadd.s32 %s30, %s31
          %s216 = smul.addr %s29, 4
          %s217 = sadd.s32 %s215, %s216
          %s218 = smul.addr %s217, 128
          %s219 = scalar_lea.hbm %s0, %s218
          %s221 = sshll.u32 %s211, 4
          %s222 = int_to_ptr.vmem [resolvable:$true] %s221
          %224 = dma.hbm_to_vmem [thread:$0]  %s219, 128, %s222, %s208
        $region24: #{encoder_layer_forward.7} parent=19 // pred_fallthru
          _
        // Predicated region
        $region25: #{encoder_layer_forward.7} parent=19 // pred_check
          %p225 = pneg %p91
        $region26: #{encoder_layer_forward.7} parent=19 // pred_check_branch
          %227 = sbr.rel (%p225) target = $region28
        $region27: #{encoder_layer_forward.7} parent=19 // pred_region
          %s228 = sand.u32 %s22, 1
          %s229 = scalar_lea.sflag [#allocation7], %s228
          %s230 = sand.u32 %s81, 1
          %s231 = smul.addr %s230, 8
          %s232 = scalar_lea.vmem [#allocation6], %s231
          %s234 = ssub.s32 128, 128
          %235 = vsyncadd %s229, %s234
          %s236 = smul.addr %s31, 128
          %s237 = scalar_lea.hbm %s1, %s236
          %s239 = sshll.u32 %s232, 4
          %s240 = int_to_ptr.vmem [resolvable:$true] %s239
          %242 = dma.hbm_to_vmem [thread:$0]  %s237, 128, %s240, %s229
        $region28: #{encoder_layer_forward.7} parent=19 // pred_fallthru
          _
        // Predicated region
        $region29: #{encoder_layer_forward.7} parent=19 // pred_check
          %p243 = pneg %p140
        $region30: #{encoder_layer_forward.7} parent=19 // pred_check_branch
          %245 = sbr.rel (%p243) target = $region32
        $region31: #{encoder_layer_forward.7} parent=19 // pred_region
          %s246 = sand.u32 %s130, 1
          %s247 = scalar_lea.sflag [#allocation10], %s246
          %s248 = sand.u32 %s130, 1
          %s249 = smul.addr %s248, 8
          %s250 = scalar_lea.vmem [#allocation9], %s249
          %s252 = ssub.s32 128, 128
          %253 = vsyncadd %s247, %s252
          %s254 = sadd.s32 %s30, %s29
          %s255 = smul.addr %s254, 128
          %s256 = scalar_lea.hbm %s3, %s255
          %s258 = sshll.u32 %s250, 4
          %s259 = int_to_ptr.vmem [resolvable:$true] %s258
          %261 = dma.hbm_to_vmem [thread:$0]  %s256, 128, %s259, %s247
        $region32: #{encoder_layer_forward.7} parent=19 // pred_fallthru
          _
      $region20: #{encoder_layer_forward.7} parent=5 // pred_fallthru
        _
      %p262 = scmp.le.s32.totalorder 1, %s22
      %p263 = scmp.lt.s32.totalorder %s22, 9
      %p264 = pnand %p262, %p263
      %p265 = pneg %p264
      // Predicated region
      $region33: #{encoder_layer_forward.7} parent=5 // pred_check
        _
      $region34: #{encoder_layer_forward.7} parent=5 // pred_check_branch
        %267 = sbr.rel (%p264) target = $region36
      $region35: #{encoder_layer_forward.7} parent=5 // pred_region
        %s268 = ssub.s32 %s22, 1
        %s269 = sand.u32 %s58, 1
        %s270 = scalar_lea.sflag [#allocation4], %s269
        %s271 = sand.u32 %s58, 1
        %s272 = smul.addr %s271, 8
        %s273 = scalar_lea.vmem [#allocation3], %s272
        // Predicated region
        $region37: #{encoder_layer_forward.7} parent=35 // pred_check
          %p274 = pneg %p71
        $region38: #{encoder_layer_forward.7} parent=35 // pred_check_branch
          %276 = sbr.rel (%p274) target = $region40
        $region39: #{encoder_layer_forward.7} parent=35 // pred_region
          %277 = dma.done %s270, 128
        $region40: #{encoder_layer_forward.7} parent=35 // pred_fallthru
          _
        %s278 = sand.u32 %s27, 1
        %s279 = scalar_lea.sflag [#allocation7], %s278
        %s280 = sand.u32 %s84, 1
        %s281 = smul.addr %s280, 8
        %s282 = scalar_lea.vmem [#allocation6], %s281
        // Predicated region
        $region41: #{encoder_layer_forward.7} parent=35 // pred_check
          %p283 = pneg %p97
        $region42: #{encoder_layer_forward.7} parent=35 // pred_check_branch
          %285 = sbr.rel (%p283) target = $region44
        $region43: #{encoder_layer_forward.7} parent=35 // pred_region
          %286 = dma.done %s279, 128
        $region44: #{encoder_layer_forward.7} parent=35 // pred_fallthru
          _
        // Predicated region
        $region45: #{encoder_layer_forward.7} parent=35 // pred_check
          %p287 = pneg %p118
        $region46: #{encoder_layer_forward.7} parent=35 // pred_check_branch
          %289 = sbr.rel (%p287) target = $region48
        $region47: #{encoder_layer_forward.7} parent=35 // pred_region
          %290 = dma.done [#allocation7], 16
        $region48: #{encoder_layer_forward.7} parent=35 // pred_fallthru
          _
        %s291 = sand.u32 %s133, 1
        %s292 = scalar_lea.sflag [#allocation10], %s291
        %s293 = sand.u32 %s133, 1
        %s294 = smul.addr %s293, 8
        %s295 = scalar_lea.vmem [#allocation9], %s294
        // Predicated region
        $region49: #{encoder_layer_forward.7} parent=35 // pred_check
          %p296 = pneg %p146
        $region50: #{encoder_layer_forward.7} parent=35 // pred_check_branch
          %298 = sbr.rel (%p296) target = $region52
        $region51: #{encoder_layer_forward.7} parent=35 // pred_region
          %299 = dma.done %s292, 128
        $region52: #{encoder_layer_forward.7} parent=35 // pred_fallthru
          _
        %s300 = sand.u32 %s58, 1
        %s301 = scalar_lea.sflag [#allocation4], %s300
        %s302 = sand.u32 %s58, 1
        %s303 = smul.addr %s302, 8
        %s304 = scalar_lea.vmem [#allocation3], %s303
        %p305 = pneg %p71
        %p306 = pneg %p68
        %s307 = sand.u32 %s27, 1
        %s308 = scalar_lea.sflag [#allocation7], %s307
        %s309 = sand.u32 %s84, 1
        %s310 = smul.addr %s309, 8
        %s311 = scalar_lea.vmem [#allocation6], %s310
        %p312 = pneg %p97
        %p313 = pneg %p94
        %p314 = pneg %p118
        %p315 = pneg %p115
        %s316 = sand.u32 %s133, 1
        %s317 = scalar_lea.sflag [#allocation10], %s316
        %s318 = sand.u32 %s133, 1
        %s319 = smul.addr %s318, 8
        %s320 = scalar_lea.vmem [#allocation9], %s319
        %p321 = pneg %p146
        %p322 = pneg %p143
        %p323 = pneg %p174
        %p324 = pneg %p171
        %s325 = sand.u32 %s161, 1
        %s326 = scalar_lea.sflag [#allocation5], %s325
        %s327 = sand.u32 %s161, 1
        %s328 = smul.addr %s327, 8
        %s329 = scalar_lea.vmem [#allocation11], %s328
        %p330 = scmp.eq.s32.totalorder %s34, 0
        // Predicated region
        $region53: #{encoder_layer_forward.7} parent=35 // pred_check
          %p331 = pneg %p330
        $region54: #{encoder_layer_forward.7} parent=35 // pred_check_branch
          %333 = sbr.rel (%p331) target = $region56
        $region55: #{encoder_layer_forward.7} parent=35 // pred_region
          %vm334 = vcmask 261120
          %335 = vst.msk [vmem:[#allocation2] sm:$0xff] %vm334, 0.0
        $region56: #{encoder_layer_forward.7} parent=35 // pred_fallthru
          _
        %v336 = vld [vmem:[#allocation2] sm:$0xff]
        %v337 = vld [vmem:[%s273] sm:$0xff]
        %v338 = vld [vmem:[%s282] sm:$0xff]
        %vm339 = vcmask 64512
        %v341 = vsel %vm339, %v337, 0
        %343 = vmatprep.subr.mxu0 0.0
        %344 = vmatpush1.msra.mxu0 %v338
        %345 = vmatprep.subr.mxu0 0.0
        %346 = vmatpush1.msra.mxu0 0.0
        %347 = vmatprep.subr.mxu0 0.0
        %348 = vmatpush1.msra.mxu0 0.0
        %349 = vmatprep.subr.mxu0 0.0
        %350 = vmatpush1.msra.mxu0 0.0
        %351 = vmatprep.subr.mxu0 0.0
        %352 = vmatpush1.msra.mxu0 0.0
        %353 = vmatprep.subr.mxu0 0.0
        %354 = vmatpush1.msra.mxu0 0.0
        %355 = vmatprep.subr.mxu0 0.0
        %356 = vmatpush1.msra.mxu0 0.0
        %357 = vmatprep.subr.mxu0 0.0
        %358 = vmatpush1.msra.mxu0 0.0
        %359 = vmatprep.subr.mxu0 0.0
        %360 = vmatpush1.msra.mxu0 0.0
        %361 = vmatprep.subr.mxu0 0.0
        %362 = vmatpush1.msra.mxu0 0.0
        %363 = vmatprep.subr.mxu0 0.0
        %364 = vmatpush1.msra.mxu0 0.0
        %365 = vmatprep.subr.mxu0 0.0
        %366 = vmatpush1.msra.mxu0 0.0
        %367 = vmatprep.subr.mxu0 0.0
        %368 = vmatpush1.msra.mxu0 0.0
        %369 = vmatprep.subr.mxu0 0.0
        %370 = vmatpush1.msra.mxu0 0.0
        %371 = vmatprep.subr.mxu0 0.0
        %372 = vmatpush1.msra.mxu0 0.0
        %373 = vmatprep.subr.mxu0 0.0
        %374 = vmatpush1.msra.mxu0 0.0
        %375 = vmatprep.subr.mxu0 0.0
        %376 = vmatpush1.msra.mxu0 0.0
        %377 = vmatprep.subr.mxu0 0.0
        %378 = vmatpush1.msra.mxu0 0.0
        %379 = vmatprep.subr.mxu0 0.0
        %380 = vmatpush1.msra.mxu0 0.0
        %381 = vmatprep.subr.mxu0 0.0
        %382 = vmatpush1.msra.mxu0 0.0
        %383 = vmatprep.subr.mxu0 0.0
        %384 = vmatpush1.msra.mxu0 0.0
        %385 = vmatprep.subr.mxu0 0.0
        %386 = vmatpush1.msra.mxu0 0.0
        %387 = vmatprep.subr.mxu0 0.0
        %388 = vmatpush1.msra.mxu0 0.0
        %389 = vmatprep.subr.mxu0 0.0
        %390 = vmatpush1.msra.mxu0 0.0
        %391 = vmatprep.subr.mxu0 0.0
        %392 = vmatpush1.msra.mxu0 0.0
        %393 = vmatprep.subr.mxu0 0.0
        %394 = vmatpush1.msra.mxu0 0.0
        %395 = vmatprep.subr.mxu0 0.0
        %396 = vmatpush1.msra.mxu0 0.0
        %397 = vmatprep.subr.mxu0 0.0
        %398 = vmatpush1.msra.mxu0 0.0
        %399 = vmatprep.subr.mxu0 0.0
        %400 = vmatpush1.msra.mxu0 0.0
        %401 = vmatprep.subr.mxu0 0.0
        %402 = vmatpush1.msra.mxu0 0.0
        %403 = vmatprep.subr.mxu0 0.0
        %404 = vmatpush1.msra.mxu0 0.0
        %405 = vmatprep.subr.mxu0 0.0
        %406 = vmatpush1.msra.mxu0 0.0
        %407 = vmatprep.mubr.f32.mxu0 0.0
        %408 = vmatmul.mubr.f32.gmra.mrb[0].mxu0 %v341
        %v409 = vpop.f32.mrb[0].mxu0
        %v410 = vadd.f32 0.0, %v409
        %v411 = vpop.f32.mrb[0].mxu0
        %412 = vdwg.mxu0
        %v413 = vadd.f32 %v336, %v410
        %vm414 = vcmask 261120
        %415 = vst.msk [vmem:[#allocation2] sm:$0xff] %vm414, %v413
        %p416 = scmp.eq.s32.totalorder %s34, 3
        // Predicated region
        $region57: #{encoder_layer_forward.7} parent=35 // pred_check
          %p417 = pneg %p416
        $region58: #{encoder_layer_forward.7} parent=35 // pred_check_branch
          %419 = sbr.rel (%p417) target = $region60
        $region59: #{encoder_layer_forward.7} parent=35 // pred_region
          %v420 = vld [vmem:[#allocation2] sm:$0xff]
          %v421 = vld [vmem:[#allocation8] sm:$0x1]
          %v423 = vlaneseq
          %v424 = vshrl.u32 %v423, 7
          %v425 = vsub.s32 0, %v424
          %v426 = vrot.slane %v421, %v425
          %v428 = vadd.f32 %v420, %v426
          %v429 = vld [vmem:[%s295] sm:$0xff]
          %v430 = vadd.f32 %v428, %v429
          %v431 = vmul.f32 %v430, %v430
          %v432 = vsel %vm414, %v431, 0.0
          %433 = vadd.xlane.f32.xlu0 %v432
          %v434 = vpop.xlane.xlu0 %433
          %v435 = vrsqrt.pop %v434
          %v436 = vmul.f32 %v434, %v435
          %vm437 = vcmp.eq.f32.partialorder %v434, inf
          %v438 = vsel %vm437, %v434, %v436
          %vm439 = vcmp.eq.f32.partialorder %v434, 0.0
          %v440 = vand.u32 %v434, 2147483648
          %v441 = vsel %vm439, %v440, %v438
          %v442 = vadd.f32 %v441, 1e-08
          %v443 = vrcp.pop %v442
          %v444 = vmul.f32 %v430, %v443
          %445 = vst.msk [vmem:[%s329] sm:$0xff] %vm414, %v444
        $region60: #{encoder_layer_forward.7} parent=35 // pred_fallthru
          _
        %s446 = sand.u32 %s161, 1
        %s447 = scalar_lea.sflag [#allocation5], %s446
        %s448 = sand.u32 %s161, 1
        %s449 = smul.addr %s448, 8
        %s450 = scalar_lea.vmem [#allocation11], %s449
        // Predicated region
        $region61: #{encoder_layer_forward.7} parent=35 // pred_check
          %p451 = pneg %p171
        $region62: #{encoder_layer_forward.7} parent=35 // pred_check_branch
          %453 = sbr.rel (%p451) target = $region64
        $region63: #{encoder_layer_forward.7} parent=35 // pred_region
          %s455 = ssub.s32 128, 128
          %456 = vsyncadd %s447, %s455
          %s457 = sadd.s32 %s33, %s32
          %s458 = smul.addr %s457, 128
          %s459 = scalar_lea.hbm %s4, %s458
          %s461 = sshll.u32 %s450, 4
          %s462 = int_to_ptr.vmem [resolvable:$true] %s461
          %464 = dma.vmem_to_hbm [thread:$0]  %s462, 128, %s459, %s447
        $region64: #{encoder_layer_forward.7} parent=35 // pred_fallthru
          _
      $region36: #{encoder_layer_forward.7} parent=5 // pred_fallthru
        _
      %p465 = scmp.le.s32.totalorder 2, %s22
      // Predicated region
      $region65: #{encoder_layer_forward.7} parent=5 // pred_check
        %p466 = pneg %p465
      $region66: #{encoder_layer_forward.7} parent=5 // pred_check_branch
        %468 = sbr.rel (%p466) target = $region68
      $region67: #{encoder_layer_forward.7} parent=5 // pred_region
        %s469 = ssub.s32 %s22, 2
        // Predicated region
        $region69: #{encoder_layer_forward.7} parent=67 // pred_check
          %p470 = pneg %p177
        $region70: #{encoder_layer_forward.7} parent=67 // pred_check_branch
          %472 = sbr.rel (%p470) target = $region72
        $region71: #{encoder_layer_forward.7} parent=67 // pred_region
          %s473 = sand.u32 %s162, 1
          %s474 = scalar_lea.sflag [#allocation5], %s473
          %s475 = sand.u32 %s162, 1
          %s476 = smul.addr %s475, 8
          %s477 = scalar_lea.vmem [#allocation11], %s476
          %478 = dma.done %s474, 128
        $region72: #{encoder_layer_forward.7} parent=67 // pred_fallthru
          _
      $region68: #{encoder_layer_forward.7} parent=5 // pred_fallthru
        _
    $region6: #{encoder_layer_forward.7} parent=1 // loop_footer
      %s26 = sadd.s32 1, %s22
    $region7: #{encoder_layer_forward.7} parent=1 // loop_footer_branch
      %21 = sbr.rel target = $region3
    $region8: #{encoder_layer_forward.7} parent=1 // loop_exit
      _
    %479 = vsyncpa [#allocation4], 1
    %s480 = scalar_lea.sflag [#allocation4], 1
    %481 = vsyncpa %s480, 1
    %482 = vsyncpa [#allocation7], 1
    %s483 = scalar_lea.sflag [#allocation7], 1
    %484 = vsyncpa %s483, 1
    %485 = vsyncpa [#allocation10], 1
    %s486 = scalar_lea.sflag [#allocation10], 1
    %487 = vsyncpa %s486, 1
    %488 = vsyncpa [#allocation5], 1
    %s489 = scalar_lea.sflag [#allocation5], 1
    %490 = vsyncpa %s489, 1

// kernel: encoder_layer_forward.6
$region0: #{encoder_layer_forward.6}
  #allocation0 [shape = 'u32[]', space=smem, size = 0x4, offset = 0x4, fixed_abs, tag = 'smem constant byte address 0x4 - core index']
  #allocation1 [shape = 'u32[144,128]{1,0:T(1,128)}', space=vmem, size = 0x12000, scoped, tag = 'internal scratch']
  #allocation2 [shape = 'f32[8,1]{1,0:T(8,128)}', space=vmem, size = 0x1000, scoped, tag = 'scratch operand']
  #allocation3 [shape = 'f32[8,1]{1,0:T(8,128)}', space=vmem, size = 0x1000, scoped, tag = 'scratch operand']
  #allocation4 [shape = 'f32[8,8]{1,0:T(8,128)}', space=vmem, size = 0x1000, scoped, tag = 'scratch operand']
  %s0 = inlined_call_operand.hbm [shape: f32[2,4,8,8], index: 0, kind: input, shape index: {}]
  %s1 = inlined_call_operand.hbm [shape: f32[2,4,8,8], index: 1, kind: input, shape index: {}]
  %s2 = inlined_call_operand.hbm [shape: f32[2,4,8,8], index: 2, kind: input, shape index: {}]
  %s3 = inlined_call_operand.hbm [shape: f32[2,4,8,8], index: 3, kind: output, shape index: {}]
  %s4 = sld [smem:[#allocation0]]
  $region65: #{encoder_layer_forward.6} parent=0
    _
  %s6 = ssub.s32 1, %s4
  %s7 = scalar_select 0, %s6, %s4
  $region1: #{encoder_layer_forward.6} parent=0
    #allocation5 [shape = 'u8[8192]{0}', space=vmem, size = 0x2000, scoped, tag = 'input window, operand 0']
    #allocation6 [shape = 's32[2]{0}', space=sflag, size = 0x8, scoped, tag = 'scoped memory for encoder_layer_forward.6']
    #allocation7 [shape = 's32[2]{0}', space=sflag, size = 0x8, scoped, tag = 'scoped memory for encoder_layer_forward.6']
    #allocation8 [shape = 'u8[8192]{0}', space=vmem, size = 0x2000, scoped, tag = 'input window, operand 1']
    #allocation9 [shape = 's32[2]{0}', space=sflag, size = 0x8, scoped, tag = 'scoped memory for encoder_layer_forward.6']
    #allocation10 [shape = 'u8[8192]{0}', space=vmem, size = 0x2000, scoped, tag = 'input window, operand 2']
    #allocation11 [shape = 'u8[8192]{0}', space=vmem, size = 0x2000, scoped, tag = 'output window, operand 0']
    %8 = vsyncpa [#allocation6], 0
    %s9 = scalar_lea.sflag [#allocation6], 1
    %10 = vsyncpa %s9, 0
    %11 = vsyncpa [#allocation9], 0
    %s12 = scalar_lea.sflag [#allocation9], 1
    %13 = vsyncpa %s12, 0
    %14 = vsyncpa [#allocation7], 0
    %s15 = scalar_lea.sflag [#allocation7], 1
    %16 = vsyncpa %s15, 0
    loop: start=0, step=1, limit=10
    $region2: #{encoder_layer_forward.6} parent=1 // loop_pre_header
      _
    $region3: #{encoder_layer_forward.6} parent=1 // loop_header
      %s18 = sphi 0, %s22
      %p19 = scmp.ge.s32.totalorder %s18, 10
      %s25 = sphi 0, %s51
      %s26 = sphi 0, %s47
      %s27 = sphi 0, %s43
      %s28 = sphi 0, %s39
      %s29 = sphi 0, %s25
      %s30 = sphi 0, %s26
      %s31 = sphi 0, %s27
      %s32 = sphi 0, %s28
      %s33 = sphi 0, %s29
      %s34 = sphi 0, %s30
      %s35 = sphi 0, %s31
      %s36 = sphi 0, %s32
      %s58 = sphi 0, %s60
      %s61 = sphi 0, %s58
      %s62 = sphi 0, %s61
      %s78 = sphi 0, %s62
      %s88 = sphi 0, %s90
      %s91 = sphi 0, %s88
      %s92 = sphi 0, %s91
      %s108 = sphi 0, %s92
      %s118 = sphi 0, %s120
      %s121 = sphi 0, %s118
      %s122 = sphi 0, %s121
      %s138 = sphi 0, %s122
      %s148 = sphi 0, %s150
      %s151 = sphi 0, %s148
      %s152 = sphi 0, %s151
      %s168 = sphi 0, %s152
    $region4: #{encoder_layer_forward.6} parent=1 // loop_header_branch
      %21 = sbr.rel (%p19) target = $region8
    $region5: #{encoder_layer_forward.6} parent=1 // loop_body
      %s23 = ssub.s32 %s18, 1
      %s24 = ssub.s32 %s18, 2
      %s37 = sadd.s32 1, %s28
      %p38 = scmp.ge.s32.totalorder %s37, 1
      %s39 = scalar_select %p38, 0, %s37
      %s40 = sadd.s32 1, %s27
      %s41 = scalar_select %p38, %s40, %s27
      %p42 = scmp.ge.s32.totalorder %s41, 1
      %s43 = scalar_select %p42, 0, %s41
      %s44 = sadd.s32 1, %s26
      %s45 = scalar_select %p42, %s44, %s26
      %p46 = scmp.ge.s32.totalorder %s45, 4
      %s47 = scalar_select %p46, 0, %s45
      %s48 = sadd.s32 1, %s25
      %s49 = scalar_select %p46, %s48, %s25
      %p50 = scmp.ge.s32.totalorder %s49, 2
      %s51 = scalar_select %p50, 0, %s49
      %s52 = ssub.s32 %s25, %s51
      %s53 = ssub.s32 %s26, %s47
      %s54 = sor.u32 %s52, %s53
      %s55 = ssub.s32 %s27, %s43
      %s56 = sor.u32 %s54, %s55
      %p57 = scmp.eq.s32.totalorder %s56, 0
      %s59 = sadd.s32 %s58, 1
      %s60 = scalar_select %p57, %s58, %s59
      %p63 = pneg %p57
      %p64 = scmp.eq.s32.totalorder %s18, 7
      %p65 = por %p63, %p64
      %p66 = scmp.ne.s32.totalorder %s58, %s61
      %p67 = scmp.eq.s32.totalorder %s18, 0
      %p68 = por %p66, %p67
      %p69 = scmp.ne.s32.totalorder %s58, %s61
      %p70 = scmp.eq.s32.totalorder %s23, 7
      %p71 = por %p69, %p70
      %p72 = scmp.ne.s32.totalorder %s61, %s62
      %p73 = scmp.eq.s32.totalorder %s23, 0
      %p74 = por %p72, %p73
      %p75 = scmp.ne.s32.totalorder %s61, %s62
      %p76 = scmp.eq.s32.totalorder %s24, 7
      %p77 = por %p75, %p76
      %p79 = scmp.ne.s32.totalorder %s62, %s78
      %p80 = scmp.eq.s32.totalorder %s24, 0
      %p81 = por %p79, %p80
      %s82 = ssub.s32 %s25, %s51
      %s83 = ssub.s32 %s26, %s47
      %s84 = sor.u32 %s82, %s83
      %s85 = ssub.s32 %s28, %s39
      %s86 = sor.u32 %s84, %s85
      %p87 = scmp.eq.s32.totalorder %s86, 0
      %s89 = sadd.s32 %s88, 1
      %s90 = scalar_select %p87, %s88, %s89
      %p93 = pneg %p87
      %p94 = scmp.eq.s32.totalorder %s18, 7
      %p95 = por %p93, %p94
      %p96 = scmp.ne.s32.totalorder %s88, %s91
      %p97 = scmp.eq.s32.totalorder %s18, 0
      %p98 = por %p96, %p97
      %p99 = scmp.ne.s32.totalorder %s88, %s91
      %p100 = scmp.eq.s32.totalorder %s23, 7
      %p101 = por %p99, %p100
      %p102 = scmp.ne.s32.totalorder %s91, %s92
      %p103 = scmp.eq.s32.totalorder %s23, 0
      %p104 = por %p102, %p103
      %p105 = scmp.ne.s32.totalorder %s91, %s92
      %p106 = scmp.eq.s32.totalorder %s24, 7
      %p107 = por %p105, %p106
      %p109 = scmp.ne.s32.totalorder %s92, %s108
      %p110 = scmp.eq.s32.totalorder %s24, 0
      %p111 = por %p109, %p110
      %s112 = ssub.s32 %s25, %s51
      %s113 = ssub.s32 %s26, %s47
      %s114 = sor.u32 %s112, %s113
      %s115 = ssub.s32 %s28, %s39
      %s116 = sor.u32 %s114, %s115
      %p117 = scmp.eq.s32.totalorder %s116, 0
      %s119 = sadd.s32 %s118, 1
      %s120 = scalar_select %p117, %s118, %s119
      %p123 = pneg %p117
      %p124 = scmp.eq.s32.totalorder %s18, 7
      %p125 = por %p123, %p124
      %p126 = scmp.ne.s32.totalorder %s118, %s121
      %p127 = scmp.eq.s32.totalorder %s18, 0
      %p128 = por %p126, %p127
      %p129 = scmp.ne.s32.totalorder %s118, %s121
      %p130 = scmp.eq.s32.totalorder %s23, 7
      %p131 = por %p129, %p130
      %p132 = scmp.ne.s32.totalorder %s121, %s122
      %p133 = scmp.eq.s32.totalorder %s23, 0
      %p134 = por %p132, %p133
      %p135 = scmp.ne.s32.totalorder %s121, %s122
      %p136 = scmp.eq.s32.totalorder %s24, 7
      %p137 = por %p135, %p136
      %p139 = scmp.ne.s32.totalorder %s122, %s138
      %p140 = scmp.eq.s32.totalorder %s24, 0
      %p141 = por %p139, %p140
      %s142 = ssub.s32 %s25, %s51
      %s143 = ssub.s32 %s26, %s47
      %s144 = sor.u32 %s142, %s143
      %s145 = ssub.s32 %s27, %s43
      %s146 = sor.u32 %s144, %s145
      %p147 = scmp.eq.s32.totalorder %s146, 0
      %s149 = sadd.s32 %s148, 1
      %s150 = scalar_select %p147, %s148, %s149
      %p153 = pneg %p147
      %p154 = scmp.eq.s32.totalorder %s18, 7
      %p155 = por %p153, %p154
      %p156 = scmp.ne.s32.totalorder %s148, %s151
      %p157 = scmp.eq.s32.totalorder %s18, 0
      %p158 = por %p156, %p157
      %p159 = scmp.ne.s32.totalorder %s148, %s151
      %p160 = scmp.eq.s32.totalorder %s23, 7
      %p161 = por %p159, %p160
      %p162 = scmp.ne.s32.totalorder %s151, %s152
      %p163 = scmp.eq.s32.totalorder %s23, 0
      %p164 = por %p162, %p163
      %p165 = scmp.ne.s32.totalorder %s151, %s152
      %p166 = scmp.eq.s32.totalorder %s24, 7
      %p167 = por %p165, %p166
      %p169 = scmp.ne.s32.totalorder %s152, %s168
      %p170 = scmp.eq.s32.totalorder %s24, 0
      %p171 = por %p169, %p170
      %p172 = scmp.le.s32.totalorder 1, %s18
      %p173 = scmp.lt.s32.totalorder %s18, 9
      %p174 = pnand %p172, %p173
      %p175 = pneg %p174
      // Predicated region
      $region9: #{encoder_layer_forward.6} parent=5 // pred_check
        _
      $region10: #{encoder_layer_forward.6} parent=5 // pred_check_branch
        %177 = sbr.rel (%p174) target = $region12
      $region11: #{encoder_layer_forward.6} parent=5 // pred_region
        %s178 = ssub.s32 %s18, 1
      $region12: #{encoder_layer_forward.6} parent=5 // pred_fallthru
        _
      %p179 = scmp.lt.s32.totalorder %s18, 8
      // Predicated region
      $region13: #{encoder_layer_forward.6} parent=5 // pred_check
        %p180 = pneg %p179
      $region14: #{encoder_layer_forward.6} parent=5 // pred_check_branch
        %182 = sbr.rel (%p180) target = $region16
      $region15: #{encoder_layer_forward.6} parent=5 // pred_region
        // Predicated region
        $region17: #{encoder_layer_forward.6} parent=15 // pred_check
          %p183 = pneg %p68
        $region18: #{encoder_layer_forward.6} parent=15 // pred_check_branch
          %185 = sbr.rel (%p183) target = $region20
        $region19: #{encoder_layer_forward.6} parent=15 // pred_region
          %s186 = sand.u32 %s58, 1
          %s187 = scalar_lea.sflag [#allocation6], %s186
          %s188 = sand.u32 %s58, 1
          %s189 = smul.addr %s188, 8
          %s190 = scalar_lea.vmem [#allocation5], %s189
          %s192 = ssub.s32 128, 128
          %193 = vsyncadd %s187, %s192
          %s194 = sadd.s32 %s27, %s26
          %s195 = smul.addr %s25, 4
          %s196 = sadd.s32 %s194, %s195
          %s197 = smul.addr %s196, 128
          %s198 = scalar_lea.hbm %s0, %s197
          %s200 = sshll.u32 %s190, 4
          %s201 = int_to_ptr.vmem [resolvable:$true] %s200
          %203 = dma.hbm_to_vmem [thread:$0]  %s198, 128, %s201, %s187
        $region20: #{encoder_layer_forward.6} parent=15 // pred_fallthru
          _
        // Predicated region
        $region21: #{encoder_layer_forward.6} parent=15 // pred_check
          %p204 = pneg %p98
        $region22: #{encoder_layer_forward.6} parent=15 // pred_check_branch
          %206 = sbr.rel (%p204) target = $region24
        $region23: #{encoder_layer_forward.6} parent=15 // pred_region
          %s207 = sand.u32 %s18, 1
          %s208 = scalar_lea.sflag [#allocation9], %s207
          %s209 = sand.u32 %s88, 1
          %s210 = smul.addr %s209, 8
          %s211 = scalar_lea.vmem [#allocation8], %s210
          %s213 = ssub.s32 128, 128
          %214 = vsyncadd %s208, %s213
          %s215 = sadd.s32 %s28, %s26
          %s216 = smul.addr %s25, 4
          %s217 = sadd.s32 %s215, %s216
          %s218 = smul.addr %s217, 128
          %s219 = scalar_lea.hbm %s1, %s218
          %s221 = sshll.u32 %s211, 4
          %s222 = int_to_ptr.vmem [resolvable:$true] %s221
          %224 = dma.hbm_to_vmem [thread:$0]  %s219, 128, %s222, %s208
        $region24: #{encoder_layer_forward.6} parent=15 // pred_fallthru
          _
        // Predicated region
        $region25: #{encoder_layer_forward.6} parent=15 // pred_check
          %p225 = pneg %p128
        $region26: #{encoder_layer_forward.6} parent=15 // pred_check_branch
          %227 = sbr.rel (%p225) target = $region28
        $region27: #{encoder_layer_forward.6} parent=15 // pred_region
          %s228 = sand.u32 %s18, 1
          %s229 = scalar_lea.sflag [#allocation9], %s228
          %s230 = sand.u32 %s118, 1
          %s231 = smul.addr %s230, 8
          %s232 = scalar_lea.vmem [#allocation10], %s231
          %s234 = ssub.s32 128, 128
          %235 = vsyncadd %s229, %s234
          %s236 = sadd.s32 %s28, %s26
          %s237 = smul.addr %s25, 4
          %s238 = sadd.s32 %s236, %s237
          %s239 = smul.addr %s238, 128
          %s240 = scalar_lea.hbm %s2, %s239
          %s242 = sshll.u32 %s232, 4
          %s243 = int_to_ptr.vmem [resolvable:$true] %s242
          %245 = dma.hbm_to_vmem [thread:$0]  %s240, 128, %s243, %s229
        $region28: #{encoder_layer_forward.6} parent=15 // pred_fallthru
          _
      $region16: #{encoder_layer_forward.6} parent=5 // pred_fallthru
        _
      %p246 = scmp.le.s32.totalorder 1, %s18
      %p247 = scmp.lt.s32.totalorder %s18, 9
      %p248 = pnand %p246, %p247
      %p249 = pneg %p248
      // Predicated region
      $region29: #{encoder_layer_forward.6} parent=5 // pred_check
        _
      $region30: #{encoder_layer_forward.6} parent=5 // pred_check_branch
        %251 = sbr.rel (%p248) target = $region32
      $region31: #{encoder_layer_forward.6} parent=5 // pred_region
        %s252 = ssub.s32 %s18, 1
        %s253 = sand.u32 %s61, 1
        %s254 = scalar_lea.sflag [#allocation6], %s253
        %s255 = sand.u32 %s61, 1
        %s256 = smul.addr %s255, 8
        %s257 = scalar_lea.vmem [#allocation5], %s256
        // Predicated region
        $region33: #{encoder_layer_forward.6} parent=31 // pred_check
          %p258 = pneg %p74
        $region34: #{encoder_layer_forward.6} parent=31 // pred_check_branch
          %260 = sbr.rel (%p258) target = $region36
        $region35: #{encoder_layer_forward.6} parent=31 // pred_region
          %261 = dma.done %s254, 128
        $region36: #{encoder_layer_forward.6} parent=31 // pred_fallthru
          _
        %s262 = sand.u32 %s23, 1
        %s263 = scalar_lea.sflag [#allocation9], %s262
        %s264 = sand.u32 %s91, 1
        %s265 = smul.addr %s264, 8
        %s266 = scalar_lea.vmem [#allocation8], %s265
        // Predicated region
        $region37: #{encoder_layer_forward.6} parent=31 // pred_check
          %p267 = pneg %p104
        $region38: #{encoder_layer_forward.6} parent=31 // pred_check_branch
          %269 = sbr.rel (%p267) target = $region40
        $region39: #{encoder_layer_forward.6} parent=31 // pred_region
          %270 = dma.done %s263, 128
        $region40: #{encoder_layer_forward.6} parent=31 // pred_fallthru
          _
        %s271 = sand.u32 %s23, 1
        %s272 = scalar_lea.sflag [#allocation9], %s271
        %s273 = sand.u32 %s121, 1
        %s274 = smul.addr %s273, 8
        %s275 = scalar_lea.vmem [#allocation10], %s274
        // Predicated region
        $region41: #{encoder_layer_forward.6} parent=31 // pred_check
          %p276 = pneg %p134
        $region42: #{encoder_layer_forward.6} parent=31 // pred_check_branch
          %278 = sbr.rel (%p276) target = $region44
        $region43: #{encoder_layer_forward.6} parent=31 // pred_region
          %279 = dma.done %s272, 128
        $region44: #{encoder_layer_forward.6} parent=31 // pred_fallthru
          _
        %s280 = sand.u32 %s61, 1
        %s281 = scalar_lea.sflag [#allocation6], %s280
        %s282 = sand.u32 %s61, 1
        %s283 = smul.addr %s282, 8
        %s284 = scalar_lea.vmem [#allocation5], %s283
        %p285 = pneg %p74
        %p286 = pneg %p71
        %s287 = sand.u32 %s23, 1
        %s288 = scalar_lea.sflag [#allocation9], %s287
        %s289 = sand.u32 %s91, 1
        %s290 = smul.addr %s289, 8
        %s291 = scalar_lea.vmem [#allocation8], %s290
        %p292 = pneg %p104
        %p293 = pneg %p101
        %s294 = sand.u32 %s23, 1
        %s295 = scalar_lea.sflag [#allocation9], %s294
        %s296 = sand.u32 %s121, 1
        %s297 = smul.addr %s296, 8
        %s298 = scalar_lea.vmem [#allocation10], %s297
        %p299 = pneg %p134
        %p300 = pneg %p131
        %p301 = pneg %p164
        %p302 = pneg %p161
        %s303 = sand.u32 %s151, 1
        %s304 = scalar_lea.sflag [#allocation7], %s303
        %s305 = sand.u32 %s151, 1
        %s306 = smul.addr %s305, 8
        %s307 = scalar_lea.vmem [#allocation11], %s306
        %p308 = scmp.eq.s32.totalorder %s32, 0
        // Predicated region
        $region45: #{encoder_layer_forward.6} parent=31 // pred_check
          %p309 = pneg %p308
        $region46: #{encoder_layer_forward.6} parent=31 // pred_check_branch
          %311 = sbr.rel (%p309) target = $region48
        $region47: #{encoder_layer_forward.6} parent=31 // pred_region
          %vm312 = vcmask 7168
          %313 = vst.msk [vmem:[#allocation2] sm:$0xff] %vm312, -inf
          %314 = vst.msk [vmem:[#allocation3] sm:$0xff] %vm312, 0.0
          %vm315 = vcmask 64512
          %316 = vst.msk [vmem:[#allocation4] sm:$0xff] %vm315, 0.0
        $region48: #{encoder_layer_forward.6} parent=31 // pred_fallthru
          _
        %v317 = vld [vmem:[%s257] sm:$0xff]
        %v318 = vld [vmem:[%s266] sm:$0xff]
        %v319 = vld [vmem:[%s275] sm:$0xff]
        %v320 = vmul.f32 %v317, %v317
        %vm321 = vcmask 64512
        %v322 = vsel %vm321, %v320, 0.0
        %323 = vadd.xlane.f32.xlu0 %v322
        %v324 = vpop.xlane.xlu0 %323
        %v325 = vrsqrt.pop %v324
        %v326 = vmul.f32 %v324, %v325
        %vm327 = vcmp.eq.f32.partialorder %v324, inf
        %v328 = vsel %vm327, %v324, %v326
        %vm329 = vcmp.eq.f32.partialorder %v324, 0.0
        %v330 = vand.u32 %v324, 2147483648
        %v331 = vsel %vm329, %v330, %v328
        %v332 = vadd.f32 %v331, 1e-08
        %v333 = vrcp.pop %v332
        %v334 = vmul.f32 %v317, %v333
        %v335 = vmul.f32 %v318, %v318
        %v336 = vsel %vm321, %v335, 0.0
        %337 = vadd.xlane.f32.xlu0 %v336
        %v338 = vpop.xlane.xlu0 %337
        %v339 = vrsqrt.pop %v338
        %v340 = vmul.f32 %v338, %v339
        %vm341 = vcmp.eq.f32.partialorder %v338, inf
        %v342 = vsel %vm341, %v338, %v340
        %vm343 = vcmp.eq.f32.partialorder %v338, 0.0
        %v344 = vand.u32 %v338, 2147483648
        %v345 = vsel %vm343, %v344, %v342
        %v346 = vadd.f32 %v345, 1e-08
        %v347 = vrcp.pop %v346
        %v348 = vmul.f32 %v318, %v347
        %v350 = vsel %vm321, %v334, 0
        %v353 = vsel %vm321, %v348, 0
        %355 = vmatprep.subr.mxu0 0.0
        %356 = vmatpush1.xpose.msra.mxu0 %v353
        %357 = vmatprep.subr.mxu0 0.0
        %358 = vmatpush1.xpose.msra.mxu0 0.0
        %359 = vmatprep.subr.mxu0 0.0
        %360 = vmatpush1.xpose.msra.mxu0 0.0
        %361 = vmatprep.subr.mxu0 0.0
        %362 = vmatpush1.xpose.msra.mxu0 0.0
        %363 = vmatprep.subr.mxu0 0.0
        %364 = vmatpush1.xpose.msra.mxu0 0.0
        %365 = vmatprep.subr.mxu0 0.0
        %366 = vmatpush1.xpose.msra.mxu0 0.0
        %367 = vmatprep.subr.mxu0 0.0
        %368 = vmatpush1.xpose.msra.mxu0 0.0
        %369 = vmatprep.subr.mxu0 0.0
        %370 = vmatpush1.xpose.msra.mxu0 0.0
        %371 = vmatprep.subr.mxu0 0.0
        %372 = vmatpush1.xpose.msra.mxu0 0.0
        %373 = vmatprep.subr.mxu0 0.0
        %374 = vmatpush1.xpose.msra.mxu0 0.0
        %375 = vmatprep.subr.mxu0 0.0
        %376 = vmatpush1.xpose.msra.mxu0 0.0
        %377 = vmatprep.subr.mxu0 0.0
        %378 = vmatpush1.xpose.msra.mxu0 0.0
        %379 = vmatprep.subr.mxu0 0.0
        %380 = vmatpush1.xpose.msra.mxu0 0.0
        %381 = vmatprep.subr.mxu0 0.0
        %382 = vmatpush1.xpose.msra.mxu0 0.0
        %383 = vmatprep.subr.mxu0 0.0
        %384 = vmatpush1.xpose.msra.mxu0 0.0
        %385 = vmatprep.subr.mxu0 0.0
        %386 = vmatpush1.xpose.msra.mxu0 0.0
        %387 = vmatprep.subr.mxu0 0.0
        %388 = vmatpush1.xpose.msra.mxu0 0.0
        %389 = vmatprep.subr.mxu0 0.0
        %390 = vmatpush1.xpose.msra.mxu0 0.0
        %391 = vmatprep.subr.mxu0 0.0
        %392 = vmatpush1.xpose.msra.mxu0 0.0
        %393 = vmatprep.subr.mxu0 0.0
        %394 = vmatpush1.xpose.msra.mxu0 0.0
        %395 = vmatprep.subr.mxu0 0.0
        %396 = vmatpush1.xpose.msra.mxu0 0.0
        %397 = vmatprep.subr.mxu0 0.0
        %398 = vmatpush1.xpose.msra.mxu0 0.0
        %399 = vmatprep.subr.mxu0 0.0
        %400 = vmatpush1.xpose.msra.mxu0 0.0
        %401 = vmatprep.subr.mxu0 0.0
        %402 = vmatpush1.xpose.msra.mxu0 0.0
        %403 = vmatprep.subr.mxu0 0.0
        %404 = vmatpush1.xpose.msra.mxu0 0.0
        %405 = vmatprep.subr.mxu0 0.0
        %406 = vmatpush1.xpose.msra.mxu0 0.0
        %407 = vmatprep.subr.mxu0 0.0
        %408 = vmatpush1.xpose.msra.mxu0 0.0
        %409 = vmatprep.subr.mxu0 0.0
        %410 = vmatpush1.xpose.msra.mxu0 0.0
        %411 = vmatprep.subr.mxu0 0.0
        %412 = vmatpush1.xpose.msra.mxu0 0.0
        %413 = vmatprep.subr.mxu0 0.0
        %414 = vmatpush1.xpose.msra.mxu0 0.0
        %415 = vmatprep.subr.mxu0 0.0
        %416 = vmatpush1.xpose.msra.mxu0 0.0
        %417 = vmatprep.subr.mxu0 0.0
        %418 = vmatpush1.xpose.msra.mxu0 0.0
        %419 = vmatprep.mubr.f32.mxu0 0.0
        %420 = vmatmul.mubr.f32.gmra.mrb[0].mxu0 %v350
        %v421 = vpop.f32.mrb[0].mxu0
        %v422 = vadd.f32 0.0, %v421
        %v423 = vpop.f32.mrb[0].mxu0
        %424 = vdwg.mxu0
        %v425 = vld [vmem:[#allocation2] sm:$0xff]
        %v426 = vsel %vm321, %v422, -inf
        %427 = vmax.xlane.f32.xlu0 %v426
        %v428 = vpop.xlane.xlu0 %427
        %v429 = vmax.f32 %v425, %v428
        %v430 = vsub.f32 %v425, %v429
        %v431 = vmul.f32 %v430, 1.442695
        %v432 = vpow.pop %v431
        %434 = vset.pattern.permute.xlu0 0
        %435 = vperm.xlu0 %434, %v429
        %v436 = vpop.permute.xlu0 %435
        %v438 = vsub.f32 %v422, %v436
        %v439 = vmul.f32 %v438, 1.442695
        %v440 = vpow.pop %v439
        %v441 = vld [vmem:[#allocation3] sm:$0xff]
        %v442 = vmul.f32 %v432, %v441
        %v443 = vsel %vm321, %v440, 0.0
        %444 = vadd.xlane.f32.xlu0 %v443
        %v445 = vpop.xlane.xlu0 %444
        %v446 = vadd.f32 %v442, %v445
        %vm447 = vcmask 7168
        %448 = vst.msk [vmem:[#allocation3] sm:$0xff] %vm447, %v446
        %v449 = vld [vmem:[#allocation4] sm:$0xff]
        %451 = vset.pattern.permute.xlu0 0
        %452 = vperm.xlu0 %451, %v432
        %v453 = vpop.permute.xlu0 %452
        %v455 = vmul.f32 %v453, %v449
        %v457 = vsel %vm321, %v440, 0
        %459 = vmatprep.subr.mxu0 0.0
        %460 = vmatpush1.msra.mxu0 %v319
        %461 = vmatprep.subr.mxu0 0.0
        %462 = vmatpush1.msra.mxu0 0.0
        %463 = vmatprep.subr.mxu0 0.0
        %464 = vmatpush1.msra.mxu0 0.0
        %465 = vmatprep.subr.mxu0 0.0
        %466 = vmatpush1.msra.mxu0 0.0
        %467 = vmatprep.subr.mxu0 0.0
        %468 = vmatpush1.msra.mxu0 0.0
        %469 = vmatprep.subr.mxu0 0.0
        %470 = vmatpush1.msra.mxu0 0.0
        %471 = vmatprep.subr.mxu0 0.0
        %472 = vmatpush1.msra.mxu0 0.0
        %473 = vmatprep.subr.mxu0 0.0
        %474 = vmatpush1.msra.mxu0 0.0
        %475 = vmatprep.subr.mxu0 0.0
        %476 = vmatpush1.msra.mxu0 0.0
        %477 = vmatprep.subr.mxu0 0.0
        %478 = vmatpush1.msra.mxu0 0.0
        %479 = vmatprep.subr.mxu0 0.0
        %480 = vmatpush1.msra.mxu0 0.0
        %481 = vmatprep.subr.mxu0 0.0
        %482 = vmatpush1.msra.mxu0 0.0
        %483 = vmatprep.subr.mxu0 0.0
        %484 = vmatpush1.msra.mxu0 0.0
        %485 = vmatprep.subr.mxu0 0.0
        %486 = vmatpush1.msra.mxu0 0.0
        %487 = vmatprep.subr.mxu0 0.0
        %488 = vmatpush1.msra.mxu0 0.0
        %489 = vmatprep.subr.mxu0 0.0
        %490 = vmatpush1.msra.mxu0 0.0
        %491 = vmatprep.subr.mxu0 0.0
        %492 = vmatpush1.msra.mxu0 0.0
        %493 = vmatprep.subr.mxu0 0.0
        %494 = vmatpush1.msra.mxu0 0.0
        %495 = vmatprep.subr.mxu0 0.0
        %496 = vmatpush1.msra.mxu0 0.0
        %497 = vmatprep.subr.mxu0 0.0
        %498 = vmatpush1.msra.mxu0 0.0
        %499 = vmatprep.subr.mxu0 0.0
        %500 = vmatpush1.msra.mxu0 0.0
        %501 = vmatprep.subr.mxu0 0.0
        %502 = vmatpush1.msra.mxu0 0.0
        %503 = vmatprep.subr.mxu0 0.0
        %504 = vmatpush1.msra.mxu0 0.0
        %505 = vmatprep.subr.mxu0 0.0
        %506 = vmatpush1.msra.mxu0 0.0
        %507 = vmatprep.subr.mxu0 0.0
        %508 = vmatpush1.msra.mxu0 0.0
        %509 = vmatprep.subr.mxu0 0.0
        %510 = vmatpush1.msra.mxu0 0.0
        %511 = vmatprep.subr.mxu0 0.0
        %512 = vmatpush1.msra.mxu0 0.0
        %513 = vmatprep.subr.mxu0 0.0
        %514 = vmatpush1.msra.mxu0 0.0
        %515 = vmatprep.subr.mxu0 0.0
        %516 = vmatpush1.msra.mxu0 0.0
        %517 = vmatprep.subr.mxu0 0.0
        %518 = vmatpush1.msra.mxu0 0.0
        %519 = vmatprep.subr.mxu0 0.0
        %520 = vmatpush1.msra.mxu0 0.0
        %521 = vmatprep.subr.mxu0 0.0
        %522 = vmatpush1.msra.mxu0 0.0
        %523 = vmatprep.mubr.f32.mxu0 0.0
        %524 = vmatmul.mubr.f32.gmra.mrb[0].mxu0 %v457
        %v525 = vpop.f32.mrb[0].mxu0
        %v526 = vadd.f32 0.0, %v525
        %v527 = vpop.f32.mrb[0].mxu0
        %528 = vdwg.mxu0
        %v529 = vadd.f32 %v455, %v526
        %530 = vst.msk [vmem:[#allocation4] sm:$0xff] %vm321, %v529
        %531 = vst.msk [vmem:[#allocation2] sm:$0xff] %vm447, %v429
        // Predicated region
        $region49: #{encoder_layer_forward.6} parent=31 // pred_check
          %p532 = pneg %p308
        $region50: #{encoder_layer_forward.6} parent=31 // pred_check_branch
          %534 = sbr.rel (%p532) target = $region52
        $region51: #{encoder_layer_forward.6} parent=31 // pred_region
          %v535 = vld [vmem:[#allocation3] sm:$0xff]
          %v536 = vrcp.pop %v535
          %v537 = vld [vmem:[#allocation4] sm:$0xff]
          %539 = vset.pattern.permute.xlu0 0
          %540 = vperm.xlu0 %539, %v536
          %v541 = vpop.permute.xlu0 %540
          %v543 = vmul.f32 %v537, %v541
          %544 = vst.msk [vmem:[%s307] sm:$0xff] %vm321, %v543
        $region52: #{encoder_layer_forward.6} parent=31 // pred_fallthru
          _
        %s545 = sand.u32 %s151, 1
        %s546 = scalar_lea.sflag [#allocation7], %s545
        %s547 = sand.u32 %s151, 1
        %s548 = smul.addr %s547, 8
        %s549 = scalar_lea.vmem [#allocation11], %s548
        // Predicated region
        $region53: #{encoder_layer_forward.6} parent=31 // pred_check
          %p550 = pneg %p161
        $region54: #{encoder_layer_forward.6} parent=31 // pred_check_branch
          %552 = sbr.rel (%p550) target = $region56
        $region55: #{encoder_layer_forward.6} parent=31 // pred_region
          %s554 = ssub.s32 128, 128
          %555 = vsyncadd %s546, %s554
          %s556 = sadd.s32 %s31, %s30
          %s557 = smul.addr %s29, 4
          %s558 = sadd.s32 %s556, %s557
          %s559 = smul.addr %s558, 128
          %s560 = scalar_lea.hbm %s3, %s559
          %s562 = sshll.u32 %s549, 4
          %s563 = int_to_ptr.vmem [resolvable:$true] %s562
          %565 = dma.vmem_to_hbm [thread:$0]  %s563, 128, %s560, %s546
        $region56: #{encoder_layer_forward.6} parent=31 // pred_fallthru
          _
      $region32: #{encoder_layer_forward.6} parent=5 // pred_fallthru
        _
      %p566 = scmp.le.s32.totalorder 2, %s18
      // Predicated region
      $region57: #{encoder_layer_forward.6} parent=5 // pred_check
        %p567 = pneg %p566
      $region58: #{encoder_layer_forward.6} parent=5 // pred_check_branch
        %569 = sbr.rel (%p567) target = $region60
      $region59: #{encoder_layer_forward.6} parent=5 // pred_region
        %s570 = ssub.s32 %s18, 2
        // Predicated region
        $region61: #{encoder_layer_forward.6} parent=59 // pred_check
          %p571 = pneg %p167
        $region62: #{encoder_layer_forward.6} parent=59 // pred_check_branch
          %573 = sbr.rel (%p571) target = $region64
        $region63: #{encoder_layer_forward.6} parent=59 // pred_region
          %s574 = sand.u32 %s152, 1
          %s575 = scalar_lea.sflag [#allocation7], %s574
          %s576 = sand.u32 %s152, 1
          %s577 = smul.addr %s576, 8
          %s578 = scalar_lea.vmem [#allocation11], %s577
          %579 = dma.done %s575, 128
        $region64: #{encoder_layer_forward.6} parent=59 // pred_fallthru
          _
      $region60: #{encoder_layer_forward.6} parent=5 // pred_fallthru
        _
    $region6: #{encoder_layer_forward.6} parent=1 // loop_footer
      %s22 = sadd.s32 1, %s18
    $region7: #{encoder_layer_forward.6} parent=1 // loop_footer_branch
      %17 = sbr.rel target = $region3
    $region8: #{encoder_layer_forward.6} parent=1 // loop_exit
      _
    %580 = vsyncpa [#allocation6], 1
    %s581 = scalar_lea.sflag [#allocation6], 1
    %582 = vsyncpa %s581, 1
    %583 = vsyncpa [#allocation9], 1
    %s584 = scalar_lea.sflag [#allocation9], 1
    %585 = vsyncpa %s584, 1
    %586 = vsyncpa [#allocation7], 1
    %s587 = scalar_lea.sflag [#allocation7], 1
    %588 = vsyncpa %s587, 1

// kernel: encoder_layer_forward.5
$region0: #{encoder_layer_forward.5}
  #allocation0 [shape = 'u32[]', space=smem, size = 0x4, offset = 0x4, fixed_abs, tag = 'smem constant byte address 0x4 - core index']
  #allocation1 [shape = 'u32[144,128]{1,0:T(1,128)}', space=vmem, size = 0x12000, scoped, tag = 'internal scratch']
  %s0 = inlined_call_operand.hbm [shape: f32[2,8,32], index: 0, kind: input, shape index: {}]
  %s1 = inlined_call_operand.hbm [shape: f32[4,32,8], index: 1, kind: input, shape index: {}]
  %s2 = inlined_call_operand.hbm [shape: f32[4,32,8], index: 2, kind: input, shape index: {}]
  %s3 = inlined_call_operand.hbm [shape: f32[4,32,8], index: 3, kind: input, shape index: {}]
  %s4 = inlined_call_operand.hbm [shape: f32[4,1,8], index: 4, kind: input, shape index: {}]
  %s5 = inlined_call_operand.hbm [shape: f32[4,1,8], index: 5, kind: input, shape index: {}]
  %s6 = inlined_call_operand.hbm [shape: f32[4,1,8], index: 6, kind: input, shape index: {}]
  %s7 = inlined_call_operand.hbm [shape: f32[2,4,8,8], index: 7, kind: output, shape index: {0}]
  %s8 = inlined_call_operand.hbm [shape: f32[2,4,8,8], index: 8, kind: output, shape index: {1}]
  %s9 = inlined_call_operand.hbm [shape: f32[2,4,8,8], index: 9, kind: output, shape index: {2}]
  %10 = xla_tuple %s7, %s8, %s9
  %s11 = sld [smem:[#allocation0]]
  $region105: #{encoder_layer_forward.5} parent=0
    _
  %s13 = ssub.s32 1, %s11
  %s14 = scalar_select 0, %s13, %s11
  $region1: #{encoder_layer_forward.5} parent=0
    #allocation2 [shape = 'u8[8192]{0}', space=vmem, size = 0x2000, scoped, tag = 'input window, operand 0']
    #allocation3 [shape = 's32[2]{0}', space=sflag, size = 0x8, scoped, tag = 'scoped memory for encoder_layer_forward.5']
    #allocation4 [shape = 's32[2]{0}', space=sflag, size = 0x8, scoped, tag = 'scoped memory for encoder_layer_forward.5']
    #allocation5 [shape = 'u8[32768]{0}', space=vmem, size = 0x8000, scoped, tag = 'input window, operand 1']
    #allocation6 [shape = 's32[2]{0}', space=sflag, size = 0x8, scoped, tag = 'scoped memory for encoder_layer_forward.5']
    #allocation7 [shape = 'u8[32768]{0}', space=vmem, size = 0x8000, scoped, tag = 'input window, operand 2']
    #allocation8 [shape = 'u8[32768]{0}', space=vmem, size = 0x8000, scoped, tag = 'input window, operand 3']
    #allocation9 [shape = 's32[2]{0}', space=sflag, size = 0x8, scoped, tag = 'scoped memory for encoder_layer_forward.5']
    #allocation10 [shape = 'u8[1024]{0}', space=vmem, size = 0x400, scoped, tag = 'input window, operand 4']
    #allocation11 [shape = 'u8[1024]{0}', space=vmem, size = 0x400, scoped, tag = 'input window, operand 5']
    #allocation12 [shape = 's32[2]{0}', space=sflag, size = 0x8, scoped, tag = 'scoped memory for encoder_layer_forward.5']
    #allocation13 [shape = 'u8[1024]{0}', space=vmem, size = 0x400, scoped, tag = 'input window, operand 6']
    #allocation14 [shape = 'u8[8192]{0}', space=vmem, size = 0x2000, scoped, tag = 'output window, operand 0']
    #allocation15 [shape = 'u8[8192]{0}', space=vmem, size = 0x2000, scoped, tag = 'output window, operand 1']
    #allocation16 [shape = 's32[2]{0}', space=sflag, size = 0x8, scoped, tag = 'scoped memory for encoder_layer_forward.5']
    #allocation17 [shape = 'u8[8192]{0}', space=vmem, size = 0x2000, scoped, tag = 'output window, operand 2']
    %15 = vsyncpa [#allocation3], 0
    %s16 = scalar_lea.sflag [#allocation3], 1
    %17 = vsyncpa %s16, 0
    %18 = vsyncpa [#allocation6], 0
    %s19 = scalar_lea.sflag [#allocation6], 1
    %20 = vsyncpa %s19, 0
    %21 = vsyncpa [#allocation9], 0
    %s22 = scalar_lea.sflag [#allocation9], 1
    %23 = vsyncpa %s22, 0
    %24 = vsyncpa [#allocation12], 0
    %s25 = scalar_lea.sflag [#allocation12], 1
    %26 = vsyncpa %s25, 0
    %27 = vsyncpa [#allocation4], 0
    %s28 = scalar_lea.sflag [#allocation4], 1
    %29 = vsyncpa %s28, 0
    %30 = vsyncpa [#allocation16], 0
    %s31 = scalar_lea.sflag [#allocation16], 1
    %32 = vsyncpa %s31, 0
    loop: start=0, step=1, limit=10
    $region2: #{encoder_layer_forward.5} parent=1 // loop_pre_header
      _
    $region3: #{encoder_layer_forward.5} parent=1 // loop_header
      %s34 = sphi 0, %s38
      %p35 = scmp.ge.s32.totalorder %s34, 10
      %s41 = sphi 0, %s60
      %s42 = sphi 0, %s56
      %s43 = sphi 0, %s52
      %s44 = sphi 0, %s41
      %s45 = sphi 0, %s42
      %s46 = sphi 0, %s43
      %s47 = sphi 0, %s44
      %s48 = sphi 0, %s45
      %s49 = sphi 0, %s46
      %s65 = sphi 0, %s67
      %s68 = sphi 0, %s65
      %s69 = sphi 0, %s68
      %s85 = sphi 0, %s69
      %s91 = sphi 0, %s93
      %s94 = sphi 0, %s91
      %s95 = sphi 0, %s94
      %s111 = sphi 0, %s95
      %s117 = sphi 0, %s119
      %s120 = sphi 0, %s117
      %s121 = sphi 0, %s120
      %s137 = sphi 0, %s121
      %s143 = sphi 0, %s145
      %s146 = sphi 0, %s143
      %s147 = sphi 0, %s146
      %s163 = sphi 0, %s147
      %s169 = sphi 0, %s171
      %s172 = sphi 0, %s169
      %s173 = sphi 0, %s172
      %s189 = sphi 0, %s173
      %s195 = sphi 0, %s197
      %s198 = sphi 0, %s195
      %s199 = sphi 0, %s198
      %s215 = sphi 0, %s199
      %s221 = sphi 0, %s223
      %s224 = sphi 0, %s221
      %s225 = sphi 0, %s224
      %s241 = sphi 0, %s225
      %s251 = sphi 0, %s253
      %s254 = sphi 0, %s251
      %s255 = sphi 0, %s254
      %s271 = sphi 0, %s255
      %s281 = sphi 0, %s283
      %s284 = sphi 0, %s281
      %s285 = sphi 0, %s284
      %s301 = sphi 0, %s285
      %s311 = sphi 0, %s313
      %s314 = sphi 0, %s311
      %s315 = sphi 0, %s314
      %s331 = sphi 0, %s315
    $region4: #{encoder_layer_forward.5} parent=1 // loop_header_branch
      %37 = sbr.rel (%p35) target = $region8
    $region5: #{encoder_layer_forward.5} parent=1 // loop_body
      %s39 = ssub.s32 %s34, 1
      %s40 = ssub.s32 %s34, 2
      %s50 = sadd.s32 1, %s43
      %p51 = scmp.ge.s32.totalorder %s50, 4
      %s52 = scalar_select %p51, 0, %s50
      %s53 = sadd.s32 1, %s42
      %s54 = scalar_select %p51, %s53, %s42
      %p55 = scmp.ge.s32.totalorder %s54, 1
      %s56 = scalar_select %p55, 0, %s54
      %s57 = sadd.s32 1, %s41
      %s58 = scalar_select %p55, %s57, %s41
      %p59 = scmp.ge.s32.totalorder %s58, 2
      %s60 = scalar_select %p59, 0, %s58
      %s61 = ssub.s32 %s41, %s60
      %s62 = ssub.s32 %s42, %s56
      %s63 = sor.u32 %s61, %s62
      %p64 = scmp.eq.s32.totalorder %s63, 0
      %s66 = sadd.s32 %s65, 1
      %s67 = scalar_select %p64, %s65, %s66
      %p70 = pneg %p64
      %p71 = scmp.eq.s32.totalorder %s34, 7
      %p72 = por %p70, %p71
      %p73 = scmp.ne.s32.totalorder %s65, %s68
      %p74 = scmp.eq.s32.totalorder %s34, 0
      %p75 = por %p73, %p74
      %p76 = scmp.ne.s32.totalorder %s65, %s68
      %p77 = scmp.eq.s32.totalorder %s39, 7
      %p78 = por %p76, %p77
      %p79 = scmp.ne.s32.totalorder %s68, %s69
      %p80 = scmp.eq.s32.totalorder %s39, 0
      %p81 = por %p79, %p80
      %p82 = scmp.ne.s32.totalorder %s68, %s69
      %p83 = scmp.eq.s32.totalorder %s40, 7
      %p84 = por %p82, %p83
      %p86 = scmp.ne.s32.totalorder %s69, %s85
      %p87 = scmp.eq.s32.totalorder %s40, 0
      %p88 = por %p86, %p87
      %s89 = ssub.s32 %s43, %s52
      %p90 = scmp.eq.s32.totalorder %s89, 0
      %s92 = sadd.s32 %s91, 1
      %s93 = scalar_select %p90, %s91, %s92
      %p96 = pneg %p90
      %p97 = scmp.eq.s32.totalorder %s34, 7
      %p98 = por %p96, %p97
      %p99 = scmp.ne.s32.totalorder %s91, %s94
      %p100 = scmp.eq.s32.totalorder %s34, 0
      %p101 = por %p99, %p100
      %p102 = scmp.ne.s32.totalorder %s91, %s94
      %p103 = scmp.eq.s32.totalorder %s39, 7
      %p104 = por %p102, %p103
      %p105 = scmp.ne.s32.totalorder %s94, %s95
      %p106 = scmp.eq.s32.totalorder %s39, 0
      %p107 = por %p105, %p106
      %p108 = scmp.ne.s32.totalorder %s94, %s95
      %p109 = scmp.eq.s32.totalorder %s40, 7
      %p110 = por %p108, %p109
      %p112 = scmp.ne.s32.totalorder %s95, %s111
      %p113 = scmp.eq.s32.totalorder %s40, 0
      %p114 = por %p112, %p113
      %s115 = ssub.s32 %s43, %s52
      %p116 = scmp.eq.s32.totalorder %s115, 0
      %s118 = sadd.s32 %s117, 1
      %s119 = scalar_select %p116, %s117, %s118
      %p122 = pneg %p116
      %p123 = scmp.eq.s32.totalorder %s34, 7
      %p124 = por %p122, %p123
      %p125 = scmp.ne.s32.totalorder %s117, %s120
      %p126 = scmp.eq.s32.totalorder %s34, 0
      %p127 = por %p125, %p126
      %p128 = scmp.ne.s32.totalorder %s117, %s120
      %p129 = scmp.eq.s32.totalorder %s39, 7
      %p130 = por %p128, %p129
      %p131 = scmp.ne.s32.totalorder %s120, %s121
      %p132 = scmp.eq.s32.totalorder %s39, 0
      %p133 = por %p131, %p132
      %p134 = scmp.ne.s32.totalorder %s120, %s121
      %p135 = scmp.eq.s32.totalorder %s40, 7
      %p136 = por %p134, %p135
      %p138 = scmp.ne.s32.totalorder %s121, %s137
      %p139 = scmp.eq.s32.totalorder %s40, 0
      %p140 = por %p138, %p139
      %s141 = ssub.s32 %s43, %s52
      %p142 = scmp.eq.s32.totalorder %s141, 0
      %s144 = sadd.s32 %s143, 1
      %s145 = scalar_select %p142, %s143, %s144
      %p148 = pneg %p142
      %p149 = scmp.eq.s32.totalorder %s34, 7
      %p150 = por %p148, %p149
      %p151 = scmp.ne.s32.totalorder %s143, %s146
      %p152 = scmp.eq.s32.totalorder %s34, 0
      %p153 = por %p151, %p152
      %p154 = scmp.ne.s32.totalorder %s143, %s146
      %p155 = scmp.eq.s32.totalorder %s39, 7
      %p156 = por %p154, %p155
      %p157 = scmp.ne.s32.totalorder %s146, %s147
      %p158 = scmp.eq.s32.totalorder %s39, 0
      %p159 = por %p157, %p158
      %p160 = scmp.ne.s32.totalorder %s146, %s147
      %p161 = scmp.eq.s32.totalorder %s40, 7
      %p162 = por %p160, %p161
      %p164 = scmp.ne.s32.totalorder %s147, %s163
      %p165 = scmp.eq.s32.totalorder %s40, 0
      %p166 = por %p164, %p165
      %s167 = ssub.s32 %s43, %s52
      %p168 = scmp.eq.s32.totalorder %s167, 0
      %s170 = sadd.s32 %s169, 1
      %s171 = scalar_select %p168, %s169, %s170
      %p174 = pneg %p168
      %p175 = scmp.eq.s32.totalorder %s34, 7
      %p176 = por %p174, %p175
      %p177 = scmp.ne.s32.totalorder %s169, %s172
      %p178 = scmp.eq.s32.totalorder %s34, 0
      %p179 = por %p177, %p178
      %p180 = scmp.ne.s32.totalorder %s169, %s172
      %p181 = scmp.eq.s32.totalorder %s39, 7
      %p182 = por %p180, %p181
      %p183 = scmp.ne.s32.totalorder %s172, %s173
      %p184 = scmp.eq.s32.totalorder %s39, 0
      %p185 = por %p183, %p184
      %p186 = scmp.ne.s32.totalorder %s172, %s173
      %p187 = scmp.eq.s32.totalorder %s40, 7
      %p188 = por %p186, %p187
      %p190 = scmp.ne.s32.totalorder %s173, %s189
      %p191 = scmp.eq.s32.totalorder %s40, 0
      %p192 = por %p190, %p191
      %s193 = ssub.s32 %s43, %s52
      %p194 = scmp.eq.s32.totalorder %s193, 0
      %s196 = sadd.s32 %s195, 1
      %s197 = scalar_select %p194, %s195, %s196
      %p200 = pneg %p194
      %p201 = scmp.eq.s32.totalorder %s34, 7
      %p202 = por %p200, %p201
      %p203 = scmp.ne.s32.totalorder %s195, %s198
      %p204 = scmp.eq.s32.totalorder %s34, 0
      %p205 = por %p203, %p204
      %p206 = scmp.ne.s32.totalorder %s195, %s198
      %p207 = scmp.eq.s32.totalorder %s39, 7
      %p208 = por %p206, %p207
      %p209 = scmp.ne.s32.totalorder %s198, %s199
      %p210 = scmp.eq.s32.totalorder %s39, 0
      %p211 = por %p209, %p210
      %p212 = scmp.ne.s32.totalorder %s198, %s199
      %p213 = scmp.eq.s32.totalorder %s40, 7
      %p214 = por %p212, %p213
      %p216 = scmp.ne.s32.totalorder %s199, %s215
      %p217 = scmp.eq.s32.totalorder %s40, 0
      %p218 = por %p216, %p217
      %s219 = ssub.s32 %s43, %s52
      %p220 = scmp.eq.s32.totalorder %s219, 0
      %s222 = sadd.s32 %s221, 1
      %s223 = scalar_select %p220, %s221, %s222
      %p226 = pneg %p220
      %p227 = scmp.eq.s32.totalorder %s34, 7
      %p228 = por %p226, %p227
      %p229 = scmp.ne.s32.totalorder %s221, %s224
      %p230 = scmp.eq.s32.totalorder %s34, 0
      %p231 = por %p229, %p230
      %p232 = scmp.ne.s32.totalorder %s221, %s224
      %p233 = scmp.eq.s32.totalorder %s39, 7
      %p234 = por %p232, %p233
      %p235 = scmp.ne.s32.totalorder %s224, %s225
      %p236 = scmp.eq.s32.totalorder %s39, 0
      %p237 = por %p235, %p236
      %p238 = scmp.ne.s32.totalorder %s224, %s225
      %p239 = scmp.eq.s32.totalorder %s40, 7
      %p240 = por %p238, %p239
      %p242 = scmp.ne.s32.totalorder %s225, %s241
      %p243 = scmp.eq.s32.totalorder %s40, 0
      %p244 = por %p242, %p243
      %s245 = ssub.s32 %s41, %s60
      %s246 = ssub.s32 %s43, %s52
      %s247 = sor.u32 %s245, %s246
      %s248 = ssub.s32 %s42, %s56
      %s249 = sor.u32 %s247, %s248
      %p250 = scmp.eq.s32.totalorder %s249, 0
      %s252 = sadd.s32 %s251, 1
      %s253 = scalar_select %p250, %s251, %s252
      %p256 = pneg %p250
      %p257 = scmp.eq.s32.totalorder %s34, 7
      %p258 = por %p256, %p257
      %p259 = scmp.ne.s32.totalorder %s251, %s254
      %p260 = scmp.eq.s32.totalorder %s34, 0
      %p261 = por %p259, %p260
      %p262 = scmp.ne.s32.totalorder %s251, %s254
      %p263 = scmp.eq.s32.totalorder %s39, 7
      %p264 = por %p262, %p263
      %p265 = scmp.ne.s32.totalorder %s254, %s255
      %p266 = scmp.eq.s32.totalorder %s39, 0
      %p267 = por %p265, %p266
      %p268 = scmp.ne.s32.totalorder %s254, %s255
      %p269 = scmp.eq.s32.totalorder %s40, 7
      %p270 = por %p268, %p269
      %p272 = scmp.ne.s32.totalorder %s255, %s271
      %p273 = scmp.eq.s32.totalorder %s40, 0
      %p274 = por %p272, %p273
      %s275 = ssub.s32 %s41, %s60
      %s276 = ssub.s32 %s43, %s52
      %s277 = sor.u32 %s275, %s276
      %s278 = ssub.s32 %s42, %s56
      %s279 = sor.u32 %s277, %s278
      %p280 = scmp.eq.s32.totalorder %s279, 0
      %s282 = sadd.s32 %s281, 1
      %s283 = scalar_select %p280, %s281, %s282
      %p286 = pneg %p280
      %p287 = scmp.eq.s32.totalorder %s34, 7
      %p288 = por %p286, %p287
      %p289 = scmp.ne.s32.totalorder %s281, %s284
      %p290 = scmp.eq.s32.totalorder %s34, 0
      %p291 = por %p289, %p290
      %p292 = scmp.ne.s32.totalorder %s281, %s284
      %p293 = scmp.eq.s32.totalorder %s39, 7
      %p294 = por %p292, %p293
      %p295 = scmp.ne.s32.totalorder %s284, %s285
      %p296 = scmp.eq.s32.totalorder %s39, 0
      %p297 = por %p295, %p296
      %p298 = scmp.ne.s32.totalorder %s284, %s285
      %p299 = scmp.eq.s32.totalorder %s40, 7
      %p300 = por %p298, %p299
      %p302 = scmp.ne.s32.totalorder %s285, %s301
      %p303 = scmp.eq.s32.totalorder %s40, 0
      %p304 = por %p302, %p303
      %s305 = ssub.s32 %s41, %s60
      %s306 = ssub.s32 %s43, %s52
      %s307 = sor.u32 %s305, %s306
      %s308 = ssub.s32 %s42, %s56
      %s309 = sor.u32 %s307, %s308
      %p310 = scmp.eq.s32.totalorder %s309, 0
      %s312 = sadd.s32 %s311, 1
      %s313 = scalar_select %p310, %s311, %s312
      %p316 = pneg %p310
      %p317 = scmp.eq.s32.totalorder %s34, 7
      %p318 = por %p316, %p317
      %p319 = scmp.ne.s32.totalorder %s311, %s314
      %p320 = scmp.eq.s32.totalorder %s34, 0
      %p321 = por %p319, %p320
      %p322 = scmp.ne.s32.totalorder %s311, %s314
      %p323 = scmp.eq.s32.totalorder %s39, 7
      %p324 = por %p322, %p323
      %p325 = scmp.ne.s32.totalorder %s314, %s315
      %p326 = scmp.eq.s32.totalorder %s39, 0
      %p327 = por %p325, %p326
      %p328 = scmp.ne.s32.totalorder %s314, %s315
      %p329 = scmp.eq.s32.totalorder %s40, 7
      %p330 = por %p328, %p329
      %p332 = scmp.ne.s32.totalorder %s315, %s331
      %p333 = scmp.eq.s32.totalorder %s40, 0
      %p334 = por %p332, %p333
      %p335 = scmp.le.s32.totalorder 1, %s34
      %p336 = scmp.lt.s32.totalorder %s34, 9
      %p337 = pnand %p335, %p336
      %p338 = pneg %p337
      // Predicated region
      $region9: #{encoder_layer_forward.5} parent=5 // pred_check
        _
      $region10: #{encoder_layer_forward.5} parent=5 // pred_check_branch
        %340 = sbr.rel (%p337) target = $region12
      $region11: #{encoder_layer_forward.5} parent=5 // pred_region
        %s341 = ssub.s32 %s34, 1
      $region12: #{encoder_layer_forward.5} parent=5 // pred_fallthru
        _
      %p342 = scmp.lt.s32.totalorder %s34, 8
      // Predicated region
      $region13: #{encoder_layer_forward.5} parent=5 // pred_check
        %p343 = pneg %p342
      $region14: #{encoder_layer_forward.5} parent=5 // pred_check_branch
        %345 = sbr.rel (%p343) target = $region16
      $region15: #{encoder_layer_forward.5} parent=5 // pred_region
        // Predicated region
        $region17: #{encoder_layer_forward.5} parent=15 // pred_check
          %p346 = pneg %p75
        $region18: #{encoder_layer_forward.5} parent=15 // pred_check_branch
          %348 = sbr.rel (%p346) target = $region20
        $region19: #{encoder_layer_forward.5} parent=15 // pred_region
          %s349 = sand.u32 %s65, 1
          %s350 = scalar_lea.sflag [#allocation3], %s349
          %s351 = sand.u32 %s65, 1
          %s352 = smul.addr %s351, 8
          %s353 = scalar_lea.vmem [#allocation2], %s352
          %s355 = ssub.s32 128, 128
          %356 = vsyncadd %s350, %s355
          %s357 = sadd.s32 %s42, %s41
          %s358 = smul.addr %s357, 128
          %s359 = scalar_lea.hbm %s0, %s358
          %s361 = sshll.u32 %s353, 4
          %s362 = int_to_ptr.vmem [resolvable:$true] %s361
          %364 = dma.hbm_to_vmem [thread:$0]  %s359, 128, %s362, %s350
        $region20: #{encoder_layer_forward.5} parent=15 // pred_fallthru
          _
        // Predicated region
        $region21: #{encoder_layer_forward.5} parent=15 // pred_check
          %p365 = pneg %p101
        $region22: #{encoder_layer_forward.5} parent=15 // pred_check_branch
          %367 = sbr.rel (%p365) target = $region24
        $region23: #{encoder_layer_forward.5} parent=15 // pred_region
          %s368 = sand.u32 %s34, 1
          %s369 = scalar_lea.sflag [#allocation6], %s368
          %s370 = sand.u32 %s91, 1
          %s371 = smul.addr %s370, 32
          %s372 = scalar_lea.vmem [#allocation5], %s371
          %s374 = ssub.s32 512, 512
          %375 = vsyncadd %s369, %s374
          %s376 = smul.addr %s43, 4
          %s377 = smul.addr %s376, 128
          %s378 = scalar_lea.hbm %s1, %s377
          %s379 = sshll.u32 %s372, 4
          %s380 = int_to_ptr.vmem [resolvable:$true] %s379
          %385 = dma.hbm_to_vmem [thread:$0]  %s378, 512, %s380, %s369, 128, 128, 8
        $region24: #{encoder_layer_forward.5} parent=15 // pred_fallthru
          _
        // Predicated region
        $region25: #{encoder_layer_forward.5} parent=15 // pred_check
          %p386 = pneg %p127
        $region26: #{encoder_layer_forward.5} parent=15 // pred_check_branch
          %388 = sbr.rel (%p386) target = $region28
        $region27: #{encoder_layer_forward.5} parent=15 // pred_region
          %s389 = sand.u32 %s34, 1
          %s390 = scalar_lea.sflag [#allocation6], %s389
          %s391 = sand.u32 %s117, 1
          %s392 = smul.addr %s391, 32
          %s393 = scalar_lea.vmem [#allocation7], %s392
          %s395 = ssub.s32 512, 512
          %396 = vsyncadd %s390, %s395
          %s397 = smul.addr %s43, 4
          %s398 = smul.addr %s397, 128
          %s399 = scalar_lea.hbm %s2, %s398
          %s400 = sshll.u32 %s393, 4
          %s401 = int_to_ptr.vmem [resolvable:$true] %s400
          %406 = dma.hbm_to_vmem [thread:$0]  %s399, 512, %s401, %s390, 128, 128, 8
        $region28: #{encoder_layer_forward.5} parent=15 // pred_fallthru
          _
        // Predicated region
        $region29: #{encoder_layer_forward.5} parent=15 // pred_check
          %p407 = pneg %p153
        $region30: #{encoder_layer_forward.5} parent=15 // pred_check_branch
          %409 = sbr.rel (%p407) target = $region32
        $region31: #{encoder_layer_forward.5} parent=15 // pred_region
          %s410 = sand.u32 %s34, 1
          %s411 = scalar_lea.sflag [#allocation9], %s410
          %s412 = sand.u32 %s143, 1
          %s413 = smul.addr %s412, 32
          %s414 = scalar_lea.vmem [#allocation8], %s413
          %s416 = ssub.s32 512, 512
          %417 = vsyncadd %s411, %s416
          %s418 = smul.addr %s43, 4
          %s419 = smul.addr %s418, 128
          %s420 = scalar_lea.hbm %s3, %s419
          %s421 = sshll.u32 %s414, 4
          %s422 = int_to_ptr.vmem [resolvable:$true] %s421
          %427 = dma.hbm_to_vmem [thread:$0]  %s420, 512, %s422, %s411, 128, 128, 8
        $region32: #{encoder_layer_forward.5} parent=15 // pred_fallthru
          _
        // Predicated region
        $region33: #{encoder_layer_forward.5} parent=15 // pred_check
          %p428 = pneg %p179
        $region34: #{encoder_layer_forward.5} parent=15 // pred_check_branch
          %430 = sbr.rel (%p428) target = $region36
        $region35: #{encoder_layer_forward.5} parent=15 // pred_region
          %s431 = sand.u32 %s34, 1
          %s432 = scalar_lea.sflag [#allocation9], %s431
          %s433 = sand.u32 %s169, 1
          %s434 = scalar_lea.vmem [#allocation10], %s433
          %s436 = ssub.s32 16, 16
          %437 = vsyncadd %s432, %s436
          %s438 = smul.addr %s43, 16
          %s439 = scalar_lea.hbm %s4, %s438
          %s441 = sshll.u32 %s434, 4
          %s442 = int_to_ptr.vmem [resolvable:$true] %s441
          %444 = dma.hbm_to_vmem [thread:$0]  %s439, 16, %s442, %s432
        $region36: #{encoder_layer_forward.5} parent=15 // pred_fallthru
          _
        // Predicated region
        $region37: #{encoder_layer_forward.5} parent=15 // pred_check
          %p445 = pneg %p205
        $region38: #{encoder_layer_forward.5} parent=15 // pred_check_branch
          %447 = sbr.rel (%p445) target = $region40
        $region39: #{encoder_layer_forward.5} parent=15 // pred_region
          %s448 = sand.u32 %s34, 1
          %s449 = scalar_lea.sflag [#allocation12], %s448
          %s450 = sand.u32 %s195, 1
          %s451 = scalar_lea.vmem [#allocation11], %s450
          %s453 = ssub.s32 16, 16
          %454 = vsyncadd %s449, %s453
          %s455 = smul.addr %s43, 16
          %s456 = scalar_lea.hbm %s5, %s455
          %s458 = sshll.u32 %s451, 4
          %s459 = int_to_ptr.vmem [resolvable:$true] %s458
          %461 = dma.hbm_to_vmem [thread:$0]  %s456, 16, %s459, %s449
        $region40: #{encoder_layer_forward.5} parent=15 // pred_fallthru
          _
        // Predicated region
        $region41: #{encoder_layer_forward.5} parent=15 // pred_check
          %p462 = pneg %p231
        $region42: #{encoder_layer_forward.5} parent=15 // pred_check_branch
          %464 = sbr.rel (%p462) target = $region44
        $region43: #{encoder_layer_forward.5} parent=15 // pred_region
          %s465 = sand.u32 %s34, 1
          %s466 = scalar_lea.sflag [#allocation12], %s465
          %s467 = sand.u32 %s221, 1
          %s468 = scalar_lea.vmem [#allocation13], %s467
          %s470 = ssub.s32 16, 16
          %471 = vsyncadd %s466, %s470
          %s472 = smul.addr %s43, 16
          %s473 = scalar_lea.hbm %s6, %s472
          %s475 = sshll.u32 %s468, 4
          %s476 = int_to_ptr.vmem [resolvable:$true] %s475
          %478 = dma.hbm_to_vmem [thread:$0]  %s473, 16, %s476, %s466
        $region44: #{encoder_layer_forward.5} parent=15 // pred_fallthru
          _
      $region16: #{encoder_layer_forward.5} parent=5 // pred_fallthru
        _
      %p479 = scmp.le.s32.totalorder 1, %s34
      %p480 = scmp.lt.s32.totalorder %s34, 9
      %p481 = pnand %p479, %p480
      %p482 = pneg %p481
      // Predicated region
      $region45: #{encoder_layer_forward.5} parent=5 // pred_check
        _
      $region46: #{encoder_layer_forward.5} parent=5 // pred_check_branch
        %484 = sbr.rel (%p481) target = $region48
      $region47: #{encoder_layer_forward.5} parent=5 // pred_region
        %s485 = ssub.s32 %s34, 1
        %s486 = sand.u32 %s68, 1
        %s487 = scalar_lea.sflag [#allocation3], %s486
        %s488 = sand.u32 %s68, 1
        %s489 = smul.addr %s488, 8
        %s490 = scalar_lea.vmem [#allocation2], %s489
        // Predicated region
        $region49: #{encoder_layer_forward.5} parent=47 // pred_check
          %p491 = pneg %p81
        $region50: #{encoder_layer_forward.5} parent=47 // pred_check_branch
          %493 = sbr.rel (%p491) target = $region52
        $region51: #{encoder_layer_forward.5} parent=47 // pred_region
          %494 = dma.done %s487, 128
        $region52: #{encoder_layer_forward.5} parent=47 // pred_fallthru
          _
        %s495 = sand.u32 %s39, 1
        %s496 = scalar_lea.sflag [#allocation6], %s495
        %s497 = sand.u32 %s94, 1
        %s498 = smul.addr %s497, 32
        %s499 = scalar_lea.vmem [#allocation5], %s498
        // Predicated region
        $region53: #{encoder_layer_forward.5} parent=47 // pred_check
          %p500 = pneg %p107
        $region54: #{encoder_layer_forward.5} parent=47 // pred_check_branch
          %502 = sbr.rel (%p500) target = $region56
        $region55: #{encoder_layer_forward.5} parent=47 // pred_region
          %503 = dma.done %s496, 512
        $region56: #{encoder_layer_forward.5} parent=47 // pred_fallthru
          _
        %s504 = sand.u32 %s39, 1
        %s505 = scalar_lea.sflag [#allocation6], %s504
        %s506 = sand.u32 %s120, 1
        %s507 = smul.addr %s506, 32
        %s508 = scalar_lea.vmem [#allocation7], %s507
        // Predicated region
        $region57: #{encoder_layer_forward.5} parent=47 // pred_check
          %p509 = pneg %p133
        $region58: #{encoder_layer_forward.5} parent=47 // pred_check_branch
          %511 = sbr.rel (%p509) target = $region60
        $region59: #{encoder_layer_forward.5} parent=47 // pred_region
          %512 = dma.done %s505, 512
        $region60: #{encoder_layer_forward.5} parent=47 // pred_fallthru
          _
        %s513 = sand.u32 %s39, 1
        %s514 = scalar_lea.sflag [#allocation9], %s513
        %s515 = sand.u32 %s146, 1
        %s516 = smul.addr %s515, 32
        %s517 = scalar_lea.vmem [#allocation8], %s516
        // Predicated region
        $region61: #{encoder_layer_forward.5} parent=47 // pred_check
          %p518 = pneg %p159
        $region62: #{encoder_layer_forward.5} parent=47 // pred_check_branch
          %520 = sbr.rel (%p518) target = $region64
        $region63: #{encoder_layer_forward.5} parent=47 // pred_region
          %521 = dma.done %s514, 512
        $region64: #{encoder_layer_forward.5} parent=47 // pred_fallthru
          _
        %s522 = sand.u32 %s39, 1
        %s523 = scalar_lea.sflag [#allocation9], %s522
        %s524 = sand.u32 %s172, 1
        %s525 = scalar_lea.vmem [#allocation10], %s524
        // Predicated region
        $region65: #{encoder_layer_forward.5} parent=47 // pred_check
          %p526 = pneg %p185
        $region66: #{encoder_layer_forward.5} parent=47 // pred_check_branch
          %528 = sbr.rel (%p526) target = $region68
        $region67: #{encoder_layer_forward.5} parent=47 // pred_region
          %529 = dma.done %s523, 16
        $region68: #{encoder_layer_forward.5} parent=47 // pred_fallthru
          _
        %s530 = sand.u32 %s39, 1
        %s531 = scalar_lea.sflag [#allocation12], %s530
        %s532 = sand.u32 %s198, 1
        %s533 = scalar_lea.vmem [#allocation11], %s532
        // Predicated region
        $region69: #{encoder_layer_forward.5} parent=47 // pred_check
          %p534 = pneg %p211
        $region70: #{encoder_layer_forward.5} parent=47 // pred_check_branch
          %536 = sbr.rel (%p534) target = $region72
        $region71: #{encoder_layer_forward.5} parent=47 // pred_region
          %537 = dma.done %s531, 16
        $region72: #{encoder_layer_forward.5} parent=47 // pred_fallthru
          _
        %s538 = sand.u32 %s39, 1
        %s539 = scalar_lea.sflag [#allocation12], %s538
        %s540 = sand.u32 %s224, 1
        %s541 = scalar_lea.vmem [#allocation13], %s540
        // Predicated region
        $region73: #{encoder_layer_forward.5} parent=47 // pred_check
          %p542 = pneg %p237
        $region74: #{encoder_layer_forward.5} parent=47 // pred_check_branch
          %544 = sbr.rel (%p542) target = $region76
        $region75: #{encoder_layer_forward.5} parent=47 // pred_region
          %545 = dma.done %s539, 16
        $region76: #{encoder_layer_forward.5} parent=47 // pred_fallthru
          _
        %s546 = sand.u32 %s68, 1
        %s547 = scalar_lea.sflag [#allocation3], %s546
        %s548 = sand.u32 %s68, 1
        %s549 = smul.addr %s548, 8
        %s550 = scalar_lea.vmem [#allocation2], %s549
        %p551 = pneg %p81
        %p552 = pneg %p78
        %s553 = sand.u32 %s39, 1
        %s554 = scalar_lea.sflag [#allocation6], %s553
        %s555 = sand.u32 %s94, 1
        %s556 = smul.addr %s555, 32
        %s557 = scalar_lea.vmem [#allocation5], %s556
        %p558 = pneg %p107
        %p559 = pneg %p104
        %s560 = sand.u32 %s39, 1
        %s561 = scalar_lea.sflag [#allocation6], %s560
        %s562 = sand.u32 %s120, 1
        %s563 = smul.addr %s562, 32
        %s564 = scalar_lea.vmem [#allocation7], %s563
        %p565 = pneg %p133
        %p566 = pneg %p130
        %s567 = sand.u32 %s39, 1
        %s568 = scalar_lea.sflag [#allocation9], %s567
        %s569 = sand.u32 %s146, 1
        %s570 = smul.addr %s569, 32
        %s571 = scalar_lea.vmem [#allocation8], %s570
        %p572 = pneg %p159
        %p573 = pneg %p156
        %s574 = sand.u32 %s39, 1
        %s575 = scalar_lea.sflag [#allocation9], %s574
        %s576 = sand.u32 %s172, 1
        %s577 = scalar_lea.vmem [#allocation10], %s576
        %p578 = pneg %p185
        %p579 = pneg %p182
        %s580 = sand.u32 %s39, 1
        %s581 = scalar_lea.sflag [#allocation12], %s580
        %s582 = sand.u32 %s198, 1
        %s583 = scalar_lea.vmem [#allocation11], %s582
        %p584 = pneg %p211
        %p585 = pneg %p208
        %s586 = sand.u32 %s39, 1
        %s587 = scalar_lea.sflag [#allocation12], %s586
        %s588 = sand.u32 %s224, 1
        %s589 = scalar_lea.vmem [#allocation13], %s588
        %p590 = pneg %p237
        %p591 = pneg %p234
        %p592 = pneg %p267
        %p593 = pneg %p264
        %s594 = sand.u32 %s254, 1
        %s595 = scalar_lea.sflag [#allocation4], %s594
        %s596 = sand.u32 %s254, 1
        %s597 = smul.addr %s596, 8
        %s598 = scalar_lea.vmem [#allocation14], %s597
        %p599 = pneg %p297
        %p600 = pneg %p294
        %s601 = sand.u32 %s39, 1
        %s602 = scalar_lea.sflag [#allocation16], %s601
        %s603 = sand.u32 %s284, 1
        %s604 = smul.addr %s603, 8
        %s605 = scalar_lea.vmem [#allocation15], %s604
        %p606 = pneg %p327
        %p607 = pneg %p324
        %s608 = sand.u32 %s39, 1
        %s609 = scalar_lea.sflag [#allocation16], %s608
        %s610 = sand.u32 %s314, 1
        %s611 = smul.addr %s610, 8
        %s612 = scalar_lea.vmem [#allocation17], %s611
        %v613 = vld [vmem:[%s490] sm:$0xff]
        %v614 = vld [vmem:[%s499] sm:$0xff]
        %v615 = vld [vmem:[%s499 + $0x8] sm:$0xff]
        %v616 = vld [vmem:[%s499 + $0x10] sm:$0xff]
        %v617 = vld [vmem:[%s499 + $0x18] sm:$0xff]
        %v618 = vld [vmem:[%s525] sm:$0x1]
        %v620 = vlaneseq
        %v621 = vshrl.u32 %v620, 7
        %v622 = vsub.s32 0, %v621
        %v623 = vrot.slane %v618, %v622
        %vm625 = vcmask 261120
        %v627 = vsel %vm625, %v613, 0
        %629 = vmatprep.subr.mxu0 0.0
        %630 = vmatpush1.msra.mxu0 %v614
        %631 = vmatprep.subr.mxu0 0.0
        %632 = vmatpush1.msra.mxu0 %v615
        %633 = vmatprep.subr.mxu0 0.0
        %634 = vmatpush1.msra.mxu0 %v616
        %635 = vmatprep.subr.mxu0 0.0
        %636 = vmatpush1.msra.mxu0 %v617
        %637 = vmatprep.subr.mxu0 0.0
        %638 = vmatpush1.msra.mxu0 0.0
        %639 = vmatprep.subr.mxu0 0.0
        %640 = vmatpush1.msra.mxu0 0.0
        %641 = vmatprep.subr.mxu0 0.0
        %642 = vmatpush1.msra.mxu0 0.0
        %643 = vmatprep.subr.mxu0 0.0
        %644 = vmatpush1.msra.mxu0 0.0
        %645 = vmatprep.subr.mxu0 0.0
        %646 = vmatpush1.msra.mxu0 0.0
        %647 = vmatprep.subr.mxu0 0.0
        %648 = vmatpush1.msra.mxu0 0.0
        %649 = vmatprep.subr.mxu0 0.0
        %650 = vmatpush1.msra.mxu0 0.0
        %651 = vmatprep.subr.mxu0 0.0
        %652 = vmatpush1.msra.mxu0 0.0
        %653 = vmatprep.subr.mxu0 0.0
        %654 = vmatpush1.msra.mxu0 0.0
        %655 = vmatprep.subr.mxu0 0.0
        %656 = vmatpush1.msra.mxu0 0.0
        %657 = vmatprep.subr.mxu0 0.0
        %658 = vmatpush1.msra.mxu0 0.0
        %659 = vmatprep.subr.mxu0 0.0
        %660 = vmatpush1.msra.mxu0 0.0
        %661 = vmatprep.subr.mxu0 0.0
        %662 = vmatpush1.msra.mxu0 0.0
        %663 = vmatprep.subr.mxu0 0.0
        %664 = vmatpush1.msra.mxu0 0.0
        %665 = vmatprep.subr.mxu0 0.0
        %666 = vmatpush1.msra.mxu0 0.0
        %667 = vmatprep.subr.mxu0 0.0
        %668 = vmatpush1.msra.mxu0 0.0
        %669 = vmatprep.subr.mxu0 0.0
        %670 = vmatpush1.msra.mxu0 0.0
        %671 = vmatprep.subr.mxu0 0.0
        %672 = vmatpush1.msra.mxu0 0.0
        %673 = vmatprep.subr.mxu0 0.0
        %674 = vmatpush1.msra.mxu0 0.0
        %675 = vmatprep.subr.mxu0 0.0
        %676 = vmatpush1.msra.mxu0 0.0
        %677 = vmatprep.subr.mxu0 0.0
        %678 = vmatpush1.msra.mxu0 0.0
        %679 = vmatprep.subr.mxu0 0.0
        %680 = vmatpush1.msra.mxu0 0.0
        %681 = vmatprep.subr.mxu0 0.0
        %682 = vmatpush1.msra.mxu0 0.0
        %683 = vmatprep.subr.mxu0 0.0
        %684 = vmatpush1.msra.mxu0 0.0
        %685 = vmatprep.subr.mxu0 0.0
        %686 = vmatpush1.msra.mxu0 0.0
        %687 = vmatprep.subr.mxu0 0.0
        %688 = vmatpush1.msra.mxu0 0.0
        %689 = vmatprep.subr.mxu0 0.0
        %690 = vmatpush1.msra.mxu0 0.0
        %691 = vmatprep.subr.mxu0 0.0
        %692 = vmatpush1.msra.mxu0 0.0
        %693 = vmatprep.mubr.f32.mxu0 0.0
        %694 = vmatmul.mubr.f32.gmra.mrb[0].mxu0 %v627
        %v695 = vpop.f32.mrb[0].mxu0
        %v696 = vadd.f32 %v623, %v695
        %v697 = vpop.f32.mrb[0].mxu0
        %698 = vdwg.mxu0
        %vm699 = vcmask 64512
        %700 = vst.msk [vmem:[%s598] sm:$0xff] %vm699, %v696
        %v701 = vld [vmem:[%s508] sm:$0xff]
        %v702 = vld [vmem:[%s508 + $0x8] sm:$0xff]
        %v703 = vld [vmem:[%s508 + $0x10] sm:$0xff]
        %v704 = vld [vmem:[%s508 + $0x18] sm:$0xff]
        %v705 = vld [vmem:[%s533] sm:$0x1]
        %v707 = vlaneseq
        %v708 = vshrl.u32 %v707, 7
        %v709 = vsub.s32 0, %v708
        %v710 = vrot.slane %v705, %v709
        %712 = vmatprep.subr.mxu0 0.0
        %713 = vmatpush1.msra.mxu0 %v701
        %714 = vmatprep.subr.mxu0 0.0
        %715 = vmatpush1.msra.mxu0 %v702
        %716 = vmatprep.subr.mxu0 0.0
        %717 = vmatpush1.msra.mxu0 %v703
        %718 = vmatprep.subr.mxu0 0.0
        %719 = vmatpush1.msra.mxu0 %v704
        %720 = vmatprep.subr.mxu0 0.0
        %721 = vmatpush1.msra.mxu0 0.0
        %722 = vmatprep.subr.mxu0 0.0
        %723 = vmatpush1.msra.mxu0 0.0
        %724 = vmatprep.subr.mxu0 0.0
        %725 = vmatpush1.msra.mxu0 0.0
        %726 = vmatprep.subr.mxu0 0.0
        %727 = vmatpush1.msra.mxu0 0.0
        %728 = vmatprep.subr.mxu0 0.0
        %729 = vmatpush1.msra.mxu0 0.0
        %730 = vmatprep.subr.mxu0 0.0
        %731 = vmatpush1.msra.mxu0 0.0
        %732 = vmatprep.subr.mxu0 0.0
        %733 = vmatpush1.msra.mxu0 0.0
        %734 = vmatprep.subr.mxu0 0.0
        %735 = vmatpush1.msra.mxu0 0.0
        %736 = vmatprep.subr.mxu0 0.0
        %737 = vmatpush1.msra.mxu0 0.0
        %738 = vmatprep.subr.mxu0 0.0
        %739 = vmatpush1.msra.mxu0 0.0
        %740 = vmatprep.subr.mxu0 0.0
        %741 = vmatpush1.msra.mxu0 0.0
        %742 = vmatprep.subr.mxu0 0.0
        %743 = vmatpush1.msra.mxu0 0.0
        %744 = vmatprep.subr.mxu0 0.0
        %745 = vmatpush1.msra.mxu0 0.0
        %746 = vmatprep.subr.mxu0 0.0
        %747 = vmatpush1.msra.mxu0 0.0
        %748 = vmatprep.subr.mxu0 0.0
        %749 = vmatpush1.msra.mxu0 0.0
        %750 = vmatprep.subr.mxu0 0.0
        %751 = vmatpush1.msra.mxu0 0.0
        %752 = vmatprep.subr.mxu0 0.0
        %753 = vmatpush1.msra.mxu0 0.0
        %754 = vmatprep.subr.mxu0 0.0
        %755 = vmatpush1.msra.mxu0 0.0
        %756 = vmatprep.subr.mxu0 0.0
        %757 = vmatpush1.msra.mxu0 0.0
        %758 = vmatprep.subr.mxu0 0.0
        %759 = vmatpush1.msra.mxu0 0.0
        %760 = vmatprep.subr.mxu0 0.0
        %761 = vmatpush1.msra.mxu0 0.0
        %762 = vmatprep.subr.mxu0 0.0
        %763 = vmatpush1.msra.mxu0 0.0
        %764 = vmatprep.subr.mxu0 0.0
        %765 = vmatpush1.msra.mxu0 0.0
        %766 = vmatprep.subr.mxu0 0.0
        %767 = vmatpush1.msra.mxu0 0.0
        %768 = vmatprep.subr.mxu0 0.0
        %769 = vmatpush1.msra.mxu0 0.0
        %770 = vmatprep.subr.mxu0 0.0
        %771 = vmatpush1.msra.mxu0 0.0
        %772 = vmatprep.subr.mxu0 0.0
        %773 = vmatpush1.msra.mxu0 0.0
        %774 = vmatprep.subr.mxu0 0.0
        %775 = vmatpush1.msra.mxu0 0.0
        %776 = vmatprep.mubr.f32.mxu0 0.0
        %777 = vmatmul.mubr.f32.gmra.mrb[0].mxu0 %v627
        %v778 = vpop.f32.mrb[0].mxu0
        %v779 = vadd.f32 %v710, %v778
        %v780 = vpop.f32.mrb[0].mxu0
        %781 = vdwg.mxu0
        %782 = vst.msk [vmem:[%s605] sm:$0xff] %vm699, %v779
        %v783 = vld [vmem:[%s517] sm:$0xff]
        %v784 = vld [vmem:[%s517 + $0x8] sm:$0xff]
        %v785 = vld [vmem:[%s517 + $0x10] sm:$0xff]
        %v786 = vld [vmem:[%s517 + $0x18] sm:$0xff]
        %v787 = vld [vmem:[%s541] sm:$0x1]
        %v789 = vlaneseq
        %v790 = vshrl.u32 %v789, 7
        %v791 = vsub.s32 0, %v790
        %v792 = vrot.slane %v787, %v791
        %794 = vmatprep.subr.mxu0 0.0
        %795 = vmatpush1.msra.mxu0 %v783
        %796 = vmatprep.subr.mxu0 0.0
        %797 = vmatpush1.msra.mxu0 %v784
        %798 = vmatprep.subr.mxu0 0.0
        %799 = vmatpush1.msra.mxu0 %v785
        %800 = vmatprep.subr.mxu0 0.0
        %801 = vmatpush1.msra.mxu0 %v786
        %802 = vmatprep.subr.mxu0 0.0
        %803 = vmatpush1.msra.mxu0 0.0
        %804 = vmatprep.subr.mxu0 0.0
        %805 = vmatpush1.msra.mxu0 0.0
        %806 = vmatprep.subr.mxu0 0.0
        %807 = vmatpush1.msra.mxu0 0.0
        %808 = vmatprep.subr.mxu0 0.0
        %809 = vmatpush1.msra.mxu0 0.0
        %810 = vmatprep.subr.mxu0 0.0
        %811 = vmatpush1.msra.mxu0 0.0
        %812 = vmatprep.subr.mxu0 0.0
        %813 = vmatpush1.msra.mxu0 0.0
        %814 = vmatprep.subr.mxu0 0.0
        %815 = vmatpush1.msra.mxu0 0.0
        %816 = vmatprep.subr.mxu0 0.0
        %817 = vmatpush1.msra.mxu0 0.0
        %818 = vmatprep.subr.mxu0 0.0
        %819 = vmatpush1.msra.mxu0 0.0
        %820 = vmatprep.subr.mxu0 0.0
        %821 = vmatpush1.msra.mxu0 0.0
        %822 = vmatprep.subr.mxu0 0.0
        %823 = vmatpush1.msra.mxu0 0.0
        %824 = vmatprep.subr.mxu0 0.0
        %825 = vmatpush1.msra.mxu0 0.0
        %826 = vmatprep.subr.mxu0 0.0
        %827 = vmatpush1.msra.mxu0 0.0
        %828 = vmatprep.subr.mxu0 0.0
        %829 = vmatpush1.msra.mxu0 0.0
        %830 = vmatprep.subr.mxu0 0.0
        %831 = vmatpush1.msra.mxu0 0.0
        %832 = vmatprep.subr.mxu0 0.0
        %833 = vmatpush1.msra.mxu0 0.0
        %834 = vmatprep.subr.mxu0 0.0
        %835 = vmatpush1.msra.mxu0 0.0
        %836 = vmatprep.subr.mxu0 0.0
        %837 = vmatpush1.msra.mxu0 0.0
        %838 = vmatprep.subr.mxu0 0.0
        %839 = vmatpush1.msra.mxu0 0.0
        %840 = vmatprep.subr.mxu0 0.0
        %841 = vmatpush1.msra.mxu0 0.0
        %842 = vmatprep.subr.mxu0 0.0
        %843 = vmatpush1.msra.mxu0 0.0
        %844 = vmatprep.subr.mxu0 0.0
        %845 = vmatpush1.msra.mxu0 0.0
        %846 = vmatprep.subr.mxu0 0.0
        %847 = vmatpush1.msra.mxu0 0.0
        %848 = vmatprep.subr.mxu0 0.0
        %849 = vmatpush1.msra.mxu0 0.0
        %850 = vmatprep.subr.mxu0 0.0
        %851 = vmatpush1.msra.mxu0 0.0
        %852 = vmatprep.subr.mxu0 0.0
        %853 = vmatpush1.msra.mxu0 0.0
        %854 = vmatprep.subr.mxu0 0.0
        %855 = vmatpush1.msra.mxu0 0.0
        %856 = vmatprep.subr.mxu0 0.0
        %857 = vmatpush1.msra.mxu0 0.0
        %858 = vmatprep.mubr.f32.mxu0 0.0
        %859 = vmatmul.mubr.f32.gmra.mrb[0].mxu0 %v627
        %v860 = vpop.f32.mrb[0].mxu0
        %v861 = vadd.f32 %v792, %v860
        %v862 = vpop.f32.mrb[0].mxu0
        %863 = vdwg.mxu0
        %864 = vst.msk [vmem:[%s612] sm:$0xff] %vm699, %v861
        %s865 = sand.u32 %s254, 1
        %s866 = scalar_lea.sflag [#allocation4], %s865
        %s867 = sand.u32 %s254, 1
        %s868 = smul.addr %s867, 8
        %s869 = scalar_lea.vmem [#allocation14], %s868
        %s870 = sand.u32 %s39, 1
        %s871 = scalar_lea.sflag [#allocation16], %s870
        %s872 = sand.u32 %s284, 1
        %s873 = smul.addr %s872, 8
        %s874 = scalar_lea.vmem [#allocation15], %s873
        %s875 = sand.u32 %s39, 1
        %s876 = scalar_lea.sflag [#allocation16], %s875
        %s877 = sand.u32 %s314, 1
        %s878 = smul.addr %s877, 8
        %s879 = scalar_lea.vmem [#allocation17], %s878
        // Predicated region
        $region77: #{encoder_layer_forward.5} parent=47 // pred_check
          %p880 = pneg %p264
        $region78: #{encoder_layer_forward.5} parent=47 // pred_check_branch
          %882 = sbr.rel (%p880) target = $region80
        $region79: #{encoder_layer_forward.5} parent=47 // pred_region
          %s884 = ssub.s32 128, 128
          %885 = vsyncadd %s866, %s884
          %s886 = sadd.s32 %s45, %s46
          %s887 = smul.addr %s44, 4
          %s888 = sadd.s32 %s886, %s887
          %s889 = smul.addr %s888, 128
          %s890 = scalar_lea.hbm %s7, %s889
          %s892 = sshll.u32 %s869, 4
          %s893 = int_to_ptr.vmem [resolvable:$true] %s892
          %895 = dma.vmem_to_hbm [thread:$0]  %s893, 128, %s890, %s866
        $region80: #{encoder_layer_forward.5} parent=47 // pred_fallthru
          _
        // Predicated region
        $region81: #{encoder_layer_forward.5} parent=47 // pred_check
          %p896 = pneg %p294
        $region82: #{encoder_layer_forward.5} parent=47 // pred_check_branch
          %898 = sbr.rel (%p896) target = $region84
        $region83: #{encoder_layer_forward.5} parent=47 // pred_region
          %s900 = ssub.s32 128, 128
          %901 = vsyncadd %s871, %s900
          %s902 = sadd.s32 %s45, %s46
          %s903 = smul.addr %s44, 4
          %s904 = sadd.s32 %s902, %s903
          %s905 = smul.addr %s904, 128
          %s906 = scalar_lea.hbm %s8, %s905
          %s908 = sshll.u32 %s874, 4
          %s909 = int_to_ptr.vmem [resolvable:$true] %s908
          %911 = dma.vmem_to_hbm [thread:$0]  %s909, 128, %s906, %s871
        $region84: #{encoder_layer_forward.5} parent=47 // pred_fallthru
          _
        // Predicated region
        $region85: #{encoder_layer_forward.5} parent=47 // pred_check
          %p912 = pneg %p324
        $region86: #{encoder_layer_forward.5} parent=47 // pred_check_branch
          %914 = sbr.rel (%p912) target = $region88
        $region87: #{encoder_layer_forward.5} parent=47 // pred_region
          %s916 = ssub.s32 128, 128
          %917 = vsyncadd %s876, %s916
          %s918 = sadd.s32 %s45, %s46
          %s919 = smul.addr %s44, 4
          %s920 = sadd.s32 %s918, %s919
          %s921 = smul.addr %s920, 128
          %s922 = scalar_lea.hbm %s9, %s921
          %s924 = sshll.u32 %s879, 4
          %s925 = int_to_ptr.vmem [resolvable:$true] %s924
          %927 = dma.vmem_to_hbm [thread:$0]  %s925, 128, %s922, %s876
        $region88: #{encoder_layer_forward.5} parent=47 // pred_fallthru
          _
      $region48: #{encoder_layer_forward.5} parent=5 // pred_fallthru
        _
      %p928 = scmp.le.s32.totalorder 2, %s34
      // Predicated region
      $region89: #{encoder_layer_forward.5} parent=5 // pred_check
        %p929 = pneg %p928
      $region90: #{encoder_layer_forward.5} parent=5 // pred_check_branch
        %931 = sbr.rel (%p929) target = $region92
      $region91: #{encoder_layer_forward.5} parent=5 // pred_region
        %s932 = ssub.s32 %s34, 2
        // Predicated region
        $region93: #{encoder_layer_forward.5} parent=91 // pred_check
          %p933 = pneg %p270
        $region94: #{encoder_layer_forward.5} parent=91 // pred_check_branch
          %935 = sbr.rel (%p933) target = $region96
        $region95: #{encoder_layer_forward.5} parent=91 // pred_region
          %s936 = sand.u32 %s255, 1
          %s937 = scalar_lea.sflag [#allocation4], %s936
          %s938 = sand.u32 %s255, 1
          %s939 = smul.addr %s938, 8
          %s940 = scalar_lea.vmem [#allocation14], %s939
          %941 = dma.done %s937, 128
        $region96: #{encoder_layer_forward.5} parent=91 // pred_fallthru
          _
        // Predicated region
        $region97: #{encoder_layer_forward.5} parent=91 // pred_check
          %p942 = pneg %p300
        $region98: #{encoder_layer_forward.5} parent=91 // pred_check_branch
          %944 = sbr.rel (%p942) target = $region100
        $region99: #{encoder_layer_forward.5} parent=91 // pred_region
          %s945 = sand.u32 %s40, 1
          %s946 = scalar_lea.sflag [#allocation16], %s945
          %s947 = sand.u32 %s285, 1
          %s948 = smul.addr %s947, 8
          %s949 = scalar_lea.vmem [#allocation15], %s948
          %950 = dma.done %s946, 128
        $region100: #{encoder_layer_forward.5} parent=91 // pred_fallthru
          _
        // Predicated region
        $region101: #{encoder_layer_forward.5} parent=91 // pred_check
          %p951 = pneg %p330
        $region102: #{encoder_layer_forward.5} parent=91 // pred_check_branch
          %953 = sbr.rel (%p951) target = $region104
        $region103: #{encoder_layer_forward.5} parent=91 // pred_region
          %s954 = sand.u32 %s40, 1
          %s955 = scalar_lea.sflag [#allocation16], %s954
          %s956 = sand.u32 %s315, 1
          %s957 = smul.addr %s956, 8
          %s958 = scalar_lea.vmem [#allocation17], %s957
          %959 = dma.done %s955, 128
        $region104: #{encoder_layer_forward.5} parent=91 // pred_fallthru
          _
      $region92: #{encoder_layer_forward.5} parent=5 // pred_fallthru
        _
    $region6: #{encoder_layer_forward.5} parent=1 // loop_footer
      %s38 = sadd.s32 1, %s34
    $region7: #{encoder_layer_forward.5} parent=1 // loop_footer_branch
      %33 = sbr.rel target = $region3
    $region8: #{encoder_layer_forward.5} parent=1 // loop_exit
      _
    %960 = vsyncpa [#allocation3], 1
    %s961 = scalar_lea.sflag [#allocation3], 1
    %962 = vsyncpa %s961, 1
    %963 = vsyncpa [#allocation6], 1
    %s964 = scalar_lea.sflag [#allocation6], 1
    %965 = vsyncpa %s964, 1
    %966 = vsyncpa [#allocation9], 1
    %s967 = scalar_lea.sflag [#allocation9], 1
    %968 = vsyncpa %s967, 1
    %969 = vsyncpa [#allocation12], 1
    %s970 = scalar_lea.sflag [#allocation12], 1
    %971 = vsyncpa %s970, 1
    %972 = vsyncpa [#allocation4], 1
    %s973 = scalar_lea.sflag [#allocation4], 1
    %974 = vsyncpa %s973, 1
    %975 = vsyncpa [#allocation16], 1
    %s976 = scalar_lea.sflag [#allocation16], 1
    %977 = vsyncpa %s976, 1

// kernel: encoder_layer_forward.8
$region0: #{encoder_layer_forward.8}
  #allocation0 [shape = 'u32[]', space=smem, size = 0x4, offset = 0x4, fixed_abs, tag = 'smem constant byte address 0x4 - core index']
  #allocation1 [shape = 'u32[144,128]{1,0:T(1,128)}', space=vmem, size = 0x12000, scoped, tag = 'internal scratch']
  #allocation2 [shape = 'f32[16,64]{1,0:T(8,128)}', space=vmem, size = 0x2000, scoped, tag = 'scratch operand']
  %s0 = inlined_call_operand.hbm [shape: f32[16,32], index: 0, kind: input, shape index: {}]
  %s1 = inlined_call_operand.hbm [shape: f32[32,64], index: 1, kind: input, shape index: {}]
  %s2 = inlined_call_operand.hbm [shape: f32[1,64], index: 2, kind: input, shape index: {}]
  %s3 = inlined_call_operand.hbm [shape: f32[16,64], index: 3, kind: output, shape index: {}]
  %s4 = sld [smem:[#allocation0]]
  $region42: #{encoder_layer_forward.8} parent=0
    _
  %s6 = ssub.s32 1, %s4
  %s7 = scalar_select 0, %s6, %s4
  $region1: #{encoder_layer_forward.8} parent=0
    #allocation3 [shape = 'u8[8192]{0}', space=vmem, size = 0x2000, scoped, tag = 'input window, operand 0, single buffered']
    #allocation4 [shape = 's32[1]{0}', space=sflag, size = 0x4, scoped, tag = 'scoped memory for encoder_layer_forward.8']
    #allocation5 [shape = 's32[1]{0}', space=sflag, size = 0x4, scoped, tag = 'scoped memory for encoder_layer_forward.8']
    #allocation6 [shape = 'u8[16384]{0}', space=vmem, size = 0x4000, scoped, tag = 'input window, operand 1, single buffered']
    #allocation7 [shape = 's32[1]{0}', space=sflag, size = 0x4, scoped, tag = 'scoped memory for encoder_layer_forward.8']
    #allocation8 [shape = 'u8[512]{0}', space=vmem, size = 0x400, scoped, tag = 'input window, operand 2, single buffered']
    #allocation9 [shape = 'u8[8192]{0}', space=vmem, size = 0x2000, scoped, tag = 'output window, operand 0, single buffered']
    %8 = vsyncpa [#allocation4], 0
    %9 = vsyncpa [#allocation7], 0
    %10 = vsyncpa [#allocation5], 0
    // Predicated region
    $region2: #{encoder_layer_forward.8} parent=1 // pred_check
      _
    $region3: #{encoder_layer_forward.8} parent=1 // pred_check_branch
      %12 = sbr.rel (0) target = $region5
    $region4: #{encoder_layer_forward.8} parent=1 // pred_region
      %s14 = ssub.s32 256, 256
      %15 = vsyncadd [#allocation4], %s14
      %s16 = sshll.u32 [#allocation3], 4
      %s17 = int_to_ptr.vmem [resolvable:$true] %s16
      %22 = dma.hbm_to_vmem [thread:$0]  %s0, 256, %s17, [#allocation4], 128, 128, 8
    $region5: #{encoder_layer_forward.8} parent=1 // pred_fallthru
      _
    // Predicated region
    $region6: #{encoder_layer_forward.8} parent=1 // pred_check
      _
    $region7: #{encoder_layer_forward.8} parent=1 // pred_check_branch
      %24 = sbr.rel (0) target = $region9
    $region8: #{encoder_layer_forward.8} parent=1 // pred_region
      %s26 = ssub.s32 512, 512
      %27 = vsyncadd [#allocation7], %s26
      %s28 = sshll.u32 [#allocation6], 4
      %s29 = int_to_ptr.vmem [resolvable:$true] %s28
      %34 = dma.hbm_to_vmem [thread:$0]  %s1, 512, %s29, [#allocation7], 128, 128, 8
    $region9: #{encoder_layer_forward.8} parent=1 // pred_fallthru
      _
    // Predicated region
    $region10: #{encoder_layer_forward.8} parent=1 // pred_check
      _
    $region11: #{encoder_layer_forward.8} parent=1 // pred_check_branch
      %36 = sbr.rel (0) target = $region13
    $region12: #{encoder_layer_forward.8} parent=1 // pred_region
      %s38 = ssub.s32 16, 16
      %39 = vsyncadd [#allocation7], %s38
      %s41 = sshll.u32 [#allocation8], 4
      %s42 = int_to_ptr.vmem [resolvable:$true] %s41
      %44 = dma.hbm_to_vmem [thread:$0]  %s2, 16, %s42, [#allocation7]
    $region13: #{encoder_layer_forward.8} parent=1 // pred_fallthru
      _
    // Predicated region
    $region14: #{encoder_layer_forward.8} parent=1 // pred_check
      _
    $region15: #{encoder_layer_forward.8} parent=1 // pred_check_branch
      %46 = sbr.rel (0) target = $region17
    $region16: #{encoder_layer_forward.8} parent=1 // pred_region
      %47 = dma.done [#allocation4], 256
    $region17: #{encoder_layer_forward.8} parent=1 // pred_fallthru
      _
    // Predicated region
    $region18: #{encoder_layer_forward.8} parent=1 // pred_check
      _
    $region19: #{encoder_layer_forward.8} parent=1 // pred_check_branch
      %49 = sbr.rel (0) target = $region21
    $region20: #{encoder_layer_forward.8} parent=1 // pred_region
      %50 = dma.done [#allocation7], 512
    $region21: #{encoder_layer_forward.8} parent=1 // pred_fallthru
      _
    // Predicated region
    $region22: #{encoder_layer_forward.8} parent=1 // pred_check
      _
    $region23: #{encoder_layer_forward.8} parent=1 // pred_check_branch
      %52 = sbr.rel (0) target = $region25
    $region24: #{encoder_layer_forward.8} parent=1 // pred_region
      %53 = dma.done [#allocation7], 16
    $region25: #{encoder_layer_forward.8} parent=1 // pred_fallthru
      _
    %p54 = scmp.eq.s32.totalorder 0, 0
    // Predicated region
    $region26: #{encoder_layer_forward.8} parent=1 // pred_check
      %p55 = pneg %p54
    $region27: #{encoder_layer_forward.8} parent=1 // pred_check_branch
      %57 = sbr.rel (%p55) target = $region29
    $region28: #{encoder_layer_forward.8} parent=1 // pred_region
      %vm58 = vcmask 523264
      %59 = vst.msk [vmem:[#allocation2] sm:$0xff] %vm58, 0.0
      %60 = vst.msk [vmem:[#allocation2 + $0x8] sm:$0xff] %vm58, 0.0
    $region29: #{encoder_layer_forward.8} parent=1 // pred_fallthru
      _
    %v61 = vld [vmem:[#allocation2] sm:$0xff]
    %v62 = vld [vmem:[#allocation2 + $0x8] sm:$0xff]
    %v63 = vld [vmem:[#allocation3] sm:$0xff]
    %v64 = vld [vmem:[#allocation3 + $0x8] sm:$0xff]
    %v65 = vld [vmem:[#allocation6] sm:$0xff]
    %v66 = vld [vmem:[#allocation6 + $0x8] sm:$0xff]
    %v67 = vld [vmem:[#allocation6 + $0x10] sm:$0xff]
    %v68 = vld [vmem:[#allocation6 + $0x18] sm:$0xff]
    %vm69 = vcmask 261120
    %v71 = vsel %vm69, %v63, 0
    %v74 = vsel %vm69, %v64, 0
    %76 = vmatprep.subr.mxu0 0.0
    %77 = vmatpush1.msra.mxu0 %v65
    %78 = vmatprep.subr.mxu0 0.0
    %79 = vmatpush1.msra.mxu0 %v66
    %80 = vmatprep.subr.mxu0 0.0
    %81 = vmatpush1.msra.mxu0 %v67
    %82 = vmatprep.subr.mxu0 0.0
    %83 = vmatpush1.msra.mxu0 %v68
    %84 = vmatprep.subr.mxu0 0.0
    %85 = vmatpush1.msra.mxu0 0.0
    %86 = vmatprep.subr.mxu0 0.0
    %87 = vmatpush1.msra.mxu0 0.0
    %88 = vmatprep.subr.mxu0 0.0
    %89 = vmatpush1.msra.mxu0 0.0
    %90 = vmatprep.subr.mxu0 0.0
    %91 = vmatpush1.msra.mxu0 0.0
    %92 = vmatprep.subr.mxu0 0.0
    %93 = vmatpush1.msra.mxu0 0.0
    %94 = vmatprep.subr.mxu0 0.0
    %95 = vmatpush1.msra.mxu0 0.0
    %96 = vmatprep.subr.mxu0 0.0
    %97 = vmatpush1.msra.mxu0 0.0
    %98 = vmatprep.subr.mxu0 0.0
    %99 = vmatpush1.msra.mxu0 0.0
    %100 = vmatprep.subr.mxu0 0.0
    %101 = vmatpush1.msra.mxu0 0.0
    %102 = vmatprep.subr.mxu0 0.0
    %103 = vmatpush1.msra.mxu0 0.0
    %104 = vmatprep.subr.mxu0 0.0
    %105 = vmatpush1.msra.mxu0 0.0
    %106 = vmatprep.subr.mxu0 0.0
    %107 = vmatpush1.msra.mxu0 0.0
    %108 = vmatprep.subr.mxu0 0.0
    %109 = vmatpush1.msra.mxu0 0.0
    %110 = vmatprep.subr.mxu0 0.0
    %111 = vmatpush1.msra.mxu0 0.0
    %112 = vmatprep.subr.mxu0 0.0
    %113 = vmatpush1.msra.mxu0 0.0
    %114 = vmatprep.subr.mxu0 0.0
    %115 = vmatpush1.msra.mxu0 0.0
    %116 = vmatprep.subr.mxu0 0.0
    %117 = vmatpush1.msra.mxu0 0.0
    %118 = vmatprep.subr.mxu0 0.0
    %119 = vmatpush1.msra.mxu0 0.0
    %120 = vmatprep.subr.mxu0 0.0
    %121 = vmatpush1.msra.mxu0 0.0
    %122 = vmatprep.subr.mxu0 0.0
    %123 = vmatpush1.msra.mxu0 0.0
    %124 = vmatprep.subr.mxu0 0.0
    %125 = vmatpush1.msra.mxu0 0.0
    %126 = vmatprep.subr.mxu0 0.0
    %127 = vmatpush1.msra.mxu0 0.0
    %128 = vmatprep.subr.mxu0 0.0
    %129 = vmatpush1.msra.mxu0 0.0
    %130 = vmatprep.subr.mxu0 0.0
    %131 = vmatpush1.msra.mxu0 0.0
    %132 = vmatprep.subr.mxu0 0.0
    %133 = vmatpush1.msra.mxu0 0.0
    %134 = vmatprep.subr.mxu0 0.0
    %135 = vmatpush1.msra.mxu0 0.0
    %136 = vmatprep.subr.mxu0 0.0
    %137 = vmatpush1.msra.mxu0 0.0
    %138 = vmatprep.subr.mxu0 0.0
    %139 = vmatpush1.msra.mxu0 0.0
    %140 = vmatprep.mubr.f32.mxu0 0.0
    %141 = vmatmul.mubr.f32.gmra.mrb[0].mxu0 %v71
    %v142 = vpop.f32.mrb[0].mxu0
    %v143 = vadd.f32 0.0, %v142
    %v144 = vpop.f32.mrb[0].mxu0
    %145 = vmatprep.mubr.f32.mxu0 0.0
    %146 = vmatmul.mubr.f32.gmra.mrb[0].mxu0 %v74
    %v147 = vpop.f32.mrb[0].mxu0
    %v148 = vadd.f32 0.0, %v147
    %v149 = vpop.f32.mrb[0].mxu0
    %150 = vdwg.mxu0
    %v151 = vadd.f32 %v61, %v143
    %v152 = vadd.f32 %v62, %v148
    %vm153 = vcmask 523264
    %154 = vst.msk [vmem:[#allocation2] sm:$0xff] %vm153, %v151
    %155 = vst.msk [vmem:[#allocation2 + $0x8] sm:$0xff] %vm153, %v152
    // Predicated region
    $region30: #{encoder_layer_forward.8} parent=1 // pred_check
      %p156 = pneg %p54
    $region31: #{encoder_layer_forward.8} parent=1 // pred_check_branch
      %158 = sbr.rel (%p156) target = $region33
    $region32: #{encoder_layer_forward.8} parent=1 // pred_region
      %v159 = vld [vmem:[#allocation2] sm:$0xff]
      %v160 = vld [vmem:[#allocation2 + $0x8] sm:$0xff]
      %v161 = vld [vmem:[#allocation8] sm:$0x1]
      %v163 = vlaneseq
      %v164 = vshrl.u32 %v163, 7
      %v165 = vsub.s32 0, %v164
      %v166 = vrot.slane %v161, %v165
      %v168 = vadd.f32 %v159, %v166
      %v169 = vadd.f32 %v160, %v166
      %v170 = vmul.f32 %v168, %v168
      %v171 = vmul.f32 %v169, %v169
      %v172 = vsel %vm153, %v170, 0.0
      %173 = vadd.xlane.f32.xlu0 %v172
      %v174 = vpop.xlane.xlu0 %173
      %v175 = vsel %vm153, %v171, 0.0
      %176 = vadd.xlane.f32.xlu0 %v175
      %v177 = vpop.xlane.xlu0 %176
      %v178 = vrsqrt.pop %v174
      %v179 = vmul.f32 %v174, %v178
      %vm180 = vcmp.eq.f32.partialorder %v174, inf
      %v181 = vsel %vm180, %v174, %v179
      %vm182 = vcmp.eq.f32.partialorder %v174, 0.0
      %v183 = vand.u32 %v174, 2147483648
      %v184 = vsel %vm182, %v183, %v181
      %v185 = vrsqrt.pop %v177
      %v186 = vmul.f32 %v177, %v185
      %vm187 = vcmp.eq.f32.partialorder %v177, inf
      %v188 = vsel %vm187, %v177, %v186
      %vm189 = vcmp.eq.f32.partialorder %v177, 0.0
      %v190 = vand.u32 %v177, 2147483648
      %v191 = vsel %vm189, %v190, %v188
      %v192 = vadd.f32 %v184, 1e-08
      %v193 = vadd.f32 %v191, 1e-08
      %v194 = vrcp.pop %v192
      %v195 = vrcp.pop %v193
      %v196 = vmul.f32 %v168, %v194
      %v197 = vmul.f32 %v169, %v195
      %198 = vst.msk [vmem:[#allocation9] sm:$0xff] %vm153, %v196
      %199 = vst.msk [vmem:[#allocation9 + $0x8] sm:$0xff] %vm153, %v197
    $region33: #{encoder_layer_forward.8} parent=1 // pred_fallthru
      _
    // Predicated region
    $region34: #{encoder_layer_forward.8} parent=1 // pred_check
      _
    $region35: #{encoder_layer_forward.8} parent=1 // pred_check_branch
      %201 = sbr.rel (0) target = $region37
    $region36: #{encoder_layer_forward.8} parent=1 // pred_region
      %s203 = ssub.s32 256, 256
      %204 = vsyncadd [#allocation5], %s203
      %s205 = sshll.u32 [#allocation9], 4
      %s206 = int_to_ptr.vmem [resolvable:$true] %s205
      %211 = dma.vmem_to_hbm [thread:$0]  %s206, 256, %s3, [#allocation5], 128, 128, 8
    $region37: #{encoder_layer_forward.8} parent=1 // pred_fallthru
      _
    // Predicated region
    $region38: #{encoder_layer_forward.8} parent=1 // pred_check
      _
    $region39: #{encoder_layer_forward.8} parent=1 // pred_check_branch
      %213 = sbr.rel (0) target = $region41
    $region40: #{encoder_layer_forward.8} parent=1 // pred_region
      %214 = dma.done [#allocation5], 256
    $region41: #{encoder_layer_forward.8} parent=1 // pred_fallthru
      _
    %215 = vsyncpa [#allocation4], 1
    %216 = vsyncpa [#allocation7], 1
    %217 = vsyncpa [#allocation5], 1

// kernel: encoder_layer_forward.9
$region0: #{encoder_layer_forward.9}
  #allocation0 [shape = 'u32[]', space=smem, size = 0x4, offset = 0x4, fixed_abs, tag = 'smem constant byte address 0x4 - core index']
  #allocation1 [shape = 'u32[144,128]{1,0:T(1,128)}', space=vmem, size = 0x12000, scoped, tag = 'internal scratch']
  #allocation2 [shape = 'f32[16,32]{1,0:T(8,128)}', space=vmem, size = 0x2000, scoped, tag = 'scratch operand']
  %s0 = inlined_call_operand.hbm [shape: f32[16,64], index: 0, kind: input, shape index: {}]
  %s1 = inlined_call_operand.hbm [shape: f32[64,32], index: 1, kind: input, shape index: {}]
  %s2 = inlined_call_operand.hbm [shape: f32[1,32], index: 2, kind: input, shape index: {}]
  %s3 = inlined_call_operand.hbm [shape: f32[16,32], index: 3, kind: input, shape index: {}]
  %s4 = inlined_call_operand.hbm [shape: f32[16,32], index: 4, kind: output, shape index: {}]
  %s5 = sld [smem:[#allocation0]]
  $region50: #{encoder_layer_forward.9} parent=0
    _
  %s7 = ssub.s32 1, %s5
  %s8 = scalar_select 0, %s7, %s5
  $region1: #{encoder_layer_forward.9} parent=0
    #allocation3 [shape = 'u8[8192]{0}', space=vmem, size = 0x2000, scoped, tag = 'input window, operand 0, single buffered']
    #allocation4 [shape = 's32[1]{0}', space=sflag, size = 0x4, scoped, tag = 'scoped memory for encoder_layer_forward.9']
    #allocation5 [shape = 's32[1]{0}', space=sflag, size = 0x4, scoped, tag = 'scoped memory for encoder_layer_forward.9']
    #allocation6 [shape = 'u8[32768]{0}', space=vmem, size = 0x8000, scoped, tag = 'input window, operand 1, single buffered']
    #allocation7 [shape = 's32[1]{0}', space=sflag, size = 0x4, scoped, tag = 'scoped memory for encoder_layer_forward.9']
    #allocation8 [shape = 'u8[512]{0}', space=vmem, size = 0x400, scoped, tag = 'input window, operand 2, single buffered']
    #allocation9 [shape = 'u8[8192]{0}', space=vmem, size = 0x2000, scoped, tag = 'input window, operand 3, single buffered']
    #allocation10 [shape = 's32[1]{0}', space=sflag, size = 0x4, scoped, tag = 'scoped memory for encoder_layer_forward.9']
    #allocation11 [shape = 'u8[8192]{0}', space=vmem, size = 0x2000, scoped, tag = 'output window, operand 0, single buffered']
    %9 = vsyncpa [#allocation4], 0
    %10 = vsyncpa [#allocation7], 0
    %11 = vsyncpa [#allocation10], 0
    %12 = vsyncpa [#allocation5], 0
    // Predicated region
    $region2: #{encoder_layer_forward.9} parent=1 // pred_check
      _
    $region3: #{encoder_layer_forward.9} parent=1 // pred_check_branch
      %14 = sbr.rel (0) target = $region5
    $region4: #{encoder_layer_forward.9} parent=1 // pred_region
      %s16 = ssub.s32 256, 256
      %17 = vsyncadd [#allocation4], %s16
      %s18 = sshll.u32 [#allocation3], 4
      %s19 = int_to_ptr.vmem [resolvable:$true] %s18
      %24 = dma.hbm_to_vmem [thread:$0]  %s0, 256, %s19, [#allocation4], 128, 128, 8
    $region5: #{encoder_layer_forward.9} parent=1 // pred_fallthru
      _
    // Predicated region
    $region6: #{encoder_layer_forward.9} parent=1 // pred_check
      _
    $region7: #{encoder_layer_forward.9} parent=1 // pred_check_branch
      %26 = sbr.rel (0) target = $region9
    $region8: #{encoder_layer_forward.9} parent=1 // pred_region
      %s28 = ssub.s32 1024, 1024
      %29 = vsyncadd [#allocation7], %s28
      %s30 = sshll.u32 [#allocation6], 4
      %s31 = int_to_ptr.vmem [resolvable:$true] %s30
      %36 = dma.hbm_to_vmem [thread:$0]  %s1, 1024, %s31, [#allocation7], 128, 128, 8
    $region9: #{encoder_layer_forward.9} parent=1 // pred_fallthru
      _
    // Predicated region
    $region10: #{encoder_layer_forward.9} parent=1 // pred_check
      _
    $region11: #{encoder_layer_forward.9} parent=1 // pred_check_branch
      %38 = sbr.rel (0) target = $region13
    $region12: #{encoder_layer_forward.9} parent=1 // pred_region
      %s40 = ssub.s32 16, 16
      %41 = vsyncadd [#allocation7], %s40
      %s43 = sshll.u32 [#allocation8], 4
      %s44 = int_to_ptr.vmem [resolvable:$true] %s43
      %46 = dma.hbm_to_vmem [thread:$0]  %s2, 16, %s44, [#allocation7]
    $region13: #{encoder_layer_forward.9} parent=1 // pred_fallthru
      _
    // Predicated region
    $region14: #{encoder_layer_forward.9} parent=1 // pred_check
      _
    $region15: #{encoder_layer_forward.9} parent=1 // pred_check_branch
      %48 = sbr.rel (0) target = $region17
    $region16: #{encoder_layer_forward.9} parent=1 // pred_region
      %s50 = ssub.s32 256, 256
      %51 = vsyncadd [#allocation10], %s50
      %s52 = sshll.u32 [#allocation9], 4
      %s53 = int_to_ptr.vmem [resolvable:$true] %s52
      %58 = dma.hbm_to_vmem [thread:$0]  %s3, 256, %s53, [#allocation10], 128, 128, 8
    $region17: #{encoder_layer_forward.9} parent=1 // pred_fallthru
      _
    // Predicated region
    $region18: #{encoder_layer_forward.9} parent=1 // pred_check
      _
    $region19: #{encoder_layer_forward.9} parent=1 // pred_check_branch
      %60 = sbr.rel (0) target = $region21
    $region20: #{encoder_layer_forward.9} parent=1 // pred_region
      %61 = dma.done [#allocation4], 256
    $region21: #{encoder_layer_forward.9} parent=1 // pred_fallthru
      _
    // Predicated region
    $region22: #{encoder_layer_forward.9} parent=1 // pred_check
      _
    $region23: #{encoder_layer_forward.9} parent=1 // pred_check_branch
      %63 = sbr.rel (0) target = $region25
    $region24: #{encoder_layer_forward.9} parent=1 // pred_region
      %64 = dma.done [#allocation7], 1024
    $region25: #{encoder_layer_forward.9} parent=1 // pred_fallthru
      _
    // Predicated region
    $region26: #{encoder_layer_forward.9} parent=1 // pred_check
      _
    $region27: #{encoder_layer_forward.9} parent=1 // pred_check_branch
      %66 = sbr.rel (0) target = $region29
    $region28: #{encoder_layer_forward.9} parent=1 // pred_region
      %67 = dma.done [#allocation7], 16
    $region29: #{encoder_layer_forward.9} parent=1 // pred_fallthru
      _
    // Predicated region
    $region30: #{encoder_layer_forward.9} parent=1 // pred_check
      _
    $region31: #{encoder_layer_forward.9} parent=1 // pred_check_branch
      %69 = sbr.rel (0) target = $region33
    $region32: #{encoder_layer_forward.9} parent=1 // pred_region
      %70 = dma.done [#allocation10], 256
    $region33: #{encoder_layer_forward.9} parent=1 // pred_fallthru
      _
    %p71 = scmp.eq.s32.totalorder 0, 0
    // Predicated region
    $region34: #{encoder_layer_forward.9} parent=1 // pred_check
      %p72 = pneg %p71
    $region35: #{encoder_layer_forward.9} parent=1 // pred_check_branch
      %74 = sbr.rel (%p72) target = $region37
    $region36: #{encoder_layer_forward.9} parent=1 // pred_region
      %vm75 = vcmask 261120
      %76 = vst.msk [vmem:[#allocation2] sm:$0xff] %vm75, 0.0
      %77 = vst.msk [vmem:[#allocation2 + $0x8] sm:$0xff] %vm75, 0.0
    $region37: #{encoder_layer_forward.9} parent=1 // pred_fallthru
      _
    %v78 = vld [vmem:[#allocation2] sm:$0xff]
    %v79 = vld [vmem:[#allocation2 + $0x8] sm:$0xff]
    %v80 = vld [vmem:[#allocation3] sm:$0xff]
    %v81 = vld [vmem:[#allocation3 + $0x8] sm:$0xff]
    %v82 = vld [vmem:[#allocation6] sm:$0xff]
    %v83 = vld [vmem:[#allocation6 + $0x8] sm:$0xff]
    %v84 = vld [vmem:[#allocation6 + $0x10] sm:$0xff]
    %v85 = vld [vmem:[#allocation6 + $0x18] sm:$0xff]
    %v86 = vld [vmem:[#allocation6 + $0x20] sm:$0xff]
    %v87 = vld [vmem:[#allocation6 + $0x28] sm:$0xff]
    %v88 = vld [vmem:[#allocation6 + $0x30] sm:$0xff]
    %v89 = vld [vmem:[#allocation6 + $0x38] sm:$0xff]
    %vm90 = vcmask 523264
    %v92 = vsel %vm90, %v80, 0
    %v95 = vsel %vm90, %v81, 0
    %97 = vmatprep.subr.mxu0 0.0
    %98 = vmatpush1.msra.mxu0 %v82
    %99 = vmatprep.subr.mxu0 0.0
    %100 = vmatpush1.msra.mxu0 %v83
    %101 = vmatprep.subr.mxu0 0.0
    %102 = vmatpush1.msra.mxu0 %v84
    %103 = vmatprep.subr.mxu0 0.0
    %104 = vmatpush1.msra.mxu0 %v85
    %105 = vmatprep.subr.mxu0 0.0
    %106 = vmatpush1.msra.mxu0 %v86
    %107 = vmatprep.subr.mxu0 0.0
    %108 = vmatpush1.msra.mxu0 %v87
    %109 = vmatprep.subr.mxu0 0.0
    %110 = vmatpush1.msra.mxu0 %v88
    %111 = vmatprep.subr.mxu0 0.0
    %112 = vmatpush1.msra.mxu0 %v89
    %113 = vmatprep.subr.mxu0 0.0
    %114 = vmatpush1.msra.mxu0 0.0
    %115 = vmatprep.subr.mxu0 0.0
    %116 = vmatpush1.msra.mxu0 0.0
    %117 = vmatprep.subr.mxu0 0.0
    %118 = vmatpush1.msra.mxu0 0.0
    %119 = vmatprep.subr.mxu0 0.0
    %120 = vmatpush1.msra.mxu0 0.0
    %121 = vmatprep.subr.mxu0 0.0
    %122 = vmatpush1.msra.mxu0 0.0
    %123 = vmatprep.subr.mxu0 0.0
    %124 = vmatpush1.msra.mxu0 0.0
    %125 = vmatprep.subr.mxu0 0.0
    %126 = vmatpush1.msra.mxu0 0.0
    %127 = vmatprep.subr.mxu0 0.0
    %128 = vmatpush1.msra.mxu0 0.0
    %129 = vmatprep.subr.mxu0 0.0
    %130 = vmatpush1.msra.mxu0 0.0
    %131 = vmatprep.subr.mxu0 0.0
    %132 = vmatpush1.msra.mxu0 0.0
    %133 = vmatprep.subr.mxu0 0.0
    %134 = vmatpush1.msra.mxu0 0.0
    %135 = vmatprep.subr.mxu0 0.0
    %136 = vmatpush1.msra.mxu0 0.0
    %137 = vmatprep.subr.mxu0 0.0
    %138 = vmatpush1.msra.mxu0 0.0
    %139 = vmatprep.subr.mxu0 0.0
    %140 = vmatpush1.msra.mxu0 0.0
    %141 = vmatprep.subr.mxu0 0.0
    %142 = vmatpush1.msra.mxu0 0.0
    %143 = vmatprep.subr.mxu0 0.0
    %144 = vmatpush1.msra.mxu0 0.0
    %145 = vmatprep.subr.mxu0 0.0
    %146 = vmatpush1.msra.mxu0 0.0
    %147 = vmatprep.subr.mxu0 0.0
    %148 = vmatpush1.msra.mxu0 0.0
    %149 = vmatprep.subr.mxu0 0.0
    %150 = vmatpush1.msra.mxu0 0.0
    %151 = vmatprep.subr.mxu0 0.0
    %152 = vmatpush1.msra.mxu0 0.0
    %153 = vmatprep.subr.mxu0 0.0
    %154 = vmatpush1.msra.mxu0 0.0
    %155 = vmatprep.subr.mxu0 0.0
    %156 = vmatpush1.msra.mxu0 0.0
    %157 = vmatprep.subr.mxu0 0.0
    %158 = vmatpush1.msra.mxu0 0.0
    %159 = vmatprep.subr.mxu0 0.0
    %160 = vmatpush1.msra.mxu0 0.0
    %161 = vmatprep.mubr.f32.mxu0 0.0
    %162 = vmatmul.mubr.f32.gmra.mrb[0].mxu0 %v92
    %v163 = vpop.f32.mrb[0].mxu0
    %v164 = vadd.f32 0.0, %v163
    %v165 = vpop.f32.mrb[0].mxu0
    %166 = vmatprep.mubr.f32.mxu0 0.0
    %167 = vmatmul.mubr.f32.gmra.mrb[0].mxu0 %v95
    %v168 = vpop.f32.mrb[0].mxu0
    %v169 = vadd.f32 0.0, %v168
    %v170 = vpop.f32.mrb[0].mxu0
    %171 = vdwg.mxu0
    %v172 = vadd.f32 %v78, %v164
    %v173 = vadd.f32 %v79, %v169
    %vm174 = vcmask 261120
    %175 = vst.msk [vmem:[#allocation2] sm:$0xff] %vm174, %v172
    %176 = vst.msk [vmem:[#allocation2 + $0x8] sm:$0xff] %vm174, %v173
    // Predicated region
    $region38: #{encoder_layer_forward.9} parent=1 // pred_check
      %p177 = pneg %p71
    $region39: #{encoder_layer_forward.9} parent=1 // pred_check_branch
      %179 = sbr.rel (%p177) target = $region41
    $region40: #{encoder_layer_forward.9} parent=1 // pred_region
      %v180 = vld [vmem:[#allocation9] sm:$0xff]
      %v181 = vld [vmem:[#allocation9 + $0x8] sm:$0xff]
      %v182 = vld [vmem:[#allocation2] sm:$0xff]
      %v183 = vld [vmem:[#allocation2 + $0x8] sm:$0xff]
      %v184 = vld [vmem:[#allocation8] sm:$0x1]
      %v186 = vlaneseq
      %v187 = vshrl.u32 %v186, 7
      %v188 = vsub.s32 0, %v187
      %v189 = vrot.slane %v184, %v188
      %v191 = vadd.f32 %v182, %v189
      %v192 = vadd.f32 %v183, %v189
      %v193 = vadd.f32 %v191, %v180
      %v194 = vadd.f32 %v192, %v181
      %v195 = vmul.f32 %v193, %v193
      %v196 = vmul.f32 %v194, %v194
      %v197 = vsel %vm174, %v195, 0.0
      %198 = vadd.xlane.f32.xlu0 %v197
      %v199 = vpop.xlane.xlu0 %198
      %v200 = vsel %vm174, %v196, 0.0
      %201 = vadd.xlane.f32.xlu0 %v200
      %v202 = vpop.xlane.xlu0 %201
      %v203 = vrsqrt.pop %v199
      %v204 = vmul.f32 %v199, %v203
      %vm205 = vcmp.eq.f32.partialorder %v199, inf
      %v206 = vsel %vm205, %v199, %v204
      %vm207 = vcmp.eq.f32.partialorder %v199, 0.0
      %v208 = vand.u32 %v199, 2147483648
      %v209 = vsel %vm207, %v208, %v206
      %v210 = vrsqrt.pop %v202
      %v211 = vmul.f32 %v202, %v210
      %vm212 = vcmp.eq.f32.partialorder %v202, inf
      %v213 = vsel %vm212, %v202, %v211
      %vm214 = vcmp.eq.f32.partialorder %v202, 0.0
      %v215 = vand.u32 %v202, 2147483648
      %v216 = vsel %vm214, %v215, %v213
      %v217 = vadd.f32 %v209, 1e-08
      %v218 = vadd.f32 %v216, 1e-08
      %v219 = vrcp.pop %v217
      %v220 = vrcp.pop %v218
      %v221 = vmul.f32 %v193, %v219
      %v222 = vmul.f32 %v194, %v220
      %223 = vst.msk [vmem:[#allocation11] sm:$0xff] %vm174, %v221
      %224 = vst.msk [vmem:[#allocation11 + $0x8] sm:$0xff] %vm174, %v222
    $region41: #{encoder_layer_forward.9} parent=1 // pred_fallthru
      _
    // Predicated region
    $region42: #{encoder_layer_forward.9} parent=1 // pred_check
      _
    $region43: #{encoder_layer_forward.9} parent=1 // pred_check_branch
      %226 = sbr.rel (0) target = $region45
    $region44: #{encoder_layer_forward.9} parent=1 // pred_region
      %s228 = ssub.s32 256, 256
      %229 = vsyncadd [#allocation5], %s228
      %s230 = sshll.u32 [#allocation11], 4
      %s231 = int_to_ptr.vmem [resolvable:$true] %s230
      %236 = dma.vmem_to_hbm [thread:$0]  %s231, 256, %s4, [#allocation5], 128, 128, 8
    $region45: #{encoder_layer_forward.9} parent=1 // pred_fallthru
      _
    // Predicated region
    $region46: #{encoder_layer_forward.9} parent=1 // pred_check
      _
    $region47: #{encoder_layer_forward.9} parent=1 // pred_check_branch
      %238 = sbr.rel (0) target = $region49
    $region48: #{encoder_layer_forward.9} parent=1 // pred_region
      %239 = dma.done [#allocation5], 256
    $region49: #{encoder_layer_forward.9} parent=1 // pred_fallthru
      _
    %240 = vsyncpa [#allocation4], 1
    %241 = vsyncpa [#allocation7], 1
    %242 = vsyncpa [#allocation10], 1
    %243 = vsyncpa [#allocation5], 1

</llo_original>
